<compile_context>
chip_gen: v7x
topology: tpu7x:2x2x1
jax: 0.10.0
libtpu: 0.0.40
codegen_flags: <defaults>
</compile_context>

<pallas_src>
import functools

import jax
import jax.numpy as jnp
from jax import lax
from jax.experimental import pallas as pl
from jax.experimental.pallas import tpu as pltpu


# ----------------------------------------------------------------------------
# Fused Pallas kernel
# ----------------------------------------------------------------------------

def _leaky(x):
    return jnp.where(x > 0, x, 0.1 * x)


def _mm(x, w_ref):
    """bf16 MXU matmul with f32 accumulation (weights shipped as bf16)."""
    return jnp.dot(x.astype(jnp.bfloat16), w_ref[...],
                   preferred_element_type=jnp.float32)


def make_fused_kernel(struct):
    """Build the fused forward kernel; `struct` holds only static Python data."""
    enc_blocks = struct["enc_blocks"]      # tuple[(has_skip, cout)]
    dec_blocks = struct["dec_blocks"]
    Ks = struct["Ks"]
    Es = struct["Es"]
    H = struct["H"]
    out_w = struct["out_w"]
    N = struct["N"]
    tile_n = struct["tile_n"]
    need_mask = struct["need_mask"]
    num_vq = len(Ks)

    def res_block(x, it, has_skip, cout):
        # fused first matmul: x @ [w1 | w_skip]  (skip bias pre-folded into b2)
        w_first, b1, w2, b2 = next(it), next(it), next(it), next(it)
        hs = _mm(x, w_first)                     # (t, cout) or (t, 2*cout)
        h = _leaky(hs[:, :cout] + b1[...])
        out = _mm(h, w2) + b2[...]
        skip = hs[:, cout:] if has_skip else x
        return out + skip

    def kernel(*refs):
        out_ref, loss_ref = refs[-2], refs[-1]
        it = iter(refs[:-2])

        # validity mask for the padded tail tile (loss terms only)
        if need_mask:
            rowix = (lax.broadcasted_iota(jnp.int32, (tile_n, 1), 0)
                     + pl.program_id(0) * tile_n)
            mask = (rowix < N).astype(jnp.float32)
        else:
            mask = None

        def psum(v):
            return jnp.sum(v if mask is None else v * mask)

        x = next(it)[...]                        # (tile_n, 3*P*P) bf16

        # ---- extractor stand-in: patch embedding ---------------------------
        pw, pb = next(it), next(it)
        dino = _mm(x, pw) + pb[...]              # (tile_n, F) f32

        # ---- encoder projection --------------------------------------------
        feat = dino
        for has_skip, cout in enc_blocks:
            feat = res_block(feat, it, has_skip, cout)

        # ---- VQ branches (aggregate + packed-output placement fused) --------
        slab = None                              # (tile_n, out_w) f32
        vq_parts = []
        for i in range(num_vq):
            E = Es[i]
            w_in_f, csq, cb = next(it), next(it), next(it)
            # one matmul yields z AND the codebook cross term:
            #   leaky(feat) @ [w_in | w_in @ cb^T]
            zc = _mm(_leaky(feat), w_in_f)       # (tile_n, E + K)
            z = zc[:, :E]
            cross = zc[:, E:]
            zsq = jnp.sum(z * z, axis=-1, keepdims=True)
            d = zsq + csq[...] - 2.0 * cross     # (tile_n, K) squared distances
            dmin = jnp.min(d, axis=-1, keepdims=True)
            kio = lax.broadcasted_iota(jnp.int32, d.shape, 1)
            big = jnp.int32(2147483647)
            idx = jnp.min(jnp.where(d == dmin, kio, big),
                          axis=-1, keepdims=True)      # first-occurrence argmin
            # codebook gather as a one-hot MXU matmul (no VPU select chain)
            onehot = (kio == idx).astype(jnp.bfloat16)
            q = jnp.dot(onehot, cb[...], preferred_element_type=jnp.float32)
            # fused (codebook + beta*commitment) loss partial
            dq = q - z
            vq_parts.append(psum(dq * dq))

            if i < num_vq - 1:
                # wide fused RHS:  q @ [ W_slab_i | W_outproj_q_i ]
                wf, w_pack, b_out = next(it), next(it), next(it)
                qp = _mm(q, w_pack)              # (tile_n, out_w + H)
                contrib = qp[:, :out_w]
                # concat([feat, q]) @ W + b == feat @ W_f + q @ W_q + b
                feat = _mm(feat, wf) + qp[:, out_w:] + b_out[...]
            else:
                w_slab = next(it)
                contrib = _mm(q, w_slab)         # (tile_n, out_w)
            slab = contrib if slab is None else slab + contrib

        # slab columns: [ feat_agg (H) | q_0 | q_1 | ... | zero pad ]
        b_slab = next(it)                        # bias only on agg columns
        slab = slab + b_slab[...]
        agg = slab[:, :H]

        # ---- decoder projection + fused recon loss --------------------------
        recon = agg
        for has_skip, cout in dec_blocks:
            recon = res_block(recon, it, has_skip, cout)
        rdiff = recon - dino                     # last_norm = False
        loss_parts = [psum(rdiff * rdiff)] + vq_parts

        # ---- single lane-dense, unmasked bf16 store of the packed slab ------
        out_ref[...] = slab.astype(out_ref.dtype)

        # ---- per-tile loss partials: row 0 = recon, rows 1.. = vq ------------
        rows8 = lax.broadcasted_iota(jnp.int32, (8, 128), 0)
        block = jnp.where(rows8 == 0, loss_parts[0], 0.0)
        for i in range(1, len(loss_parts)):
            block = jnp.where(rows8 == i, loss_parts[i], block)
        loss_ref[0, :, :] = block

    return kernel


# ----------------------------------------------------------------------------
# Parameters (master copies in f32; packing / fusing / casting in flatten)
# ----------------------------------------------------------------------------

def init_params(key, cfg):
    F = cfg["feat_dim"]
    H = cfg["hidden_dim"]
    Es = cfg["vq"]["embed_dims"]
    Ks = cfg["vq"]["num_codebooks"]
    P = cfg["patch_size"]
    num_vq = len(Es)

    def nrm(k, shape, scale=0.05):
        return scale * jax.random.normal(k, shape, jnp.float32)

    keys = iter(jax.random.split(key, 128))
    params = {}
    params["patch_w"] = nrm(next(keys), (3 * P * P, F))
    params["patch_b"] = nrm(next(keys), (1, F))

    def make_block(cin, cout):
        p = {"w1": nrm(next(keys), (cin, cout)), "b1": nrm(next(keys), (1, cout)),
             "w2": nrm(next(keys), (cout, cout)), "b2": nrm(next(keys), (1, cout))}
        if cin != cout:
            p["w_skip"] = nrm(next(keys), (cin, cout))
            p["b_skip"] = nrm(next(keys), (1, cout))
        return p

    params["enc_proj"] = [make_block(F if i == 0 else H, H)
                          for i in range(cfg["enc_num_blocks"])]
    params["vq_input_proj"] = [{"w": nrm(next(keys), (H, Es[i]))}
                               for i in range(num_vq)]
    params["codebooks"] = [nrm(next(keys), (Ks[i], Es[i]), scale=0.2)
                           for i in range(num_vq)]
    # Conv2d(H + E_i, H) stored pre-split: rows for `feat` and rows for `q`
    params["vq_output_proj"] = [{"w_feat": nrm(next(keys), (H, H)),
                                 "w_vq": nrm(next(keys), (Es[i], H)),
                                 "b": nrm(next(keys), (1, H))}
                                for i in range(num_vq - 1)]
    # Conv2d(sum(E), H) stored as per-vq slabs
    params["vq_aggregate_proj"] = {
        "w_list": [nrm(next(keys), (Es[i], H)) for i in range(num_vq)],
        "b": nrm(next(keys), (1, H))}
    nd = cfg["dec_num_blocks"]
    params["dec_proj"] = [make_block(H, F if i == nd - 1 else H)
                          for i in range(nd)]
    return params


def _packed_width(H, Es):
    return ((H + sum(Es) + 127) // 128) * 128


def flatten_params(params):
    """Pre-fused, pre-packed weights in the exact order the kernel consumes refs."""
    bf16 = jnp.bfloat16
    Es = [int(cb.shape[1]) for cb in params["codebooks"]]
    H = int(params["vq_aggregate_proj"]["b"].shape[1])
    out_w = _packed_width(H, Es)
    num_vq = len(Es)

    def block_refs(blk):
        if "w_skip" in blk:
            w_first = jnp.concatenate([blk["w1"], blk["w_skip"]], axis=1)
            b2 = blk["b2"] + blk["b_skip"]       # fold skip bias into b2
        else:
            w_first, b2 = blk["w1"], blk["b2"]
        return [w_first.astype(bf16), blk["b1"], blk["w2"].astype(bf16), b2]

    flat = [params["patch_w"].astype(bf16), params["patch_b"]]
    for blk in params["enc_proj"]:
        flat += block_refs(blk)

    wagg = params["vq_aggregate_proj"]["w_list"]
    q_off = H
    for i in range(num_vq):
        cb = params["codebooks"][i]                           # (K, E) f32
        w_in = params["vq_input_proj"][i]["w"]                # (H, E)
        csq = jnp.sum(cb * cb, axis=-1, keepdims=True).T      # (1, K)
        # fused RHS: [w_in | w_in @ cb^T] -> one matmul gives z and cross term
        w_in_fused = jnp.concatenate([w_in, w_in @ cb.T], axis=1).astype(bf16)
        # W_slab_i: (E, out_w), cols [0:H] = wagg_i (aggregate proj),
        # cols [q_off:q_off+E] = I (places q_i in the packed output slab)
        w_slab = jnp.zeros((Es[i], out_w), jnp.float32)
        w_slab = w_slab.at[:, :H].set(wagg[i])
        w_slab = w_slab.at[:, q_off:q_off + Es[i]].set(
            jnp.eye(Es[i], dtype=jnp.float32))
        q_off += Es[i]
        flat += [w_in_fused, csq, cb.astype(bf16)]
        if i < num_vq - 1:
            op = params["vq_output_proj"][i]
            w_pack = jnp.concatenate([w_slab, op["w_vq"]], axis=1).astype(bf16)
            flat += [op["w_feat"].astype(bf16), w_pack, op["b"]]
        else:
            flat.append(w_slab.astype(bf16))

    # aggregate-proj bias, padded so it only touches the agg columns
    b_slab = jnp.zeros((1, out_w), jnp.float32)
    b_slab = b_slab.at[:, :H].set(params["vq_aggregate_proj"]["b"])
    flat.append(b_slab)

    for blk in params["dec_proj"]:
        flat += block_refs(blk)
    return flat


# ----------------------------------------------------------------------------
# Tiling
# ----------------------------------------------------------------------------

def _choose_tiling(N, cap=2048):
    """Rows per tile (multiple of 16 for bf16 sublane tiling) and tile count.

    Uses cdiv + a masked tail tile (no divisor hunting), keeps the tile count
    even when possible so both v7x TensorCores get equal work, and caps the
    per-tile VMEM footprint (v7x has only 64 MiB VMEM per TC)."""
    cdiv = lambda a, b: -(-a // b)
    rup = lambda a, m: cdiv(a, m) * m
    cap = max(16, (cap // 16) * 16)
    if N <= cap:
        num = 2 if N >= 64 else 1
    else:
        num = cdiv(N, cap)
        if num % 2 == 1:
            num += 1
    tile_n = rup(cdiv(N, num), 16)
    num_tiles = cdiv(N, tile_n)
    return tile_n, num_tiles


# ----------------------------------------------------------------------------
# Forward
# ----------------------------------------------------------------------------

def dino_unseg_forward(params, img, cfg):
    """img: (B, 3, Himg, Wimg) NCHW float32 (matches the torch module)."""
    B, C, Himg, Wimg = img.shape
    P = cfg["patch_size"]
    h, w = Himg // P, Wimg // P
    N = B * h * w
    F = cfg["feat_dim"]
    H = cfg["hidden_dim"]
    Es = list(cfg["vq"]["embed_dims"])
    beta = cfg["vq"]["beta"]
    num_vq = len(Es)
    assert 1 <= num_vq <= 7   # loss rows (1 + num_vq) must fit in 8 sublanes

    # TODO(synk): the NCHW->patch transpose and the final to_nchw transposes are
    #             separate full-HBM XLA passes; for production feed
    #             pre-patchified channels-last input / consume channels-last out.
    patches = img.reshape(B, C, h, P, w, P).transpose(0, 2, 4, 1, 3, 5)
    patches = patches.reshape(N, C * P * P).astype(jnp.bfloat16)

    tile_n, num_tiles = _choose_tiling(N)
    N_pad = tile_n * num_tiles
    if N_pad != N:
        patches = jnp.pad(patches, ((0, N_pad - N), (0, 0)))
    out_w = _packed_width(H, Es)

    struct = {
        "enc_blocks": tuple(("w_skip" in b, int(b["w2"].shape[0]))
                            for b in params["enc_proj"]),
        "dec_blocks": tuple(("w_skip" in b, int(b["w2"].shape[0]))
                            for b in params["dec_proj"]),
        "Ks": tuple(int(cb.shape[0]) for cb in params["codebooks"]),
        "Es": tuple(Es),
        "H": H,
        "out_w": out_w,
        "N": N,
        "tile_n": tile_n,
        "need_mask": N_pad != N,
    }
    kernel = make_fused_kernel(struct)
    flat = flatten_params(params)

    # Weights/biases use constant index maps, so each block is DMA'd only once;
    # the double-buffer waste across ~30 tiny refs is a few tens of KB.
    in_specs = [pl.BlockSpec((tile_n, patches.shape[1]), lambda i: (i, 0))]
    in_specs += [pl.BlockSpec(a.shape, lambda i, nd=a.ndim: (0,) * nd)
                 for a in flat]

    packed, loss_part = pl.pallas_call(
        kernel,
        out_shape=(jax.ShapeDtypeStruct((N_pad, out_w), jnp.bfloat16),
                   jax.ShapeDtypeStruct((num_tiles, 8, 128), jnp.float32)),
        grid_spec=pltpu.PrefetchScalarGridSpec(
            num_scalar_prefetch=0,
            grid=(num_tiles,),
            in_specs=in_specs,
            out_specs=(pl.BlockSpec((tile_n, out_w), lambda i: (i, 0)),
                       pl.BlockSpec((1, 8, 128), lambda i: (i, 0, 0))),
        ),
        compiler_params=pltpu.CompilerParams(
            dimension_semantics=("parallel",),
            vmem_limit_bytes=48 * 1024 * 1024),   # fits under v7x 64 MiB VMEM
    )(patches, *flat)

    # reduce per-tile loss partials (each scalar replicated per row; lane 0)
    sums = jnp.sum(loss_part[:, :, 0], axis=0)                   # (8,)
    output = {"recon-loss": sums[0] / jnp.float32(N * F)}
    for i in range(num_vq):
        output[f"vq{i}-loss"] = (1.0 + beta) * sums[1 + i] / jnp.float32(N * Es[i])

    # unpack the lane-dense activation slab (bf16 -> f32 for the API)
    packed = packed[:N].astype(jnp.float32)
    feat = packed[:, :H]
    feat_vqs = []
    off = H
    for i in range(num_vq):
        feat_vqs.append(packed[:, off:off + Es[i]])
        off += Es[i]

    # reshape back to NCHW to match the PyTorch module's return convention
    def to_nchw(x):
        return x.reshape(B, h, w, x.shape[-1]).transpose(0, 3, 1, 2)

    return to_nchw(feat), [to_nchw(v) for v in feat_vqs], output


# ----------------------------------------------------------------------------
# Driver
# ----------------------------------------------------------------------------

if __name__ == "__main__":
    cfg = {
        "patch_size": 8,
        "feat_dim": 32,           # stands in for extractor.n_feats
        "hidden_dim": 32,
        "enc_num_blocks": 1,
        "dec_num_blocks": 1,
        "vq": {
            "num_codebooks": [16, 16],
            "embed_dims": [32, 32],
            "beta": 0.25,
            "normalize": False,
            "vq_type": "param",
            "agg_type": "concat",
        },
    }

    key = jax.random.PRNGKey(0)
    img = jax.random.normal(key, (2, 3, 64, 64), jnp.float32)   # B=2, NCHW
    params = init_params(jax.random.PRNGKey(42), cfg)

    fwd = jax.jit(functools.partial(dino_unseg_forward, cfg=cfg))
    feat, feat_vqs, output = fwd(params, img)
    jax.block_until_ready((feat, feat_vqs, output))

    assert feat.shape == (2, 32, 8, 8)
    assert all(v.shape == (2, 32, 8, 8) for v in feat_vqs)
    assert "recon-loss" in output and "vq0-loss" in output and "vq1-loss" in output
    print("KERNEL_OK")
</pallas_src>

<mosaic_0001>
module attributes {stable_mosaic.version = 11 : i64} {
  func.func @kernel(%arg0: i32, %arg1: memref<64x192xbf16, #tpu.memory_space<vmem>>, %arg2: memref<192x32xbf16, #tpu.memory_space<vmem>>, %arg3: memref<1x32xf32, #tpu.memory_space<vmem>>, %arg4: memref<32x32xbf16, #tpu.memory_space<vmem>>, %arg5: memref<1x32xf32, #tpu.memory_space<vmem>>, %arg6: memref<32x32xbf16, #tpu.memory_space<vmem>>, %arg7: memref<1x32xf32, #tpu.memory_space<vmem>>, %arg8: memref<32x48xbf16, #tpu.memory_space<vmem>>, %arg9: memref<1x16xf32, #tpu.memory_space<vmem>>, %arg10: memref<16x32xbf16, #tpu.memory_space<vmem>>, %arg11: memref<32x32xbf16, #tpu.memory_space<vmem>>, %arg12: memref<32x160xbf16, #tpu.memory_space<vmem>>, %arg13: memref<1x32xf32, #tpu.memory_space<vmem>>, %arg14: memref<32x48xbf16, #tpu.memory_space<vmem>>, %arg15: memref<1x16xf32, #tpu.memory_space<vmem>>, %arg16: memref<16x32xbf16, #tpu.memory_space<vmem>>, %arg17: memref<32x128xbf16, #tpu.memory_space<vmem>>, %arg18: memref<1x128xf32, #tpu.memory_space<vmem>>, %arg19: memref<32x32xbf16, #tpu.memory_space<vmem>>, %arg20: memref<1x32xf32, #tpu.memory_space<vmem>>, %arg21: memref<32x32xbf16, #tpu.memory_space<vmem>>, %arg22: memref<1x32xf32, #tpu.memory_space<vmem>>, %arg23: memref<64x128xbf16, #tpu.memory_space<vmem>>, %arg24: memref<1x8x128xf32, #tpu.memory_space<vmem>>) attributes {dimension_semantics = [#tpu.dimension_semantics<parallel>], iteration_bounds = array<i64: 2>, scalar_prefetch = 0 : i64, scratch_operands = 0 : i64, tpu.core_type = #tpu.core_type<tc>, window_params = [{transform_indices = @transform_0, window_bounds = array<i64: 64, 192>}, {pipeline_mode = #tpu.pipeline_mode<synchronous>, transform_indices = @transform_1, window_bounds = array<i64: 192, 32>}, {pipeline_mode = #tpu.pipeline_mode<synchronous>, transform_indices = @transform_2, window_bounds = array<i64: 1, 32>}, {pipeline_mode = #tpu.pipeline_mode<synchronous>, transform_indices = @transform_3, window_bounds = array<i64: 32, 32>}, {pipeline_mode = #tpu.pipeline_mode<synchronous>, transform_indices = @transform_4, window_bounds = array<i64: 1, 32>}, {pipeline_mode = #tpu.pipeline_mode<synchronous>, transform_indices = @transform_5, window_bounds = array<i64: 32, 32>}, {pipeline_mode = #tpu.pipeline_mode<synchronous>, transform_indices = @transform_6, window_bounds = array<i64: 1, 32>}, {pipeline_mode = #tpu.pipeline_mode<synchronous>, transform_indices = @transform_7, window_bounds = array<i64: 32, 48>}, {pipeline_mode = #tpu.pipeline_mode<synchronous>, transform_indices = @transform_8, window_bounds = array<i64: 1, 16>}, {pipeline_mode = #tpu.pipeline_mode<synchronous>, transform_indices = @transform_9, window_bounds = array<i64: 16, 32>}, {pipeline_mode = #tpu.pipeline_mode<synchronous>, transform_indices = @transform_10, window_bounds = array<i64: 32, 32>}, {pipeline_mode = #tpu.pipeline_mode<synchronous>, transform_indices = @transform_11, window_bounds = array<i64: 32, 160>}, {pipeline_mode = #tpu.pipeline_mode<synchronous>, transform_indices = @transform_12, window_bounds = array<i64: 1, 32>}, {pipeline_mode = #tpu.pipeline_mode<synchronous>, transform_indices = @transform_13, window_bounds = array<i64: 32, 48>}, {pipeline_mode = #tpu.pipeline_mode<synchronous>, transform_indices = @transform_14, window_bounds = array<i64: 1, 16>}, {pipeline_mode = #tpu.pipeline_mode<synchronous>, transform_indices = @transform_15, window_bounds = array<i64: 16, 32>}, {pipeline_mode = #tpu.pipeline_mode<synchronous>, transform_indices = @transform_16, window_bounds = array<i64: 32, 128>}, {pipeline_mode = #tpu.pipeline_mode<synchronous>, transform_indices = @transform_17, window_bounds = array<i64: 1, 128>}, {pipeline_mode = #tpu.pipeline_mode<synchronous>, transform_indices = @transform_18, window_bounds = array<i64: 32, 32>}, {pipeline_mode = #tpu.pipeline_mode<synchronous>, transform_indices = @transform_19, window_bounds = array<i64: 1, 32>}, {pipeline_mode = #tpu.pipeline_mode<synchronous>, transform_indices = @transform_20, window_bounds = array<i64: 32, 32>}, {pipeline_mode = #tpu.pipeline_mode<synchronous>, transform_indices = @transform_21, window_bounds = array<i64: 1, 32>}, {transform_indices = @transform_22, window_bounds = array<i64: 64, 128>}, {transform_indices = @transform_23, window_bounds = array<i64: 1, 8, 128>}]} {
    %c0 = arith.constant 0 : index
    %c0_0 = arith.constant 0 : index
    %0 = vector.load %arg1[%c0, %c0_0] : memref<64x192xbf16, #tpu.memory_space<vmem>>, vector<64x192xbf16>
    %c0_1 = arith.constant 0 : index
    %c0_2 = arith.constant 0 : index
    %1 = vector.load %arg2[%c0_1, %c0_2] : memref<192x32xbf16, #tpu.memory_space<vmem>>, vector<192x32xbf16>
    %cst = arith.constant dense<0.000000e+00> : vector<64x32xf32>
    %2 = tpu.matmul %0, %1, %cst {dimension_numbers = #tpu.dot_dimension_numbers<[1], [0], [0], [1], [0, 0, 1, 1], [], []>} : vector<64x192xbf16>, vector<192x32xbf16>, vector<64x32xf32> -> vector<64x32xf32>
    %c0_3 = arith.constant 0 : index
    %c0_4 = arith.constant 0 : index
    %3 = vector.load %arg3[%c0_3, %c0_4] : memref<1x32xf32, #tpu.memory_space<vmem>>, vector<1x32xf32>
    %4 = vector.broadcast %3 : vector<1x32xf32> to vector<64x32xf32>
    %5 = arith.addf %2, %4 : vector<64x32xf32>
    %6 = arith.truncf %5 : vector<64x32xf32> to vector<64x32xbf16>
    %c0_5 = arith.constant 0 : index
    %c0_6 = arith.constant 0 : index
    %7 = vector.load %arg4[%c0_5, %c0_6] : memref<32x32xbf16, #tpu.memory_space<vmem>>, vector<32x32xbf16>
    %cst_7 = arith.constant dense<0.000000e+00> : vector<64x32xf32>
    %8 = tpu.matmul %6, %7, %cst_7 {dimension_numbers = #tpu.dot_dimension_numbers<[1], [0], [0], [1], [0, 0, 1, 1], [], []>} : vector<64x32xbf16>, vector<32x32xbf16>, vector<64x32xf32> -> vector<64x32xf32>
    %c0_8 = arith.constant 0 : index
    %c0_9 = arith.constant 0 : index
    %9 = vector.load %arg5[%c0_8, %c0_9] : memref<1x32xf32, #tpu.memory_space<vmem>>, vector<1x32xf32>
    %10 = vector.broadcast %9 : vector<1x32xf32> to vector<64x32xf32>
    %11 = arith.addf %8, %10 : vector<64x32xf32>
    %cst_10 = arith.constant 0.000000e+00 : f32
    %12 = vector.broadcast %cst_10 : f32 to vector<64x32xf32>
    %13 = arith.cmpf ogt, %11, %12 : vector<64x32xf32>
    %cst_11 = arith.constant 1.000000e-01 : f32
    %14 = vector.broadcast %cst_11 : f32 to vector<64x32xf32>
    %15 = arith.mulf %14, %11 : vector<64x32xf32>
    %16 = arith.select %13, %11, %15 : vector<64x32xi1>, vector<64x32xf32>
    %17 = arith.truncf %16 : vector<64x32xf32> to vector<64x32xbf16>
    %c0_12 = arith.constant 0 : index
    %c0_13 = arith.constant 0 : index
    %18 = vector.load %arg6[%c0_12, %c0_13] : memref<32x32xbf16, #tpu.memory_space<vmem>>, vector<32x32xbf16>
    %cst_14 = arith.constant dense<0.000000e+00> : vector<64x32xf32>
    %19 = tpu.matmul %17, %18, %cst_14 {dimension_numbers = #tpu.dot_dimension_numbers<[1], [0], [0], [1], [0, 0, 1, 1], [], []>} : vector<64x32xbf16>, vector<32x32xbf16>, vector<64x32xf32> -> vector<64x32xf32>
    %c0_15 = arith.constant 0 : index
    %c0_16 = arith.constant 0 : index
    %20 = vector.load %arg7[%c0_15, %c0_16] : memref<1x32xf32, #tpu.memory_space<vmem>>, vector<1x32xf32>
    %21 = vector.broadcast %20 : vector<1x32xf32> to vector<64x32xf32>
    %22 = arith.addf %19, %21 : vector<64x32xf32>
    %23 = arith.addf %22, %5 : vector<64x32xf32>
    %cst_17 = arith.constant 0.000000e+00 : f32
    %24 = vector.broadcast %cst_17 : f32 to vector<64x32xf32>
    %25 = arith.cmpf ogt, %23, %24 : vector<64x32xf32>
    %cst_18 = arith.constant 1.000000e-01 : f32
    %26 = vector.broadcast %cst_18 : f32 to vector<64x32xf32>
    %27 = arith.mulf %26, %23 : vector<64x32xf32>
    %28 = arith.select %25, %23, %27 : vector<64x32xi1>, vector<64x32xf32>
    %29 = arith.truncf %28 : vector<64x32xf32> to vector<64x32xbf16>
    %c0_19 = arith.constant 0 : index
    %c0_20 = arith.constant 0 : index
    %30 = vector.load %arg8[%c0_19, %c0_20] : memref<32x48xbf16, #tpu.memory_space<vmem>>, vector<32x48xbf16>
    %cst_21 = arith.constant dense<0.000000e+00> : vector<64x48xf32>
    %31 = tpu.matmul %29, %30, %cst_21 {dimension_numbers = #tpu.dot_dimension_numbers<[1], [0], [0], [1], [0, 0, 1, 1], [], []>} : vector<64x32xbf16>, vector<32x48xbf16>, vector<64x48xf32> -> vector<64x48xf32>
    %32 = vector.extract_strided_slice %31 {offsets = [0, 0], sizes = [64, 32], strides = [1, 1]} : vector<64x48xf32> to vector<64x32xf32>
    %33 = vector.extract_strided_slice %31 {offsets = [0, 32], sizes = [64, 16], strides = [1, 1]} : vector<64x48xf32> to vector<64x16xf32>
    %34 = arith.mulf %32, %32 : vector<64x32xf32>
    %cst_22 = arith.constant dense<0.000000e+00> : vector<64xf32>
    %35 = vector.multi_reduction <add>, %34, %cst_22 [1] : vector<64x32xf32> to vector<64xf32>
    %36 = vector.shape_cast %35 : vector<64xf32> to vector<64x1xf32>
    %c0_23 = arith.constant 0 : index
    %c0_24 = arith.constant 0 : index
    %37 = vector.load %arg9[%c0_23, %c0_24] : memref<1x16xf32, #tpu.memory_space<vmem>>, vector<1x16xf32>
    %38 = vector.broadcast %36 : vector<64x1xf32> to vector<64x16xf32>
    %39 = vector.broadcast %37 : vector<1x16xf32> to vector<64x16xf32>
    %40 = arith.addf %38, %39 : vector<64x16xf32>
    %cst_25 = arith.constant 2.000000e+00 : f32
    %41 = vector.broadcast %cst_25 : f32 to vector<64x16xf32>
    %42 = arith.mulf %41, %33 : vector<64x16xf32>
    %43 = arith.subf %40, %42 : vector<64x16xf32>
    %cst_26 = arith.constant dense<0x7F800000> : vector<64xf32>
    %44 = vector.multi_reduction <minimumf>, %43, %cst_26 [1] : vector<64x16xf32> to vector<64xf32>
    %45 = vector.shape_cast %44 : vector<64xf32> to vector<64x1xf32>
    %46 = tpu.iota {dimensions = array<i32: 1>} : vector<64x16xi32>
    %47 = vector.broadcast %45 : vector<64x1xf32> to vector<64x16xf32>
    %48 = arith.cmpf oeq, %43, %47 : vector<64x16xf32>
    %c2147483647_i32 = arith.constant 2147483647 : i32
    %49 = vector.broadcast %c2147483647_i32 : i32 to vector<64x16xi32>
    %50 = arith.select %48, %46, %49 : vector<64x16xi1>, vector<64x16xi32>
    %cst_27 = arith.constant dense<2147483647> : vector<64xi32>
    %51 = vector.multi_reduction <minsi>, %50, %cst_27 [1] : vector<64x16xi32> to vector<64xi32>
    %52 = vector.shape_cast %51 : vector<64xi32> to vector<64x1xi32>
    %53 = vector.broadcast %52 : vector<64x1xi32> to vector<64x16xi32>
    %54 = arith.cmpi eq, %46, %53 : vector<64x16xi32>
    %55 = arith.extui %54 : vector<64x16xi1> to vector<64x16xi32>
    %56 = arith.sitofp %55 : vector<64x16xi32> to vector<64x16xf32>
    %57 = arith.truncf %56 : vector<64x16xf32> to vector<64x16xbf16>
    %c0_28 = arith.constant 0 : index
    %c0_29 = arith.constant 0 : index
    %58 = vector.load %arg10[%c0_28, %c0_29] : memref<16x32xbf16, #tpu.memory_space<vmem>>, vector<16x32xbf16>
    %cst_30 = arith.constant dense<0.000000e+00> : vector<64x32xf32>
    %59 = tpu.matmul %57, %58, %cst_30 {dimension_numbers = #tpu.dot_dimension_numbers<[1], [0], [0], [1], [0, 0, 1, 1], [], []>} : vector<64x16xbf16>, vector<16x32xbf16>, vector<64x32xf32> -> vector<64x32xf32>
    %60 = arith.subf %59, %32 : vector<64x32xf32>
    %61 = arith.mulf %60, %60 : vector<64x32xf32>
    %62 = vector.shape_cast %61 : vector<64x32xf32> to vector<1x64x32xf32>
    %cst_31 = arith.constant dense<0.000000e+00> : vector<1xf32>
    %63 = vector.multi_reduction <add>, %62, %cst_31 [1, 2] : vector<1x64x32xf32> to vector<1xf32>
    %64 = vector.shape_cast %63 : vector<1xf32> to vector<1x1x1xf32>
    %65 = vector.extract %64[0, 0, 0] : f32 from vector<1x1x1xf32>
    %66 = arith.truncf %59 : vector<64x32xf32> to vector<64x32xbf16>
    %c0_32 = arith.constant 0 : index
    %c0_33 = arith.constant 0 : index
    %67 = vector.load %arg12[%c0_32, %c0_33] : memref<32x160xbf16, #tpu.memory_space<vmem>>, vector<32x160xbf16>
    %cst_34 = arith.constant dense<0.000000e+00> : vector<64x160xf32>
    %68 = tpu.matmul %66, %67, %cst_34 {dimension_numbers = #tpu.dot_dimension_numbers<[1], [0], [0], [1], [0, 0, 1, 1], [], []>} : vector<64x32xbf16>, vector<32x160xbf16>, vector<64x160xf32> -> vector<64x160xf32>
    %69 = vector.extract_strided_slice %68 {offsets = [0, 0], sizes = [64, 128], strides = [1, 1]} : vector<64x160xf32> to vector<64x128xf32>
    %70 = arith.truncf %23 : vector<64x32xf32> to vector<64x32xbf16>
    %c0_35 = arith.constant 0 : index
    %c0_36 = arith.constant 0 : index
    %71 = vector.load %arg11[%c0_35, %c0_36] : memref<32x32xbf16, #tpu.memory_space<vmem>>, vector<32x32xbf16>
    %cst_37 = arith.constant dense<0.000000e+00> : vector<64x32xf32>
    %72 = tpu.matmul %70, %71, %cst_37 {dimension_numbers = #tpu.dot_dimension_numbers<[1], [0], [0], [1], [0, 0, 1, 1], [], []>} : vector<64x32xbf16>, vector<32x32xbf16>, vector<64x32xf32> -> vector<64x32xf32>
    %73 = vector.extract_strided_slice %68 {offsets = [0, 128], sizes = [64, 32], strides = [1, 1]} : vector<64x160xf32> to vector<64x32xf32>
    %74 = arith.addf %72, %73 : vector<64x32xf32>
    %c0_38 = arith.constant 0 : index
    %c0_39 = arith.constant 0 : index
    %75 = vector.load %arg13[%c0_38, %c0_39] : memref<1x32xf32, #tpu.memory_space<vmem>>, vector<1x32xf32>
    %76 = vector.broadcast %75 : vector<1x32xf32> to vector<64x32xf32>
    %77 = arith.addf %74, %76 : vector<64x32xf32>
    %cst_40 = arith.constant 0.000000e+00 : f32
    %78 = vector.broadcast %cst_40 : f32 to vector<64x32xf32>
    %79 = arith.cmpf ogt, %77, %78 : vector<64x32xf32>
    %cst_41 = arith.constant 1.000000e-01 : f32
    %80 = vector.broadcast %cst_41 : f32 to vector<64x32xf32>
    %81 = arith.mulf %80, %77 : vector<64x32xf32>
    %82 = arith.select %79, %77, %81 : vector<64x32xi1>, vector<64x32xf32>
    %83 = arith.truncf %82 : vector<64x32xf32> to vector<64x32xbf16>
    %c0_42 = arith.constant 0 : index
    %c0_43 = arith.constant 0 : index
    %84 = vector.load %arg14[%c0_42, %c0_43] : memref<32x48xbf16, #tpu.memory_space<vmem>>, vector<32x48xbf16>
    %cst_44 = arith.constant dense<0.000000e+00> : vector<64x48xf32>
    %85 = tpu.matmul %83, %84, %cst_44 {dimension_numbers = #tpu.dot_dimension_numbers<[1], [0], [0], [1], [0, 0, 1, 1], [], []>} : vector<64x32xbf16>, vector<32x48xbf16>, vector<64x48xf32> -> vector<64x48xf32>
    %86 = vector.extract_strided_slice %85 {offsets = [0, 0], sizes = [64, 32], strides = [1, 1]} : vector<64x48xf32> to vector<64x32xf32>
    %87 = vector.extract_strided_slice %85 {offsets = [0, 32], sizes = [64, 16], strides = [1, 1]} : vector<64x48xf32> to vector<64x16xf32>
    %88 = arith.mulf %86, %86 : vector<64x32xf32>
    %cst_45 = arith.constant dense<0.000000e+00> : vector<64xf32>
    %89 = vector.multi_reduction <add>, %88, %cst_45 [1] : vector<64x32xf32> to vector<64xf32>
    %90 = vector.shape_cast %89 : vector<64xf32> to vector<64x1xf32>
    %c0_46 = arith.constant 0 : index
    %c0_47 = arith.constant 0 : index
    %91 = vector.load %arg15[%c0_46, %c0_47] : memref<1x16xf32, #tpu.memory_space<vmem>>, vector<1x16xf32>
    %92 = vector.broadcast %90 : vector<64x1xf32> to vector<64x16xf32>
    %93 = vector.broadcast %91 : vector<1x16xf32> to vector<64x16xf32>
    %94 = arith.addf %92, %93 : vector<64x16xf32>
    %cst_48 = arith.constant 2.000000e+00 : f32
    %95 = vector.broadcast %cst_48 : f32 to vector<64x16xf32>
    %96 = arith.mulf %95, %87 : vector<64x16xf32>
    %97 = arith.subf %94, %96 : vector<64x16xf32>
    %cst_49 = arith.constant dense<0x7F800000> : vector<64xf32>
    %98 = vector.multi_reduction <minimumf>, %97, %cst_49 [1] : vector<64x16xf32> to vector<64xf32>
    %99 = vector.shape_cast %98 : vector<64xf32> to vector<64x1xf32>
    %100 = tpu.iota {dimensions = array<i32: 1>} : vector<64x16xi32>
    %101 = vector.broadcast %99 : vector<64x1xf32> to vector<64x16xf32>
    %102 = arith.cmpf oeq, %97, %101 : vector<64x16xf32>
    %c2147483647_i32_50 = arith.constant 2147483647 : i32
    %103 = vector.broadcast %c2147483647_i32_50 : i32 to vector<64x16xi32>
    %104 = arith.select %102, %100, %103 : vector<64x16xi1>, vector<64x16xi32>
    %cst_51 = arith.constant dense<2147483647> : vector<64xi32>
    %105 = vector.multi_reduction <minsi>, %104, %cst_51 [1] : vector<64x16xi32> to vector<64xi32>
    %106 = vector.shape_cast %105 : vector<64xi32> to vector<64x1xi32>
    %107 = vector.broadcast %106 : vector<64x1xi32> to vector<64x16xi32>
    %108 = arith.cmpi eq, %100, %107 : vector<64x16xi32>
    %109 = arith.extui %108 : vector<64x16xi1> to vector<64x16xi32>
    %110 = arith.sitofp %109 : vector<64x16xi32> to vector<64x16xf32>
    %111 = arith.truncf %110 : vector<64x16xf32> to vector<64x16xbf16>
    %c0_52 = arith.constant 0 : index
    %c0_53 = arith.constant 0 : index
    %112 = vector.load %arg16[%c0_52, %c0_53] : memref<16x32xbf16, #tpu.memory_space<vmem>>, vector<16x32xbf16>
    %cst_54 = arith.constant dense<0.000000e+00> : vector<64x32xf32>
    %113 = tpu.matmul %111, %112, %cst_54 {dimension_numbers = #tpu.dot_dimension_numbers<[1], [0], [0], [1], [0, 0, 1, 1], [], []>} : vector<64x16xbf16>, vector<16x32xbf16>, vector<64x32xf32> -> vector<64x32xf32>
    %114 = arith.subf %113, %86 : vector<64x32xf32>
    %115 = arith.mulf %114, %114 : vector<64x32xf32>
    %116 = vector.shape_cast %115 : vector<64x32xf32> to vector<1x64x32xf32>
    %cst_55 = arith.constant dense<0.000000e+00> : vector<1xf32>
    %117 = vector.multi_reduction <add>, %116, %cst_55 [1, 2] : vector<1x64x32xf32> to vector<1xf32>
    %118 = vector.shape_cast %117 : vector<1xf32> to vector<1x1x1xf32>
    %119 = vector.extract %118[0, 0, 0] : f32 from vector<1x1x1xf32>
    %120 = arith.truncf %113 : vector<64x32xf32> to vector<64x32xbf16>
    %c0_56 = arith.constant 0 : index
    %c0_57 = arith.constant 0 : index
    %121 = vector.load %arg17[%c0_56, %c0_57] : memref<32x128xbf16, #tpu.memory_space<vmem>>, vector<32x128xbf16>
    %cst_58 = arith.constant dense<0.000000e+00> : vector<64x128xf32>
    %122 = tpu.matmul %120, %121, %cst_58 {dimension_numbers = #tpu.dot_dimension_numbers<[1], [0], [0], [1], [0, 0, 1, 1], [], []>} : vector<64x32xbf16>, vector<32x128xbf16>, vector<64x128xf32> -> vector<64x128xf32>
    %123 = arith.addf %69, %122 : vector<64x128xf32>
    %c0_59 = arith.constant 0 : index
    %c0_60 = arith.constant 0 : index
    %124 = vector.load %arg18[%c0_59, %c0_60] : memref<1x128xf32, #tpu.memory_space<vmem>>, vector<1x128xf32>
    %125 = vector.broadcast %124 : vector<1x128xf32> to vector<64x128xf32>
    %126 = arith.addf %123, %125 : vector<64x128xf32>
    %127 = vector.extract_strided_slice %126 {offsets = [0, 0], sizes = [64, 32], strides = [1, 1]} : vector<64x128xf32> to vector<64x32xf32>
    %128 = arith.truncf %127 : vector<64x32xf32> to vector<64x32xbf16>
    %c0_61 = arith.constant 0 : index
    %c0_62 = arith.constant 0 : index
    %129 = vector.load %arg19[%c0_61, %c0_62] : memref<32x32xbf16, #tpu.memory_space<vmem>>, vector<32x32xbf16>
    %cst_63 = arith.constant dense<0.000000e+00> : vector<64x32xf32>
    %130 = tpu.matmul %128, %129, %cst_63 {dimension_numbers = #tpu.dot_dimension_numbers<[1], [0], [0], [1], [0, 0, 1, 1], [], []>} : vector<64x32xbf16>, vector<32x32xbf16>, vector<64x32xf32> -> vector<64x32xf32>
    %c0_64 = arith.constant 0 : index
    %c0_65 = arith.constant 0 : index
    %131 = vector.load %arg20[%c0_64, %c0_65] : memref<1x32xf32, #tpu.memory_space<vmem>>, vector<1x32xf32>
    %132 = vector.broadcast %131 : vector<1x32xf32> to vector<64x32xf32>
    %133 = arith.addf %130, %132 : vector<64x32xf32>
    %cst_66 = arith.constant 0.000000e+00 : f32
    %134 = vector.broadcast %cst_66 : f32 to vector<64x32xf32>
    %135 = arith.cmpf ogt, %133, %134 : vector<64x32xf32>
    %cst_67 = arith.constant 1.000000e-01 : f32
    %136 = vector.broadcast %cst_67 : f32 to vector<64x32xf32>
    %137 = arith.mulf %136, %133 : vector<64x32xf32>
    %138 = arith.select %135, %133, %137 : vector<64x32xi1>, vector<64x32xf32>
    %139 = arith.truncf %138 : vector<64x32xf32> to vector<64x32xbf16>
    %c0_68 = arith.constant 0 : index
    %c0_69 = arith.constant 0 : index
    %140 = vector.load %arg21[%c0_68, %c0_69] : memref<32x32xbf16, #tpu.memory_space<vmem>>, vector<32x32xbf16>
    %cst_70 = arith.constant dense<0.000000e+00> : vector<64x32xf32>
    %141 = tpu.matmul %139, %140, %cst_70 {dimension_numbers = #tpu.dot_dimension_numbers<[1], [0], [0], [1], [0, 0, 1, 1], [], []>} : vector<64x32xbf16>, vector<32x32xbf16>, vector<64x32xf32> -> vector<64x32xf32>
    %c0_71 = arith.constant 0 : index
    %c0_72 = arith.constant 0 : index
    %142 = vector.load %arg22[%c0_71, %c0_72] : memref<1x32xf32, #tpu.memory_space<vmem>>, vector<1x32xf32>
    %143 = vector.broadcast %142 : vector<1x32xf32> to vector<64x32xf32>
    %144 = arith.addf %141, %143 : vector<64x32xf32>
    %145 = arith.addf %144, %127 : vector<64x32xf32>
    %146 = arith.subf %145, %5 : vector<64x32xf32>
    %147 = arith.mulf %146, %146 : vector<64x32xf32>
    %148 = vector.shape_cast %147 : vector<64x32xf32> to vector<1x64x32xf32>
    %cst_73 = arith.constant dense<0.000000e+00> : vector<1xf32>
    %149 = vector.multi_reduction <add>, %148, %cst_73 [1, 2] : vector<1x64x32xf32> to vector<1xf32>
    %150 = vector.shape_cast %149 : vector<1xf32> to vector<1x1x1xf32>
    %151 = vector.extract %150[0, 0, 0] : f32 from vector<1x1x1xf32>
    %152 = arith.truncf %126 : vector<64x128xf32> to vector<64x128xbf16>
    %c0_74 = arith.constant 0 : index
    %c0_75 = arith.constant 0 : index
    %153 = vector.load %arg23[%c0_74, %c0_75] : memref<64x128xbf16, #tpu.memory_space<vmem>>, vector<64x128xbf16>
    tpu.vector_store %arg23[%c0_74, %c0_75], %152 {strides = array<i32>} : memref<64x128xbf16, #tpu.memory_space<vmem>>, vector<64x128xbf16>,
    %154 = tpu.iota {dimensions = array<i32: 0>} : vector<8x128xi32>
    %c0_i32 = arith.constant 0 : i32
    %155 = vector.broadcast %c0_i32 : i32 to vector<8x128xi32>
    %156 = arith.cmpi eq, %154, %155 : vector<8x128xi32>
    %cst_76 = arith.constant 0.000000e+00 : f32
    %157 = vector.broadcast %151 : f32 to vector<8x128xf32>
    %158 = vector.broadcast %cst_76 : f32 to vector<8x128xf32>
    %159 = arith.select %156, %157, %158 : vector<8x128xi1>, vector<8x128xf32>
    %c1_i32 = arith.constant 1 : i32
    %160 = vector.broadcast %c1_i32 : i32 to vector<8x128xi32>
    %161 = arith.cmpi eq, %154, %160 : vector<8x128xi32>
    %162 = vector.broadcast %65 : f32 to vector<8x128xf32>
    %163 = arith.select %161, %162, %159 : vector<8x128xi1>, vector<8x128xf32>
    %c2_i32 = arith.constant 2 : i32
    %164 = vector.broadcast %c2_i32 : i32 to vector<8x128xi32>
    %165 = arith.cmpi eq, %154, %164 : vector<8x128xi32>
    %166 = vector.broadcast %119 : f32 to vector<8x128xf32>
    %167 = arith.select %165, %166, %163 : vector<8x128xi1>, vector<8x128xf32>
    %c0_77 = arith.constant 0 : index
    %c0_78 = arith.constant 0 : index
    %c0_79 = arith.constant 0 : index
    %168 = vector.load %arg24[%c0_77, %c0_78, %c0_79] : memref<1x8x128xf32, #tpu.memory_space<vmem>>, vector<1x8x128xf32>
    %169 = vector.shape_cast %168 : vector<1x8x128xf32> to vector<8x128xf32>
    %170 = vector.shape_cast %167 : vector<8x128xf32> to vector<1x8x128xf32>
    tpu.vector_store %arg24[%c0_77, %c0_78, %c0_79], %170 {strides = array<i32>} : memref<1x8x128xf32, #tpu.memory_space<vmem>>, vector<1x8x128xf32>,
    return
  }
  func.func @transform_0(%arg0: i32) -> (i32, i32) {
    %c0_i32 = arith.constant 0 : i32
    %c0_i32_0 = arith.constant 0 : i32
    return %arg0, %c0_i32 : i32, i32
  }
  func.func @transform_1(%arg0: i32) -> (i32, i32) {
    %c0_i32 = arith.constant 0 : i32
    %c0_i32_0 = arith.constant 0 : i32
    %c0_i32_1 = arith.constant 0 : i32
    return %c0_i32, %c0_i32_0 : i32, i32
  }
  func.func @transform_2(%arg0: i32) -> (i32, i32) {
    %c0_i32 = arith.constant 0 : i32
    %c0_i32_0 = arith.constant 0 : i32
    %c0_i32_1 = arith.constant 0 : i32
    return %c0_i32, %c0_i32_0 : i32, i32
  }
  func.func @transform_3(%arg0: i32) -> (i32, i32) {
    %c0_i32 = arith.constant 0 : i32
    %c0_i32_0 = arith.constant 0 : i32
    %c0_i32_1 = arith.constant 0 : i32
    return %c0_i32, %c0_i32_0 : i32, i32
  }
  func.func @transform_4(%arg0: i32) -> (i32, i32) {
    %c0_i32 = arith.constant 0 : i32
    %c0_i32_0 = arith.constant 0 : i32
    %c0_i32_1 = arith.constant 0 : i32
    return %c0_i32, %c0_i32_0 : i32, i32
  }
  func.func @transform_5(%arg0: i32) -> (i32, i32) {
    %c0_i32 = arith.constant 0 : i32
    %c0_i32_0 = arith.constant 0 : i32
    %c0_i32_1 = arith.constant 0 : i32
    return %c0_i32, %c0_i32_0 : i32, i32
  }
  func.func @transform_6(%arg0: i32) -> (i32, i32) {
    %c0_i32 = arith.constant 0 : i32
    %c0_i32_0 = arith.constant 0 : i32
    %c0_i32_1 = arith.constant 0 : i32
    return %c0_i32, %c0_i32_0 : i32, i32
  }
  func.func @transform_7(%arg0: i32) -> (i32, i32) {
    %c0_i32 = arith.constant 0 : i32
    %c0_i32_0 = arith.constant 0 : i32
    %c0_i32_1 = arith.constant 0 : i32
    return %c0_i32, %c0_i32_0 : i32, i32
  }
  func.func @transform_8(%arg0: i32) -> (i32, i32) {
    %c0_i32 = arith.constant 0 : i32
    %c0_i32_0 = arith.constant 0 : i32
    %c0_i32_1 = arith.constant 0 : i32
    return %c0_i32, %c0_i32_0 : i32, i32
  }
  func.func @transform_9(%arg0: i32) -> (i32, i32) {
    %c0_i32 = arith.constant 0 : i32
    %c0_i32_0 = arith.constant 0 : i32
    %c0_i32_1 = arith.constant 0 : i32
    return %c0_i32, %c0_i32_0 : i32, i32
  }
  func.func @transform_10(%arg0: i32) -> (i32, i32) {
    %c0_i32 = arith.constant 0 : i32
    %c0_i32_0 = arith.constant 0 : i32
    %c0_i32_1 = arith.constant 0 : i32
    return %c0_i32, %c0_i32_0 : i32, i32
  }
  func.func @transform_11(%arg0: i32) -> (i32, i32) {
    %c0_i32 = arith.constant 0 : i32
    %c0_i32_0 = arith.constant 0 : i32
    %c0_i32_1 = arith.constant 0 : i32
    return %c0_i32, %c0_i32_0 : i32, i32
  }
  func.func @transform_12(%arg0: i32) -> (i32, i32) {
    %c0_i32 = arith.constant 0 : i32
    %c0_i32_0 = arith.constant 0 : i32
    %c0_i32_1 = arith.constant 0 : i32
    return %c0_i32, %c0_i32_0 : i32, i32
  }
  func.func @transform_13(%arg0: i32) -> (i32, i32) {
    %c0_i32 = arith.constant 0 : i32
    %c0_i32_0 = arith.constant 0 : i32
    %c0_i32_1 = arith.constant 0 : i32
    return %c0_i32, %c0_i32_0 : i32, i32
  }
  func.func @transform_14(%arg0: i32) -> (i32, i32) {
    %c0_i32 = arith.constant 0 : i32
    %c0_i32_0 = arith.constant 0 : i32
    %c0_i32_1 = arith.constant 0 : i32
    return %c0_i32, %c0_i32_0 : i32, i32
  }
  func.func @transform_15(%arg0: i32) -> (i32, i32) {
    %c0_i32 = arith.constant 0 : i32
    %c0_i32_0 = arith.constant 0 : i32
    %c0_i32_1 = arith.constant 0 : i32
    return %c0_i32, %c0_i32_0 : i32, i32
  }
  func.func @transform_16(%arg0: i32) -> (i32, i32) {
    %c0_i32 = arith.constant 0 : i32
    %c0_i32_0 = arith.constant 0 : i32
    %c0_i32_1 = arith.constant 0 : i32
    return %c0_i32, %c0_i32_0 : i32, i32
  }
  func.func @transform_17(%arg0: i32) -> (i32, i32) {
    %c0_i32 = arith.constant 0 : i32
    %c0_i32_0 = arith.constant 0 : i32
    %c0_i32_1 = arith.constant 0 : i32
    return %c0_i32, %c0_i32_0 : i32, i32
  }
  func.func @transform_18(%arg0: i32) -> (i32, i32) {
    %c0_i32 = arith.constant 0 : i32
    %c0_i32_0 = arith.constant 0 : i32
    %c0_i32_1 = arith.constant 0 : i32
    return %c0_i32, %c0_i32_0 : i32, i32
  }
  func.func @transform_19(%arg0: i32) -> (i32, i32) {
    %c0_i32 = arith.constant 0 : i32
    %c0_i32_0 = arith.constant 0 : i32
    %c0_i32_1 = arith.constant 0 : i32
    return %c0_i32, %c0_i32_0 : i32, i32
  }
  func.func @transform_20(%arg0: i32) -> (i32, i32) {
    %c0_i32 = arith.constant 0 : i32
    %c0_i32_0 = arith.constant 0 : i32
    %c0_i32_1 = arith.constant 0 : i32
    return %c0_i32, %c0_i32_0 : i32, i32
  }
  func.func @transform_21(%arg0: i32) -> (i32, i32) {
    %c0_i32 = arith.constant 0 : i32
    %c0_i32_0 = arith.constant 0 : i32
    %c0_i32_1 = arith.constant 0 : i32
    return %c0_i32, %c0_i32_0 : i32, i32
  }
  func.func @transform_22(%arg0: i32) -> (i32, i32) {
    %c0_i32 = arith.constant 0 : i32
    %c0_i32_0 = arith.constant 0 : i32
    return %arg0, %c0_i32 : i32, i32
  }
  func.func @transform_23(%arg0: i32) -> (i32, i32, i32) {
    %c0_i32 = arith.constant 0 : i32
    %c0_i32_0 = arith.constant 0 : i32
    %c0_i32_1 = arith.constant 0 : i32
    return %arg0, %c0_i32, %c0_i32_0 : i32, i32, i32
  }
}

</mosaic_0001>

<llo_original>
// kernel: dino_unseg_forward.1
$region0: #{dino_unseg_forward.1}
  #allocation0 [shape = 'u32[]', space=smem, size = 0x4, offset = 0x4, fixed_abs, tag = 'smem constant byte address 0x4 - core index']
  #allocation1 [shape = 'u32[144,128]{1,0:T(1,128)}', space=vmem, size = 0x12000, scoped, tag = 'internal scratch']
  %s0 = inlined_call_operand.vmem [shape: bf16[128,192], index: 0, kind: input, shape index: {}]
  %s1 = inlined_call_operand.vmem [shape: bf16[192,32], index: 1, kind: input, shape index: {}]
  %s2 = inlined_call_operand.vmem [shape: f32[1,32], index: 2, kind: input, shape index: {}]
  %s3 = inlined_call_operand.vmem [shape: bf16[32,32], index: 3, kind: input, shape index: {}]
  %s4 = inlined_call_operand.vmem [shape: f32[1,32], index: 4, kind: input, shape index: {}]
  %s5 = inlined_call_operand.vmem [shape: bf16[32,32], index: 5, kind: input, shape index: {}]
  %s6 = inlined_call_operand.vmem [shape: f32[1,32], index: 6, kind: input, shape index: {}]
  %s7 = inlined_call_operand.vmem [shape: bf16[32,48], index: 7, kind: input, shape index: {}]
  %s8 = inlined_call_operand.vmem [shape: f32[1,16], index: 8, kind: input, shape index: {}]
  %s9 = inlined_call_operand.vmem [shape: bf16[16,32], index: 9, kind: input, shape index: {}]
  %s10 = inlined_call_operand.vmem [shape: bf16[32,32], index: 10, kind: input, shape index: {}]
  %s11 = inlined_call_operand.vmem [shape: bf16[32,160], index: 11, kind: input, shape index: {}]
  %s12 = inlined_call_operand.vmem [shape: f32[1,32], index: 12, kind: input, shape index: {}]
  %s13 = inlined_call_operand.vmem [shape: bf16[32,48], index: 13, kind: input, shape index: {}]
  %s14 = inlined_call_operand.vmem [shape: f32[1,16], index: 14, kind: input, shape index: {}]
  %s15 = inlined_call_operand.vmem [shape: bf16[16,32], index: 15, kind: input, shape index: {}]
  %s16 = inlined_call_operand.vmem [shape: bf16[32,128], index: 16, kind: input, shape index: {}]
  %s17 = inlined_call_operand.vmem [shape: f32[1,128], index: 17, kind: input, shape index: {}]
  %s18 = inlined_call_operand.vmem [shape: bf16[32,32], index: 18, kind: input, shape index: {}]
  %s19 = inlined_call_operand.vmem [shape: f32[1,32], index: 19, kind: input, shape index: {}]
  %s20 = inlined_call_operand.vmem [shape: bf16[32,32], index: 20, kind: input, shape index: {}]
  %s21 = inlined_call_operand.vmem [shape: f32[1,32], index: 21, kind: input, shape index: {}]
  %s22 = inlined_call_operand.vmem [shape: bf16[128,128], index: 22, kind: output, shape index: {0}]
  %s23 = inlined_call_operand.vmem [shape: f32[2,8,128], index: 23, kind: output, shape index: {1}]
  %24 = xla_tuple %s22, %s23
  %s25 = sld [smem:[#allocation0]]
  $region129: #{dino_unseg_forward.1} parent=0
    _
  %s27 = ssub.s32 1, %s25
  %s28 = scalar_select 0, %s27, %s25
  loop: start=0, step=1, limit=4
  $region2: #{dino_unseg_forward.1} parent=0 // loop_pre_header
    _
  $region3: #{dino_unseg_forward.1} parent=0 // loop_header
    %s30 = sphi 0, %s34
    %p31 = scmp.ge.s32.totalorder %s30, 4
    %s40 = sphi 0, %s42
    %s43 = sphi 0, %s40
    %s44 = sphi 0, %s43
    %s60 = sphi 0, %s44
    %s64 = sphi 0, %s64
    %s66 = sphi 0, %s64
    %s67 = sphi 0, %s66
    %s81 = sphi 0, %s67
    %s85 = sphi 0, %s85
    %s87 = sphi 0, %s85
    %s88 = sphi 0, %s87
    %s102 = sphi 0, %s88
    %s106 = sphi 0, %s106
    %s108 = sphi 0, %s106
    %s109 = sphi 0, %s108
    %s123 = sphi 0, %s109
    %s127 = sphi 0, %s127
    %s129 = sphi 0, %s127
    %s130 = sphi 0, %s129
    %s144 = sphi 0, %s130
    %s148 = sphi 0, %s148
    %s150 = sphi 0, %s148
    %s151 = sphi 0, %s150
    %s165 = sphi 0, %s151
    %s169 = sphi 0, %s169
    %s171 = sphi 0, %s169
    %s172 = sphi 0, %s171
    %s186 = sphi 0, %s172
    %s190 = sphi 0, %s190
    %s192 = sphi 0, %s190
    %s193 = sphi 0, %s192
    %s207 = sphi 0, %s193
    %s211 = sphi 0, %s211
    %s213 = sphi 0, %s211
    %s214 = sphi 0, %s213
    %s228 = sphi 0, %s214
    %s232 = sphi 0, %s232
    %s234 = sphi 0, %s232
    %s235 = sphi 0, %s234
    %s249 = sphi 0, %s235
    %s253 = sphi 0, %s253
    %s255 = sphi 0, %s253
    %s256 = sphi 0, %s255
    %s270 = sphi 0, %s256
    %s274 = sphi 0, %s274
    %s276 = sphi 0, %s274
    %s277 = sphi 0, %s276
    %s291 = sphi 0, %s277
    %s295 = sphi 0, %s295
    %s297 = sphi 0, %s295
    %s298 = sphi 0, %s297
    %s312 = sphi 0, %s298
    %s316 = sphi 0, %s316
    %s318 = sphi 0, %s316
    %s319 = sphi 0, %s318
    %s333 = sphi 0, %s319
    %s337 = sphi 0, %s337
    %s339 = sphi 0, %s337
    %s340 = sphi 0, %s339
    %s354 = sphi 0, %s340
    %s358 = sphi 0, %s358
    %s360 = sphi 0, %s358
    %s361 = sphi 0, %s360
    %s375 = sphi 0, %s361
    %s379 = sphi 0, %s379
    %s381 = sphi 0, %s379
    %s382 = sphi 0, %s381
    %s396 = sphi 0, %s382
    %s400 = sphi 0, %s400
    %s402 = sphi 0, %s400
    %s403 = sphi 0, %s402
    %s417 = sphi 0, %s403
    %s421 = sphi 0, %s421
    %s423 = sphi 0, %s421
    %s424 = sphi 0, %s423
    %s438 = sphi 0, %s424
    %s442 = sphi 0, %s442
    %s444 = sphi 0, %s442
    %s445 = sphi 0, %s444
    %s459 = sphi 0, %s445
    %s463 = sphi 0, %s463
    %s465 = sphi 0, %s463
    %s466 = sphi 0, %s465
    %s480 = sphi 0, %s466
    %s484 = sphi 0, %s484
    %s486 = sphi 0, %s484
    %s487 = sphi 0, %s486
    %s501 = sphi 0, %s487
    %s507 = sphi 0, %s509
    %s510 = sphi 0, %s507
    %s511 = sphi 0, %s510
    %s527 = sphi 0, %s511
    %s533 = sphi 0, %s535
    %s536 = sphi 0, %s533
    %s537 = sphi 0, %s536
    %s553 = sphi 0, %s537
  $region4: #{dino_unseg_forward.1} parent=0 // loop_header_branch
    %33 = sbr.rel (%p31) target = $region8
  $region5: #{dino_unseg_forward.1} parent=0 // loop_body
    %s35 = ssub.s32 %s30, 1
    %s36 = ssub.s32 %s30, 2
    %s37 = sadd.s32 %s30, 1
    %s38 = ssub.s32 %s30, %s37
    %p39 = scmp.eq.s32.totalorder %s38, 0
    %s41 = sadd.s32 %s40, 1
    %s42 = scalar_select %p39, %s40, %s41
    %p45 = pneg %p39
    %p46 = scmp.eq.s32.totalorder %s30, 1
    %p47 = por %p45, %p46
    %p48 = scmp.ne.s32.totalorder %s40, %s43
    %p49 = scmp.eq.s32.totalorder %s30, 0
    %p50 = por %p48, %p49
    %p51 = scmp.ne.s32.totalorder %s40, %s43
    %p52 = scmp.eq.s32.totalorder %s35, 1
    %p53 = por %p51, %p52
    %p54 = scmp.ne.s32.totalorder %s43, %s44
    %p55 = scmp.eq.s32.totalorder %s35, 0
    %p56 = por %p54, %p55
    %p57 = scmp.ne.s32.totalorder %s43, %s44
    %p58 = scmp.eq.s32.totalorder %s36, 1
    %p59 = por %p57, %p58
    %p61 = scmp.ne.s32.totalorder %s44, %s60
    %p62 = scmp.eq.s32.totalorder %s36, 0
    %p63 = por %p61, %p62
    %s65 = sadd.s32 %s64, 1
    %p68 = scmp.eq.s32.totalorder %s30, 1
    %p69 = scmp.ne.s32.totalorder %s64, %s66
    %p70 = scmp.eq.s32.totalorder %s30, 0
    %p71 = por %p69, %p70
    %p72 = scmp.ne.s32.totalorder %s64, %s66
    %p73 = scmp.eq.s32.totalorder %s35, 1
    %p74 = por %p72, %p73
    %p75 = scmp.ne.s32.totalorder %s66, %s67
    %p76 = scmp.eq.s32.totalorder %s35, 0
    %p77 = por %p75, %p76
    %p78 = scmp.ne.s32.totalorder %s66, %s67
    %p79 = scmp.eq.s32.totalorder %s36, 1
    %p80 = por %p78, %p79
    %p82 = scmp.ne.s32.totalorder %s67, %s81
    %p83 = scmp.eq.s32.totalorder %s36, 0
    %p84 = por %p82, %p83
    %s86 = sadd.s32 %s85, 1
    %p89 = scmp.eq.s32.totalorder %s30, 1
    %p90 = scmp.ne.s32.totalorder %s85, %s87
    %p91 = scmp.eq.s32.totalorder %s30, 0
    %p92 = por %p90, %p91
    %p93 = scmp.ne.s32.totalorder %s85, %s87
    %p94 = scmp.eq.s32.totalorder %s35, 1
    %p95 = por %p93, %p94
    %p96 = scmp.ne.s32.totalorder %s87, %s88
    %p97 = scmp.eq.s32.totalorder %s35, 0
    %p98 = por %p96, %p97
    %p99 = scmp.ne.s32.totalorder %s87, %s88
    %p100 = scmp.eq.s32.totalorder %s36, 1
    %p101 = por %p99, %p100
    %p103 = scmp.ne.s32.totalorder %s88, %s102
    %p104 = scmp.eq.s32.totalorder %s36, 0
    %p105 = por %p103, %p104
    %s107 = sadd.s32 %s106, 1
    %p110 = scmp.eq.s32.totalorder %s30, 1
    %p111 = scmp.ne.s32.totalorder %s106, %s108
    %p112 = scmp.eq.s32.totalorder %s30, 0
    %p113 = por %p111, %p112
    %p114 = scmp.ne.s32.totalorder %s106, %s108
    %p115 = scmp.eq.s32.totalorder %s35, 1
    %p116 = por %p114, %p115
    %p117 = scmp.ne.s32.totalorder %s108, %s109
    %p118 = scmp.eq.s32.totalorder %s35, 0
    %p119 = por %p117, %p118
    %p120 = scmp.ne.s32.totalorder %s108, %s109
    %p121 = scmp.eq.s32.totalorder %s36, 1
    %p122 = por %p120, %p121
    %p124 = scmp.ne.s32.totalorder %s109, %s123
    %p125 = scmp.eq.s32.totalorder %s36, 0
    %p126 = por %p124, %p125
    %s128 = sadd.s32 %s127, 1
    %p131 = scmp.eq.s32.totalorder %s30, 1
    %p132 = scmp.ne.s32.totalorder %s127, %s129
    %p133 = scmp.eq.s32.totalorder %s30, 0
    %p134 = por %p132, %p133
    %p135 = scmp.ne.s32.totalorder %s127, %s129
    %p136 = scmp.eq.s32.totalorder %s35, 1
    %p137 = por %p135, %p136
    %p138 = scmp.ne.s32.totalorder %s129, %s130
    %p139 = scmp.eq.s32.totalorder %s35, 0
    %p140 = por %p138, %p139
    %p141 = scmp.ne.s32.totalorder %s129, %s130
    %p142 = scmp.eq.s32.totalorder %s36, 1
    %p143 = por %p141, %p142
    %p145 = scmp.ne.s32.totalorder %s130, %s144
    %p146 = scmp.eq.s32.totalorder %s36, 0
    %p147 = por %p145, %p146
    %s149 = sadd.s32 %s148, 1
    %p152 = scmp.eq.s32.totalorder %s30, 1
    %p153 = scmp.ne.s32.totalorder %s148, %s150
    %p154 = scmp.eq.s32.totalorder %s30, 0
    %p155 = por %p153, %p154
    %p156 = scmp.ne.s32.totalorder %s148, %s150
    %p157 = scmp.eq.s32.totalorder %s35, 1
    %p158 = por %p156, %p157
    %p159 = scmp.ne.s32.totalorder %s150, %s151
    %p160 = scmp.eq.s32.totalorder %s35, 0
    %p161 = por %p159, %p160
    %p162 = scmp.ne.s32.totalorder %s150, %s151
    %p163 = scmp.eq.s32.totalorder %s36, 1
    %p164 = por %p162, %p163
    %p166 = scmp.ne.s32.totalorder %s151, %s165
    %p167 = scmp.eq.s32.totalorder %s36, 0
    %p168 = por %p166, %p167
    %s170 = sadd.s32 %s169, 1
    %p173 = scmp.eq.s32.totalorder %s30, 1
    %p174 = scmp.ne.s32.totalorder %s169, %s171
    %p175 = scmp.eq.s32.totalorder %s30, 0
    %p176 = por %p174, %p175
    %p177 = scmp.ne.s32.totalorder %s169, %s171
    %p178 = scmp.eq.s32.totalorder %s35, 1
    %p179 = por %p177, %p178
    %p180 = scmp.ne.s32.totalorder %s171, %s172
    %p181 = scmp.eq.s32.totalorder %s35, 0
    %p182 = por %p180, %p181
    %p183 = scmp.ne.s32.totalorder %s171, %s172
    %p184 = scmp.eq.s32.totalorder %s36, 1
    %p185 = por %p183, %p184
    %p187 = scmp.ne.s32.totalorder %s172, %s186
    %p188 = scmp.eq.s32.totalorder %s36, 0
    %p189 = por %p187, %p188
    %s191 = sadd.s32 %s190, 1
    %p194 = scmp.eq.s32.totalorder %s30, 1
    %p195 = scmp.ne.s32.totalorder %s190, %s192
    %p196 = scmp.eq.s32.totalorder %s30, 0
    %p197 = por %p195, %p196
    %p198 = scmp.ne.s32.totalorder %s190, %s192
    %p199 = scmp.eq.s32.totalorder %s35, 1
    %p200 = por %p198, %p199
    %p201 = scmp.ne.s32.totalorder %s192, %s193
    %p202 = scmp.eq.s32.totalorder %s35, 0
    %p203 = por %p201, %p202
    %p204 = scmp.ne.s32.totalorder %s192, %s193
    %p205 = scmp.eq.s32.totalorder %s36, 1
    %p206 = por %p204, %p205
    %p208 = scmp.ne.s32.totalorder %s193, %s207
    %p209 = scmp.eq.s32.totalorder %s36, 0
    %p210 = por %p208, %p209
    %s212 = sadd.s32 %s211, 1
    %p215 = scmp.eq.s32.totalorder %s30, 1
    %p216 = scmp.ne.s32.totalorder %s211, %s213
    %p217 = scmp.eq.s32.totalorder %s30, 0
    %p218 = por %p216, %p217
    %p219 = scmp.ne.s32.totalorder %s211, %s213
    %p220 = scmp.eq.s32.totalorder %s35, 1
    %p221 = por %p219, %p220
    %p222 = scmp.ne.s32.totalorder %s213, %s214
    %p223 = scmp.eq.s32.totalorder %s35, 0
    %p224 = por %p222, %p223
    %p225 = scmp.ne.s32.totalorder %s213, %s214
    %p226 = scmp.eq.s32.totalorder %s36, 1
    %p227 = por %p225, %p226
    %p229 = scmp.ne.s32.totalorder %s214, %s228
    %p230 = scmp.eq.s32.totalorder %s36, 0
    %p231 = por %p229, %p230
    %s233 = sadd.s32 %s232, 1
    %p236 = scmp.eq.s32.totalorder %s30, 1
    %p237 = scmp.ne.s32.totalorder %s232, %s234
    %p238 = scmp.eq.s32.totalorder %s30, 0
    %p239 = por %p237, %p238
    %p240 = scmp.ne.s32.totalorder %s232, %s234
    %p241 = scmp.eq.s32.totalorder %s35, 1
    %p242 = por %p240, %p241
    %p243 = scmp.ne.s32.totalorder %s234, %s235
    %p244 = scmp.eq.s32.totalorder %s35, 0
    %p245 = por %p243, %p244
    %p246 = scmp.ne.s32.totalorder %s234, %s235
    %p247 = scmp.eq.s32.totalorder %s36, 1
    %p248 = por %p246, %p247
    %p250 = scmp.ne.s32.totalorder %s235, %s249
    %p251 = scmp.eq.s32.totalorder %s36, 0
    %p252 = por %p250, %p251
    %s254 = sadd.s32 %s253, 1
    %p257 = scmp.eq.s32.totalorder %s30, 1
    %p258 = scmp.ne.s32.totalorder %s253, %s255
    %p259 = scmp.eq.s32.totalorder %s30, 0
    %p260 = por %p258, %p259
    %p261 = scmp.ne.s32.totalorder %s253, %s255
    %p262 = scmp.eq.s32.totalorder %s35, 1
    %p263 = por %p261, %p262
    %p264 = scmp.ne.s32.totalorder %s255, %s256
    %p265 = scmp.eq.s32.totalorder %s35, 0
    %p266 = por %p264, %p265
    %p267 = scmp.ne.s32.totalorder %s255, %s256
    %p268 = scmp.eq.s32.totalorder %s36, 1
    %p269 = por %p267, %p268
    %p271 = scmp.ne.s32.totalorder %s256, %s270
    %p272 = scmp.eq.s32.totalorder %s36, 0
    %p273 = por %p271, %p272
    %s275 = sadd.s32 %s274, 1
    %p278 = scmp.eq.s32.totalorder %s30, 1
    %p279 = scmp.ne.s32.totalorder %s274, %s276
    %p280 = scmp.eq.s32.totalorder %s30, 0
    %p281 = por %p279, %p280
    %p282 = scmp.ne.s32.totalorder %s274, %s276
    %p283 = scmp.eq.s32.totalorder %s35, 1
    %p284 = por %p282, %p283
    %p285 = scmp.ne.s32.totalorder %s276, %s277
    %p286 = scmp.eq.s32.totalorder %s35, 0
    %p287 = por %p285, %p286
    %p288 = scmp.ne.s32.totalorder %s276, %s277
    %p289 = scmp.eq.s32.totalorder %s36, 1
    %p290 = por %p288, %p289
    %p292 = scmp.ne.s32.totalorder %s277, %s291
    %p293 = scmp.eq.s32.totalorder %s36, 0
    %p294 = por %p292, %p293
    %s296 = sadd.s32 %s295, 1
    %p299 = scmp.eq.s32.totalorder %s30, 1
    %p300 = scmp.ne.s32.totalorder %s295, %s297
    %p301 = scmp.eq.s32.totalorder %s30, 0
    %p302 = por %p300, %p301
    %p303 = scmp.ne.s32.totalorder %s295, %s297
    %p304 = scmp.eq.s32.totalorder %s35, 1
    %p305 = por %p303, %p304
    %p306 = scmp.ne.s32.totalorder %s297, %s298
    %p307 = scmp.eq.s32.totalorder %s35, 0
    %p308 = por %p306, %p307
    %p309 = scmp.ne.s32.totalorder %s297, %s298
    %p310 = scmp.eq.s32.totalorder %s36, 1
    %p311 = por %p309, %p310
    %p313 = scmp.ne.s32.totalorder %s298, %s312
    %p314 = scmp.eq.s32.totalorder %s36, 0
    %p315 = por %p313, %p314
    %s317 = sadd.s32 %s316, 1
    %p320 = scmp.eq.s32.totalorder %s30, 1
    %p321 = scmp.ne.s32.totalorder %s316, %s318
    %p322 = scmp.eq.s32.totalorder %s30, 0
    %p323 = por %p321, %p322
    %p324 = scmp.ne.s32.totalorder %s316, %s318
    %p325 = scmp.eq.s32.totalorder %s35, 1
    %p326 = por %p324, %p325
    %p327 = scmp.ne.s32.totalorder %s318, %s319
    %p328 = scmp.eq.s32.totalorder %s35, 0
    %p329 = por %p327, %p328
    %p330 = scmp.ne.s32.totalorder %s318, %s319
    %p331 = scmp.eq.s32.totalorder %s36, 1
    %p332 = por %p330, %p331
    %p334 = scmp.ne.s32.totalorder %s319, %s333
    %p335 = scmp.eq.s32.totalorder %s36, 0
    %p336 = por %p334, %p335
    %s338 = sadd.s32 %s337, 1
    %p341 = scmp.eq.s32.totalorder %s30, 1
    %p342 = scmp.ne.s32.totalorder %s337, %s339
    %p343 = scmp.eq.s32.totalorder %s30, 0
    %p344 = por %p342, %p343
    %p345 = scmp.ne.s32.totalorder %s337, %s339
    %p346 = scmp.eq.s32.totalorder %s35, 1
    %p347 = por %p345, %p346
    %p348 = scmp.ne.s32.totalorder %s339, %s340
    %p349 = scmp.eq.s32.totalorder %s35, 0
    %p350 = por %p348, %p349
    %p351 = scmp.ne.s32.totalorder %s339, %s340
    %p352 = scmp.eq.s32.totalorder %s36, 1
    %p353 = por %p351, %p352
    %p355 = scmp.ne.s32.totalorder %s340, %s354
    %p356 = scmp.eq.s32.totalorder %s36, 0
    %p357 = por %p355, %p356
    %s359 = sadd.s32 %s358, 1
    %p362 = scmp.eq.s32.totalorder %s30, 1
    %p363 = scmp.ne.s32.totalorder %s358, %s360
    %p364 = scmp.eq.s32.totalorder %s30, 0
    %p365 = por %p363, %p364
    %p366 = scmp.ne.s32.totalorder %s358, %s360
    %p367 = scmp.eq.s32.totalorder %s35, 1
    %p368 = por %p366, %p367
    %p369 = scmp.ne.s32.totalorder %s360, %s361
    %p370 = scmp.eq.s32.totalorder %s35, 0
    %p371 = por %p369, %p370
    %p372 = scmp.ne.s32.totalorder %s360, %s361
    %p373 = scmp.eq.s32.totalorder %s36, 1
    %p374 = por %p372, %p373
    %p376 = scmp.ne.s32.totalorder %s361, %s375
    %p377 = scmp.eq.s32.totalorder %s36, 0
    %p378 = por %p376, %p377
    %s380 = sadd.s32 %s379, 1
    %p383 = scmp.eq.s32.totalorder %s30, 1
    %p384 = scmp.ne.s32.totalorder %s379, %s381
    %p385 = scmp.eq.s32.totalorder %s30, 0
    %p386 = por %p384, %p385
    %p387 = scmp.ne.s32.totalorder %s379, %s381
    %p388 = scmp.eq.s32.totalorder %s35, 1
    %p389 = por %p387, %p388
    %p390 = scmp.ne.s32.totalorder %s381, %s382
    %p391 = scmp.eq.s32.totalorder %s35, 0
    %p392 = por %p390, %p391
    %p393 = scmp.ne.s32.totalorder %s381, %s382
    %p394 = scmp.eq.s32.totalorder %s36, 1
    %p395 = por %p393, %p394
    %p397 = scmp.ne.s32.totalorder %s382, %s396
    %p398 = scmp.eq.s32.totalorder %s36, 0
    %p399 = por %p397, %p398
    %s401 = sadd.s32 %s400, 1
    %p404 = scmp.eq.s32.totalorder %s30, 1
    %p405 = scmp.ne.s32.totalorder %s400, %s402
    %p406 = scmp.eq.s32.totalorder %s30, 0
    %p407 = por %p405, %p406
    %p408 = scmp.ne.s32.totalorder %s400, %s402
    %p409 = scmp.eq.s32.totalorder %s35, 1
    %p410 = por %p408, %p409
    %p411 = scmp.ne.s32.totalorder %s402, %s403
    %p412 = scmp.eq.s32.totalorder %s35, 0
    %p413 = por %p411, %p412
    %p414 = scmp.ne.s32.totalorder %s402, %s403
    %p415 = scmp.eq.s32.totalorder %s36, 1
    %p416 = por %p414, %p415
    %p418 = scmp.ne.s32.totalorder %s403, %s417
    %p419 = scmp.eq.s32.totalorder %s36, 0
    %p420 = por %p418, %p419
    %s422 = sadd.s32 %s421, 1
    %p425 = scmp.eq.s32.totalorder %s30, 1
    %p426 = scmp.ne.s32.totalorder %s421, %s423
    %p427 = scmp.eq.s32.totalorder %s30, 0
    %p428 = por %p426, %p427
    %p429 = scmp.ne.s32.totalorder %s421, %s423
    %p430 = scmp.eq.s32.totalorder %s35, 1
    %p431 = por %p429, %p430
    %p432 = scmp.ne.s32.totalorder %s423, %s424
    %p433 = scmp.eq.s32.totalorder %s35, 0
    %p434 = por %p432, %p433
    %p435 = scmp.ne.s32.totalorder %s423, %s424
    %p436 = scmp.eq.s32.totalorder %s36, 1
    %p437 = por %p435, %p436
    %p439 = scmp.ne.s32.totalorder %s424, %s438
    %p440 = scmp.eq.s32.totalorder %s36, 0
    %p441 = por %p439, %p440
    %s443 = sadd.s32 %s442, 1
    %p446 = scmp.eq.s32.totalorder %s30, 1
    %p447 = scmp.ne.s32.totalorder %s442, %s444
    %p448 = scmp.eq.s32.totalorder %s30, 0
    %p449 = por %p447, %p448
    %p450 = scmp.ne.s32.totalorder %s442, %s444
    %p451 = scmp.eq.s32.totalorder %s35, 1
    %p452 = por %p450, %p451
    %p453 = scmp.ne.s32.totalorder %s444, %s445
    %p454 = scmp.eq.s32.totalorder %s35, 0
    %p455 = por %p453, %p454
    %p456 = scmp.ne.s32.totalorder %s444, %s445
    %p457 = scmp.eq.s32.totalorder %s36, 1
    %p458 = por %p456, %p457
    %p460 = scmp.ne.s32.totalorder %s445, %s459
    %p461 = scmp.eq.s32.totalorder %s36, 0
    %p462 = por %p460, %p461
    %s464 = sadd.s32 %s463, 1
    %p467 = scmp.eq.s32.totalorder %s30, 1
    %p468 = scmp.ne.s32.totalorder %s463, %s465
    %p469 = scmp.eq.s32.totalorder %s30, 0
    %p470 = por %p468, %p469
    %p471 = scmp.ne.s32.totalorder %s463, %s465
    %p472 = scmp.eq.s32.totalorder %s35, 1
    %p473 = por %p471, %p472
    %p474 = scmp.ne.s32.totalorder %s465, %s466
    %p475 = scmp.eq.s32.totalorder %s35, 0
    %p476 = por %p474, %p475
    %p477 = scmp.ne.s32.totalorder %s465, %s466
    %p478 = scmp.eq.s32.totalorder %s36, 1
    %p479 = por %p477, %p478
    %p481 = scmp.ne.s32.totalorder %s466, %s480
    %p482 = scmp.eq.s32.totalorder %s36, 0
    %p483 = por %p481, %p482
    %s485 = sadd.s32 %s484, 1
    %p488 = scmp.eq.s32.totalorder %s30, 1
    %p489 = scmp.ne.s32.totalorder %s484, %s486
    %p490 = scmp.eq.s32.totalorder %s30, 0
    %p491 = por %p489, %p490
    %p492 = scmp.ne.s32.totalorder %s484, %s486
    %p493 = scmp.eq.s32.totalorder %s35, 1
    %p494 = por %p492, %p493
    %p495 = scmp.ne.s32.totalorder %s486, %s487
    %p496 = scmp.eq.s32.totalorder %s35, 0
    %p497 = por %p495, %p496
    %p498 = scmp.ne.s32.totalorder %s486, %s487
    %p499 = scmp.eq.s32.totalorder %s36, 1
    %p500 = por %p498, %p499
    %p502 = scmp.ne.s32.totalorder %s487, %s501
    %p503 = scmp.eq.s32.totalorder %s36, 0
    %p504 = por %p502, %p503
    %s505 = ssub.s32 %s30, %s37
    %p506 = scmp.eq.s32.totalorder %s505, 0
    %s508 = sadd.s32 %s507, 1
    %s509 = scalar_select %p506, %s507, %s508
    %p512 = pneg %p506
    %p513 = scmp.eq.s32.totalorder %s30, 1
    %p514 = por %p512, %p513
    %p515 = scmp.ne.s32.totalorder %s507, %s510
    %p516 = scmp.eq.s32.totalorder %s30, 0
    %p517 = por %p515, %p516
    %p518 = scmp.ne.s32.totalorder %s507, %s510
    %p519 = scmp.eq.s32.totalorder %s35, 1
    %p520 = por %p518, %p519
    %p521 = scmp.ne.s32.totalorder %s510, %s511
    %p522 = scmp.eq.s32.totalorder %s35, 0
    %p523 = por %p521, %p522
    %p524 = scmp.ne.s32.totalorder %s510, %s511
    %p525 = scmp.eq.s32.totalorder %s36, 1
    %p526 = por %p524, %p525
    %p528 = scmp.ne.s32.totalorder %s511, %s527
    %p529 = scmp.eq.s32.totalorder %s36, 0
    %p530 = por %p528, %p529
    %s531 = ssub.s32 %s30, %s37
    %p532 = scmp.eq.s32.totalorder %s531, 0
    %s534 = sadd.s32 %s533, 1
    %s535 = scalar_select %p532, %s533, %s534
    %p538 = pneg %p532
    %p539 = scmp.eq.s32.totalorder %s30, 1
    %p540 = por %p538, %p539
    %p541 = scmp.ne.s32.totalorder %s533, %s536
    %p542 = scmp.eq.s32.totalorder %s30, 0
    %p543 = por %p541, %p542
    %p544 = scmp.ne.s32.totalorder %s533, %s536
    %p545 = scmp.eq.s32.totalorder %s35, 1
    %p546 = por %p544, %p545
    %p547 = scmp.ne.s32.totalorder %s536, %s537
    %p548 = scmp.eq.s32.totalorder %s35, 0
    %p549 = por %p547, %p548
    %p550 = scmp.ne.s32.totalorder %s536, %s537
    %p551 = scmp.eq.s32.totalorder %s36, 1
    %p552 = por %p550, %p551
    %p554 = scmp.ne.s32.totalorder %s537, %s553
    %p555 = scmp.eq.s32.totalorder %s36, 0
    %p556 = por %p554, %p555
    %p557 = scmp.le.s32.totalorder 1, %s30
    %p558 = scmp.lt.s32.totalorder %s30, 3
    %p559 = pnand %p557, %p558
    %p560 = pneg %p559
    // Predicated region
    $region9: #{dino_unseg_forward.1} parent=5 // pred_check
      _
    $region10: #{dino_unseg_forward.1} parent=5 // pred_check_branch
      %562 = sbr.rel (%p559) target = $region12
    $region11: #{dino_unseg_forward.1} parent=5 // pred_region
      %s563 = ssub.s32 %s30, 1
      // Predicated region
      $region13: #{dino_unseg_forward.1} parent=11 // pred_check
        %p564 = pneg %p77
      $region14: #{dino_unseg_forward.1} parent=11 // pred_check_branch
        %566 = sbr.rel (%p564) target = $region16
      $region15: #{dino_unseg_forward.1} parent=11 // pred_region
        _
      $region16: #{dino_unseg_forward.1} parent=11 // pred_fallthru
        _
      // Predicated region
      $region17: #{dino_unseg_forward.1} parent=11 // pred_check
        %p567 = pneg %p98
      $region18: #{dino_unseg_forward.1} parent=11 // pred_check_branch
        %569 = sbr.rel (%p567) target = $region20
      $region19: #{dino_unseg_forward.1} parent=11 // pred_region
        _
      $region20: #{dino_unseg_forward.1} parent=11 // pred_fallthru
        _
      // Predicated region
      $region21: #{dino_unseg_forward.1} parent=11 // pred_check
        %p570 = pneg %p119
      $region22: #{dino_unseg_forward.1} parent=11 // pred_check_branch
        %572 = sbr.rel (%p570) target = $region24
      $region23: #{dino_unseg_forward.1} parent=11 // pred_region
        _
      $region24: #{dino_unseg_forward.1} parent=11 // pred_fallthru
        _
      // Predicated region
      $region25: #{dino_unseg_forward.1} parent=11 // pred_check
        %p573 = pneg %p140
      $region26: #{dino_unseg_forward.1} parent=11 // pred_check_branch
        %575 = sbr.rel (%p573) target = $region28
      $region27: #{dino_unseg_forward.1} parent=11 // pred_region
        _
      $region28: #{dino_unseg_forward.1} parent=11 // pred_fallthru
        _
      // Predicated region
      $region29: #{dino_unseg_forward.1} parent=11 // pred_check
        %p576 = pneg %p161
      $region30: #{dino_unseg_forward.1} parent=11 // pred_check_branch
        %578 = sbr.rel (%p576) target = $region32
      $region31: #{dino_unseg_forward.1} parent=11 // pred_region
        _
      $region32: #{dino_unseg_forward.1} parent=11 // pred_fallthru
        _
      // Predicated region
      $region33: #{dino_unseg_forward.1} parent=11 // pred_check
        %p579 = pneg %p182
      $region34: #{dino_unseg_forward.1} parent=11 // pred_check_branch
        %581 = sbr.rel (%p579) target = $region36
      $region35: #{dino_unseg_forward.1} parent=11 // pred_region
        _
      $region36: #{dino_unseg_forward.1} parent=11 // pred_fallthru
        _
      // Predicated region
      $region37: #{dino_unseg_forward.1} parent=11 // pred_check
        %p582 = pneg %p203
      $region38: #{dino_unseg_forward.1} parent=11 // pred_check_branch
        %584 = sbr.rel (%p582) target = $region40
      $region39: #{dino_unseg_forward.1} parent=11 // pred_region
        _
      $region40: #{dino_unseg_forward.1} parent=11 // pred_fallthru
        _
      // Predicated region
      $region41: #{dino_unseg_forward.1} parent=11 // pred_check
        %p585 = pneg %p224
      $region42: #{dino_unseg_forward.1} parent=11 // pred_check_branch
        %587 = sbr.rel (%p585) target = $region44
      $region43: #{dino_unseg_forward.1} parent=11 // pred_region
        _
      $region44: #{dino_unseg_forward.1} parent=11 // pred_fallthru
        _
      // Predicated region
      $region45: #{dino_unseg_forward.1} parent=11 // pred_check
        %p588 = pneg %p245
      $region46: #{dino_unseg_forward.1} parent=11 // pred_check_branch
        %590 = sbr.rel (%p588) target = $region48
      $region47: #{dino_unseg_forward.1} parent=11 // pred_region
        _
      $region48: #{dino_unseg_forward.1} parent=11 // pred_fallthru
        _
      // Predicated region
      $region49: #{dino_unseg_forward.1} parent=11 // pred_check
        %p591 = pneg %p266
      $region50: #{dino_unseg_forward.1} parent=11 // pred_check_branch
        %593 = sbr.rel (%p591) target = $region52
      $region51: #{dino_unseg_forward.1} parent=11 // pred_region
        _
      $region52: #{dino_unseg_forward.1} parent=11 // pred_fallthru
        _
      // Predicated region
      $region53: #{dino_unseg_forward.1} parent=11 // pred_check
        %p594 = pneg %p287
      $region54: #{dino_unseg_forward.1} parent=11 // pred_check_branch
        %596 = sbr.rel (%p594) target = $region56
      $region55: #{dino_unseg_forward.1} parent=11 // pred_region
        _
      $region56: #{dino_unseg_forward.1} parent=11 // pred_fallthru
        _
      // Predicated region
      $region57: #{dino_unseg_forward.1} parent=11 // pred_check
        %p597 = pneg %p308
      $region58: #{dino_unseg_forward.1} parent=11 // pred_check_branch
        %599 = sbr.rel (%p597) target = $region60
      $region59: #{dino_unseg_forward.1} parent=11 // pred_region
        _
      $region60: #{dino_unseg_forward.1} parent=11 // pred_fallthru
        _
      // Predicated region
      $region61: #{dino_unseg_forward.1} parent=11 // pred_check
        %p600 = pneg %p329
      $region62: #{dino_unseg_forward.1} parent=11 // pred_check_branch
        %602 = sbr.rel (%p600) target = $region64
      $region63: #{dino_unseg_forward.1} parent=11 // pred_region
        _
      $region64: #{dino_unseg_forward.1} parent=11 // pred_fallthru
        _
      // Predicated region
      $region65: #{dino_unseg_forward.1} parent=11 // pred_check
        %p603 = pneg %p350
      $region66: #{dino_unseg_forward.1} parent=11 // pred_check_branch
        %605 = sbr.rel (%p603) target = $region68
      $region67: #{dino_unseg_forward.1} parent=11 // pred_region
        _
      $region68: #{dino_unseg_forward.1} parent=11 // pred_fallthru
        _
      // Predicated region
      $region69: #{dino_unseg_forward.1} parent=11 // pred_check
        %p606 = pneg %p371
      $region70: #{dino_unseg_forward.1} parent=11 // pred_check_branch
        %608 = sbr.rel (%p606) target = $region72
      $region71: #{dino_unseg_forward.1} parent=11 // pred_region
        _
      $region72: #{dino_unseg_forward.1} parent=11 // pred_fallthru
        _
      // Predicated region
      $region73: #{dino_unseg_forward.1} parent=11 // pred_check
        %p609 = pneg %p392
      $region74: #{dino_unseg_forward.1} parent=11 // pred_check_branch
        %611 = sbr.rel (%p609) target = $region76
      $region75: #{dino_unseg_forward.1} parent=11 // pred_region
        _
      $region76: #{dino_unseg_forward.1} parent=11 // pred_fallthru
        _
      // Predicated region
      $region77: #{dino_unseg_forward.1} parent=11 // pred_check
        %p612 = pneg %p413
      $region78: #{dino_unseg_forward.1} parent=11 // pred_check_branch
        %614 = sbr.rel (%p612) target = $region80
      $region79: #{dino_unseg_forward.1} parent=11 // pred_region
        _
      $region80: #{dino_unseg_forward.1} parent=11 // pred_fallthru
        _
      // Predicated region
      $region81: #{dino_unseg_forward.1} parent=11 // pred_check
        %p615 = pneg %p434
      $region82: #{dino_unseg_forward.1} parent=11 // pred_check_branch
        %617 = sbr.rel (%p615) target = $region84
      $region83: #{dino_unseg_forward.1} parent=11 // pred_region
        _
      $region84: #{dino_unseg_forward.1} parent=11 // pred_fallthru
        _
      // Predicated region
      $region85: #{dino_unseg_forward.1} parent=11 // pred_check
        %p618 = pneg %p455
      $region86: #{dino_unseg_forward.1} parent=11 // pred_check_branch
        %620 = sbr.rel (%p618) target = $region88
      $region87: #{dino_unseg_forward.1} parent=11 // pred_region
        _
      $region88: #{dino_unseg_forward.1} parent=11 // pred_fallthru
        _
      // Predicated region
      $region89: #{dino_unseg_forward.1} parent=11 // pred_check
        %p621 = pneg %p476
      $region90: #{dino_unseg_forward.1} parent=11 // pred_check_branch
        %623 = sbr.rel (%p621) target = $region92
      $region91: #{dino_unseg_forward.1} parent=11 // pred_region
        _
      $region92: #{dino_unseg_forward.1} parent=11 // pred_fallthru
        _
      // Predicated region
      $region93: #{dino_unseg_forward.1} parent=11 // pred_check
        %p624 = pneg %p497
      $region94: #{dino_unseg_forward.1} parent=11 // pred_check_branch
        %626 = sbr.rel (%p624) target = $region96
      $region95: #{dino_unseg_forward.1} parent=11 // pred_region
        _
      $region96: #{dino_unseg_forward.1} parent=11 // pred_fallthru
        _
    $region12: #{dino_unseg_forward.1} parent=5 // pred_fallthru
      _
    %p627 = scmp.lt.s32.totalorder %s30, 2
    // Predicated region
    $region97: #{dino_unseg_forward.1} parent=5 // pred_check
      %p628 = pneg %p627
    $region98: #{dino_unseg_forward.1} parent=5 // pred_check_branch
      %630 = sbr.rel (%p628) target = $region100
    $region99: #{dino_unseg_forward.1} parent=5 // pred_region
      // Predicated region
      $region101: #{dino_unseg_forward.1} parent=99 // pred_check
        %p631 = pneg %p50
      $region102: #{dino_unseg_forward.1} parent=99 // pred_check_branch
        %633 = sbr.rel (%p631) target = $region104
      $region103: #{dino_unseg_forward.1} parent=99 // pred_region
        %s634 = smul.u32 8, %s30
        %p635 = scmp.lt.s32.totalorder %s634, 15
        %s636 = scalar_select %p635, %s634, 15
        %s637 = smul.addr %s636, 2
        %s638 = smul.addr %s637, 4
        %s639 = scalar_lea.vmem %s0, %s638
        %s640 = smul.u32 8, %s30
      $region104: #{dino_unseg_forward.1} parent=99 // pred_fallthru
        _
    $region100: #{dino_unseg_forward.1} parent=5 // pred_fallthru
      _
    %p641 = scmp.le.s32.totalorder 1, %s30
    %p642 = scmp.lt.s32.totalorder %s30, 3
    %p643 = pnand %p641, %p642
    %p644 = pneg %p643
    // Predicated region
    $region105: #{dino_unseg_forward.1} parent=5 // pred_check
      _
    $region106: #{dino_unseg_forward.1} parent=5 // pred_check_branch
      %646 = sbr.rel (%p643) target = $region108
    $region107: #{dino_unseg_forward.1} parent=5 // pred_region
      %s647 = ssub.s32 %s30, 1
      %s648 = smul.u32 8, %s35
      %p649 = scmp.lt.s32.totalorder %s648, 15
      %s650 = scalar_select %p649, %s648, 15
      %s651 = smul.addr %s650, 2
      %s652 = smul.addr %s651, 4
      %s653 = scalar_lea.vmem %s0, %s652
      %p654 = pneg %p56
      %p655 = pneg %p53
      %p656 = pneg %p77
      %p657 = pneg %p74
      %p658 = pneg %p98
      %p659 = pneg %p95
      %p660 = pneg %p119
      %p661 = pneg %p116
      %p662 = pneg %p140
      %p663 = pneg %p137
      %p664 = pneg %p161
      %p665 = pneg %p158
      %p666 = pneg %p182
      %p667 = pneg %p179
      %p668 = pneg %p203
      %p669 = pneg %p200
      %p670 = pneg %p224
      %p671 = pneg %p221
      %p672 = pneg %p245
      %p673 = pneg %p242
      %p674 = pneg %p266
      %p675 = pneg %p263
      %p676 = pneg %p287
      %p677 = pneg %p284
      %p678 = pneg %p308
      %p679 = pneg %p305
      %p680 = pneg %p329
      %p681 = pneg %p326
      %p682 = pneg %p350
      %p683 = pneg %p347
      %p684 = pneg %p371
      %p685 = pneg %p368
      %p686 = pneg %p392
      %p687 = pneg %p389
      %p688 = pneg %p413
      %p689 = pneg %p410
      %p690 = pneg %p434
      %p691 = pneg %p431
      %p692 = pneg %p455
      %p693 = pneg %p452
      %p694 = pneg %p476
      %p695 = pneg %p473
      %p696 = pneg %p497
      %p697 = pneg %p494
      %p698 = pneg %p523
      %p699 = pneg %p520
      %s700 = smul.u32 8, %s35
      %p701 = scmp.lt.s32.totalorder %s700, 15
      %s702 = scalar_select %p701, %s700, 15
      %s703 = smul.addr %s702, 4
      %s704 = scalar_lea.vmem %s22, %s703
      %p705 = pneg %p549
      %p706 = pneg %p546
      %p707 = scmp.lt.s32.totalorder %s35, 1
      %s708 = scalar_select %p707, %s35, 1
      %s709 = smul.addr %s708, 8
      %s710 = scalar_lea.vmem %s23, %s709
      %s711 = smul.u32 8, %s35
      %p712 = scmp.lt.s32.totalorder %s711, 15
      %s713 = scalar_select %p712, %s711, 15
      %s714 = smul.addr %s713, 2
      %s715 = smul.addr %s714, 4
      %s716 = scalar_lea.vmem %s0, %s715
      %s717 = smul.u32 8, %s35
      %s718 = smul.u32 8, %s35
      %p719 = scmp.lt.s32.totalorder %s718, 15
      %s720 = scalar_select %p719, %s718, 15
      %s721 = smul.addr %s720, 4
      %s722 = scalar_lea.vmem %s22, %s721
      %s723 = smul.u32 8, %s35
      %p724 = scmp.lt.s32.totalorder %s35, 1
      %s725 = scalar_select %p724, %s35, 1
      %s726 = smul.addr %s725, 8
      %s727 = scalar_lea.vmem %s23, %s726
      %v729 = vld [vmem:[%s716] sm:$0xff]
      %v730 = vld [vmem:[%s716 + $0x8] sm:$0xff]
      %v731 = vld [vmem:[%s716 + $0x10] sm:$0xff]
      %v732 = vld [vmem:[%s716 + $0x18] sm:$0xff]
      %v733 = vld [vmem:[%s716 + $0x20] sm:$0xff]
      %v734 = vld [vmem:[%s716 + $0x28] sm:$0xff]
      %v735 = vld [vmem:[%s716 + $0x30] sm:$0xff]
      %v736 = vld [vmem:[%s716 + $0x38] sm:$0xff]
      %v737 = vld [vmem:[%s1] sm:$0xf]
      %v738 = vld [vmem:[%s1 + $0x4] sm:$0xf]
      %v739 = vld [vmem:[%s1 + $0x8] sm:$0xf]
      %v740 = vld [vmem:[%s1 + $0xc] sm:$0xf]
      %v741 = vld [vmem:[%s1 + $0x10] sm:$0xf]
      %v742 = vld [vmem:[%s1 + $0x14] sm:$0xf]
      %v743 = vld [vmem:[%s1 + $0x18] sm:$0xf]
      %v744 = vld [vmem:[%s1 + $0x1c] sm:$0xf]
      %v745 = vld [vmem:[%s1 + $0x20] sm:$0xf]
      %v746 = vld [vmem:[%s1 + $0x24] sm:$0xf]
      %v747 = vld [vmem:[%s1 + $0x28] sm:$0xf]
      %v748 = vld [vmem:[%s1 + $0x2c] sm:$0xf]
      %v749 = vld [vmem:[%s1 + $0x30] sm:$0xf]
      %v750 = vld [vmem:[%s1 + $0x34] sm:$0xf]
      %v751 = vld [vmem:[%s1 + $0x38] sm:$0xf]
      %v752 = vld [vmem:[%s1 + $0x3c] sm:$0xf]
      %v753 = vld [vmem:[%s1 + $0x40] sm:$0xf]
      %v754 = vld [vmem:[%s1 + $0x44] sm:$0xf]
      %v755 = vld [vmem:[%s1 + $0x48] sm:$0xf]
      %v756 = vld [vmem:[%s1 + $0x4c] sm:$0xf]
      %v757 = vld [vmem:[%s1 + $0x50] sm:$0xf]
      %v758 = vld [vmem:[%s1 + $0x54] sm:$0xf]
      %v759 = vld [vmem:[%s1 + $0x58] sm:$0xf]
      %v760 = vld [vmem:[%s1 + $0x5c] sm:$0xf]
      %v761 = vld [vmem:[%s2] sm:$0x1]
      %v763 = vlaneseq
      %v764 = vshrl.u32 %v763, 7
      %v765 = vsub.s32 0, %v764
      %v766 = vrot.slane %v761, %v765
      %v776 = vunpack.c.l.b16 %v729
      %v777 = vunpack.c.h.b16 %v729
      %v778 = vunpack.c.l.b16 %v730
      %v779 = vunpack.c.h.b16 %v730
      %v780 = vunpack.c.l.b16 %v731
      %v781 = vunpack.c.h.b16 %v731
      %v782 = vunpack.c.l.b16 %v732
      %v783 = vunpack.c.h.b16 %v732
      %v784 = vunpack.c.l.b16 %v733
      %v785 = vunpack.c.h.b16 %v733
      %v786 = vunpack.c.l.b16 %v734
      %v787 = vunpack.c.h.b16 %v734
      %v788 = vunpack.c.l.b16 %v735
      %v789 = vunpack.c.h.b16 %v735
      %v790 = vunpack.c.l.b16 %v736
      %v791 = vunpack.c.h.b16 %v736
      %v792 = vpack.c.b16 %v778, %v776
      %v793 = vpack.c.b16 %v779, %v777
      %v794 = vpack.c.b16 %v782, %v780
      %v795 = vpack.c.b16 %v783, %v781
      %v796 = vpack.c.b16 %v786, %v784
      %v797 = vpack.c.b16 %v787, %v785
      %v798 = vpack.c.b16 %v790, %v788
      %v799 = vpack.c.b16 %v791, %v789
      %v828 = vunpack.c.l.b16 %v737
      %v829 = vunpack.c.l.b16 %v738
      %v830 = vunpack.c.l.b16 %v739
      %v831 = vunpack.c.l.b16 %v740
      %v832 = vunpack.c.l.b16 %v741
      %v833 = vunpack.c.l.b16 %v742
      %v834 = vunpack.c.l.b16 %v743
      %v835 = vunpack.c.l.b16 %v744
      %v836 = vunpack.c.l.b16 %v745
      %v837 = vunpack.c.l.b16 %v746
      %v838 = vunpack.c.l.b16 %v747
      %v839 = vunpack.c.l.b16 %v748
      %v840 = vunpack.c.l.b16 %v749
      %v841 = vunpack.c.l.b16 %v750
      %v842 = vunpack.c.l.b16 %v751
      %v843 = vunpack.c.l.b16 %v752
      %v844 = vunpack.c.l.b16 %v753
      %v845 = vunpack.c.l.b16 %v754
      %v846 = vunpack.c.l.b16 %v755
      %v847 = vunpack.c.l.b16 %v756
      %v848 = vunpack.c.l.b16 %v757
      %v849 = vunpack.c.l.b16 %v758
      %v850 = vunpack.c.l.b16 %v759
      %v851 = vunpack.c.l.b16 %v760
      %v852 = vpack.c.b16 %v829, %v828
      %v853 = vpack.c.b16 %v831, %v830
      %v854 = vpack.c.b16 %v833, %v832
      %v855 = vpack.c.b16 %v835, %v834
      %v856 = vpack.c.b16 %v837, %v836
      %v857 = vpack.c.b16 %v839, %v838
      %v858 = vpack.c.b16 %v841, %v840
      %v859 = vpack.c.b16 %v843, %v842
      %v860 = vpack.c.b16 %v845, %v844
      %v861 = vpack.c.b16 %v847, %v846
      %v862 = vpack.c.b16 %v849, %v848
      %v863 = vpack.c.b16 %v851, %v850
      %vm876 = vcmask 523264
      %v878 = vsel %vm876, %v793, 0
      %v881 = vsel %vm876, %v795, 0
      %v884 = vsel %vm876, %v797, 0
      %v887 = vsel %vm876, %v799, 0
      %889 = vmatprep.subr.bf16.mxu0 0
      %890 = vmatpush1.bf16.msra.mxu0 %v852
      %891 = vmatprep.subr.bf16.mxu0 0
      %892 = vmatpush1.bf16.msra.mxu0 %v853
      %893 = vmatprep.subr.bf16.mxu0 0
      %894 = vmatpush1.bf16.msra.mxu0 %v854
      %895 = vmatprep.subr.bf16.mxu0 0
      %896 = vmatpush1.bf16.msra.mxu0 %v855
      %897 = vmatprep.subr.bf16.mxu0 0
      %898 = vmatpush1.bf16.msra.mxu0 %v856
      %899 = vmatprep.subr.bf16.mxu0 0
      %900 = vmatpush1.bf16.msra.mxu0 %v857
      %901 = vmatprep.subr.bf16.mxu0 0
      %902 = vmatpush1.bf16.msra.mxu0 %v858
      %903 = vmatprep.subr.bf16.mxu0 0
      %904 = vmatpush1.bf16.msra.mxu0 %v859
      %905 = vmatprep.subr.bf16.mxu0 0
      %906 = vmatpush1.bf16.msra.mxu0 %v860
      %907 = vmatprep.subr.bf16.mxu0 0
      %908 = vmatpush1.bf16.msra.mxu0 %v861
      %909 = vmatprep.subr.bf16.mxu0 0
      %910 = vmatpush1.bf16.msra.mxu0 %v862
      %911 = vmatprep.subr.bf16.mxu0 0
      %912 = vmatpush1.bf16.msra.mxu0 %v863
      %913 = vmatprep.subr.bf16.mxu0 0
      %914 = vmatpush1.bf16.msra.mxu0 0
      %915 = vmatprep.subr.bf16.mxu0 0
      %916 = vmatpush1.bf16.msra.mxu0 0
      %917 = vmatprep.subr.bf16.mxu0 0
      %918 = vmatpush1.bf16.msra.mxu0 0
      %919 = vmatprep.subr.bf16.mxu0 0
      %920 = vmatpush1.bf16.msra.mxu0 0
      %921 = vmatprep.mubr.bf16.mxu0 %v878
      %922 = vmatmul.mubr.bf16.gmra.mrb[0].mxu0 %v792
      %v923 = vpop.f32.mrb[0].mxu0
      %v924 = vadd.f32 %v766, %v923
      %v925 = vpop.f32.mrb[0].mxu0
      %v926 = vpop.f32.mrb[0].mxu0
      %v927 = vadd.f32 %v766, %v926
      %v928 = vpop.f32.mrb[0].mxu0
      %929 = vmatprep.mubr.bf16.mxu0 %v881
      %930 = vmatmul.mubr.bf16.gmra.mrb[0].mxu0 %v794
      %v931 = vpop.f32.mrb[0].mxu0
      %v932 = vadd.f32 %v766, %v931
      %v933 = vpop.f32.mrb[0].mxu0
      %v934 = vpop.f32.mrb[0].mxu0
      %v935 = vadd.f32 %v766, %v934
      %v936 = vpop.f32.mrb[0].mxu0
      %937 = vmatprep.mubr.bf16.mxu0 %v884
      %938 = vmatmul.mubr.bf16.gmra.mrb[0].mxu0 %v796
      %v939 = vpop.f32.mrb[0].mxu0
      %v940 = vadd.f32 %v766, %v939
      %v941 = vpop.f32.mrb[0].mxu0
      %v942 = vpop.f32.mrb[0].mxu0
      %v943 = vadd.f32 %v766, %v942
      %v944 = vpop.f32.mrb[0].mxu0
      %945 = vmatprep.mubr.bf16.mxu0 %v887
      %946 = vmatmul.mubr.bf16.gmra.mrb[0].mxu0 %v798
      %v947 = vpop.f32.mrb[0].mxu0
      %v948 = vadd.f32 %v766, %v947
      %v949 = vpop.f32.mrb[0].mxu0
      %v950 = vpop.f32.mrb[0].mxu0
      %v951 = vadd.f32 %v766, %v950
      %v952 = vpop.f32.mrb[0].mxu0
      %953 = vdwg.mxu0
      %v954 = vpack.c.bf16 %v927, %v924
      %v955 = vpack.c.bf16 %v935, %v932
      %v956 = vpack.c.bf16 %v943, %v940
      %v957 = vpack.c.bf16 %v951, %v948
      %v958 = vld [vmem:[%s3] sm:$0xf]
      %v959 = vld [vmem:[%s3 + $0x4] sm:$0xf]
      %v960 = vld [vmem:[%s3 + $0x8] sm:$0xf]
      %v961 = vld [vmem:[%s3 + $0xc] sm:$0xf]
      %v962 = vld [vmem:[%s4] sm:$0x1]
      %v964 = vlaneseq
      %v965 = vshrl.u32 %v964, 7
      %v966 = vsub.s32 0, %v965
      %v967 = vrot.slane %v962, %v966
      %v973 = vunpack.c.l.b16 %v958
      %v974 = vunpack.c.l.b16 %v959
      %v975 = vunpack.c.l.b16 %v960
      %v976 = vunpack.c.l.b16 %v961
      %v977 = vpack.c.b16 %v974, %v973
      %v978 = vpack.c.b16 %v976, %v975
      %vm981 = vcmask 261120
      %v983 = vsel %vm981, %v954, 0
      %v986 = vsel %vm981, %v955, 0
      %v989 = vsel %vm981, %v956, 0
      %v992 = vsel %vm981, %v957, 0
      %994 = vmatprep.subr.bf16.mxu0 0
      %995 = vmatpush1.bf16.msra.mxu0 %v977
      %996 = vmatprep.subr.bf16.mxu0 0
      %997 = vmatpush1.bf16.msra.mxu0 %v978
      %998 = vmatprep.subr.bf16.mxu0 0
      %999 = vmatpush1.bf16.msra.mxu0 0
      %1000 = vmatprep.subr.bf16.mxu0 0
      %1001 = vmatpush1.bf16.msra.mxu0 0
      %1002 = vmatprep.subr.bf16.mxu0 0
      %1003 = vmatpush1.bf16.msra.mxu0 0
      %1004 = vmatprep.subr.bf16.mxu0 0
      %1005 = vmatpush1.bf16.msra.mxu0 0
      %1006 = vmatprep.subr.bf16.mxu0 0
      %1007 = vmatpush1.bf16.msra.mxu0 0
      %1008 = vmatprep.subr.bf16.mxu0 0
      %1009 = vmatpush1.bf16.msra.mxu0 0
      %1010 = vmatprep.subr.bf16.mxu0 0
      %1011 = vmatpush1.bf16.msra.mxu0 0
      %1012 = vmatprep.subr.bf16.mxu0 0
      %1013 = vmatpush1.bf16.msra.mxu0 0
      %1014 = vmatprep.subr.bf16.mxu0 0
      %1015 = vmatpush1.bf16.msra.mxu0 0
      %1016 = vmatprep.subr.bf16.mxu0 0
      %1017 = vmatpush1.bf16.msra.mxu0 0
      %1018 = vmatprep.subr.bf16.mxu0 0
      %1019 = vmatpush1.bf16.msra.mxu0 0
      %1020 = vmatprep.subr.bf16.mxu0 0
      %1021 = vmatpush1.bf16.msra.mxu0 0
      %1022 = vmatprep.subr.bf16.mxu0 0
      %1023 = vmatpush1.bf16.msra.mxu0 0
      %1024 = vmatprep.subr.bf16.mxu0 0
      %1025 = vmatpush1.bf16.msra.mxu0 0
      %1026 = vmatprep.mubr.bf16.mxu0 0
      %1027 = vmatmul.mubr.bf16.gmra.mrb[0].mxu0 %v983
      %v1028 = vpop.f32.mrb[0].mxu0
      %v1029 = vadd.f32 %v967, %v1028
      %v1030 = vpop.f32.mrb[0].mxu0
      %v1031 = vpop.f32.mrb[0].mxu0
      %v1032 = vadd.f32 %v967, %v1031
      %v1033 = vpop.f32.mrb[0].mxu0
      %1034 = vmatprep.mubr.bf16.mxu0 0
      %1035 = vmatmul.mubr.bf16.gmra.mrb[0].mxu0 %v986
      %v1036 = vpop.f32.mrb[0].mxu0
      %v1037 = vadd.f32 %v967, %v1036
      %v1038 = vpop.f32.mrb[0].mxu0
      %v1039 = vpop.f32.mrb[0].mxu0
      %v1040 = vadd.f32 %v967, %v1039
      %v1041 = vpop.f32.mrb[0].mxu0
      %1042 = vmatprep.mubr.bf16.mxu0 0
      %1043 = vmatmul.mubr.bf16.gmra.mrb[0].mxu0 %v989
      %v1044 = vpop.f32.mrb[0].mxu0
      %v1045 = vadd.f32 %v967, %v1044
      %v1046 = vpop.f32.mrb[0].mxu0
      %v1047 = vpop.f32.mrb[0].mxu0
      %v1048 = vadd.f32 %v967, %v1047
      %v1049 = vpop.f32.mrb[0].mxu0
      %1050 = vmatprep.mubr.bf16.mxu0 0
      %1051 = vmatmul.mubr.bf16.gmra.mrb[0].mxu0 %v992
      %v1052 = vpop.f32.mrb[0].mxu0
      %v1053 = vadd.f32 %v967, %v1052
      %v1054 = vpop.f32.mrb[0].mxu0
      %v1055 = vpop.f32.mrb[0].mxu0
      %v1056 = vadd.f32 %v967, %v1055
      %v1057 = vpop.f32.mrb[0].mxu0
      %1058 = vdwg.mxu0
      %vm1059 = vcmp.gt.f32.partialorder %v1029, 0.0
      %vm1060 = vcmp.gt.f32.partialorder %v1032, 0.0
      %vm1061 = vcmp.gt.f32.partialorder %v1037, 0.0
      %vm1062 = vcmp.gt.f32.partialorder %v1040, 0.0
      %vm1063 = vcmp.gt.f32.partialorder %v1045, 0.0
      %vm1064 = vcmp.gt.f32.partialorder %v1048, 0.0
      %vm1065 = vcmp.gt.f32.partialorder %v1053, 0.0
      %vm1066 = vcmp.gt.f32.partialorder %v1056, 0.0
      %v1067 = vmul.f32 %v1029, 0.1
      %v1068 = vmul.f32 %v1032, 0.1
      %v1069 = vmul.f32 %v1037, 0.1
      %v1070 = vmul.f32 %v1040, 0.1
      %v1071 = vmul.f32 %v1045, 0.1
      %v1072 = vmul.f32 %v1048, 0.1
      %v1073 = vmul.f32 %v1053, 0.1
      %v1074 = vmul.f32 %v1056, 0.1
      %v1075 = vsel %vm1059, %v1029, %v1067
      %v1076 = vsel %vm1060, %v1032, %v1068
      %v1077 = vsel %vm1061, %v1037, %v1069
      %v1078 = vsel %vm1062, %v1040, %v1070
      %v1079 = vsel %vm1063, %v1045, %v1071
      %v1080 = vsel %vm1064, %v1048, %v1072
      %v1081 = vsel %vm1065, %v1053, %v1073
      %v1082 = vsel %vm1066, %v1056, %v1074
      %v1083 = vpack.c.bf16 %v1076, %v1075
      %v1084 = vpack.c.bf16 %v1078, %v1077
      %v1085 = vpack.c.bf16 %v1080, %v1079
      %v1086 = vpack.c.bf16 %v1082, %v1081
      %v1087 = vld [vmem:[%s5] sm:$0xf]
      %v1088 = vld [vmem:[%s5 + $0x4] sm:$0xf]
      %v1089 = vld [vmem:[%s5 + $0x8] sm:$0xf]
      %v1090 = vld [vmem:[%s5 + $0xc] sm:$0xf]
      %v1091 = vld [vmem:[%s6] sm:$0x1]
      %v1093 = vlaneseq
      %v1094 = vshrl.u32 %v1093, 7
      %v1095 = vsub.s32 0, %v1094
      %v1096 = vrot.slane %v1091, %v1095
      %v1102 = vunpack.c.l.b16 %v1087
      %v1103 = vunpack.c.l.b16 %v1088
      %v1104 = vunpack.c.l.b16 %v1089
      %v1105 = vunpack.c.l.b16 %v1090
      %v1106 = vpack.c.b16 %v1103, %v1102
      %v1107 = vpack.c.b16 %v1105, %v1104
      %v1111 = vsel %vm981, %v1083, 0
      %v1114 = vsel %vm981, %v1084, 0
      %v1117 = vsel %vm981, %v1085, 0
      %v1120 = vsel %vm981, %v1086, 0
      %1122 = vmatprep.subr.bf16.mxu0 0
      %1123 = vmatpush1.bf16.msra.mxu0 %v1106
      %1124 = vmatprep.subr.bf16.mxu0 0
      %1125 = vmatpush1.bf16.msra.mxu0 %v1107
      %1126 = vmatprep.subr.bf16.mxu0 0
      %1127 = vmatpush1.bf16.msra.mxu0 0
      %1128 = vmatprep.subr.bf16.mxu0 0
      %1129 = vmatpush1.bf16.msra.mxu0 0
      %1130 = vmatprep.subr.bf16.mxu0 0
      %1131 = vmatpush1.bf16.msra.mxu0 0
      %1132 = vmatprep.subr.bf16.mxu0 0
      %1133 = vmatpush1.bf16.msra.mxu0 0
      %1134 = vmatprep.subr.bf16.mxu0 0
      %1135 = vmatpush1.bf16.msra.mxu0 0
      %1136 = vmatprep.subr.bf16.mxu0 0
      %1137 = vmatpush1.bf16.msra.mxu0 0
      %1138 = vmatprep.subr.bf16.mxu0 0
      %1139 = vmatpush1.bf16.msra.mxu0 0
      %1140 = vmatprep.subr.bf16.mxu0 0
      %1141 = vmatpush1.bf16.msra.mxu0 0
      %1142 = vmatprep.subr.bf16.mxu0 0
      %1143 = vmatpush1.bf16.msra.mxu0 0
      %1144 = vmatprep.subr.bf16.mxu0 0
      %1145 = vmatpush1.bf16.msra.mxu0 0
      %1146 = vmatprep.subr.bf16.mxu0 0
      %1147 = vmatpush1.bf16.msra.mxu0 0
      %1148 = vmatprep.subr.bf16.mxu0 0
      %1149 = vmatpush1.bf16.msra.mxu0 0
      %1150 = vmatprep.subr.bf16.mxu0 0
      %1151 = vmatpush1.bf16.msra.mxu0 0
      %1152 = vmatprep.subr.bf16.mxu0 0
      %1153 = vmatpush1.bf16.msra.mxu0 0
      %1154 = vmatprep.mubr.bf16.mxu0 0
      %1155 = vmatmul.mubr.bf16.gmra.mrb[0].mxu0 %v1111
      %v1156 = vpop.f32.mrb[0].mxu0
      %v1157 = vadd.f32 %v1096, %v1156
      %v1158 = vpop.f32.mrb[0].mxu0
      %v1159 = vpop.f32.mrb[0].mxu0
      %v1160 = vadd.f32 %v1096, %v1159
      %v1161 = vpop.f32.mrb[0].mxu0
      %1162 = vmatprep.mubr.bf16.mxu0 0
      %1163 = vmatmul.mubr.bf16.gmra.mrb[0].mxu0 %v1114
      %v1164 = vpop.f32.mrb[0].mxu0
      %v1165 = vadd.f32 %v1096, %v1164
      %v1166 = vpop.f32.mrb[0].mxu0
      %v1167 = vpop.f32.mrb[0].mxu0
      %v1168 = vadd.f32 %v1096, %v1167
      %v1169 = vpop.f32.mrb[0].mxu0
      %1170 = vmatprep.mubr.bf16.mxu0 0
      %1171 = vmatmul.mubr.bf16.gmra.mrb[0].mxu0 %v1117
      %v1172 = vpop.f32.mrb[0].mxu0
      %v1173 = vadd.f32 %v1096, %v1172
      %v1174 = vpop.f32.mrb[0].mxu0
      %v1175 = vpop.f32.mrb[0].mxu0
      %v1176 = vadd.f32 %v1096, %v1175
      %v1177 = vpop.f32.mrb[0].mxu0
      %1178 = vmatprep.mubr.bf16.mxu0 0
      %1179 = vmatmul.mubr.bf16.gmra.mrb[0].mxu0 %v1120
      %v1180 = vpop.f32.mrb[0].mxu0
      %v1181 = vadd.f32 %v1096, %v1180
      %v1182 = vpop.f32.mrb[0].mxu0
      %v1183 = vpop.f32.mrb[0].mxu0
      %v1184 = vadd.f32 %v1096, %v1183
      %v1185 = vpop.f32.mrb[0].mxu0
      %1186 = vdwg.mxu0
      %v1187 = vadd.f32 %v1157, %v924
      %v1188 = vadd.f32 %v1160, %v927
      %v1189 = vadd.f32 %v1165, %v932
      %v1190 = vadd.f32 %v1168, %v935
      %v1191 = vadd.f32 %v1173, %v940
      %v1192 = vadd.f32 %v1176, %v943
      %v1193 = vadd.f32 %v1181, %v948
      %v1194 = vadd.f32 %v1184, %v951
      %vm1195 = vcmp.gt.f32.partialorder %v1187, 0.0
      %vm1196 = vcmp.gt.f32.partialorder %v1188, 0.0
      %vm1197 = vcmp.gt.f32.partialorder %v1189, 0.0
      %vm1198 = vcmp.gt.f32.partialorder %v1190, 0.0
      %vm1199 = vcmp.gt.f32.partialorder %v1191, 0.0
      %vm1200 = vcmp.gt.f32.partialorder %v1192, 0.0
      %vm1201 = vcmp.gt.f32.partialorder %v1193, 0.0
      %vm1202 = vcmp.gt.f32.partialorder %v1194, 0.0
      %v1203 = vmul.f32 %v1187, 0.1
      %v1204 = vmul.f32 %v1188, 0.1
      %v1205 = vmul.f32 %v1189, 0.1
      %v1206 = vmul.f32 %v1190, 0.1
      %v1207 = vmul.f32 %v1191, 0.1
      %v1208 = vmul.f32 %v1192, 0.1
      %v1209 = vmul.f32 %v1193, 0.1
      %v1210 = vmul.f32 %v1194, 0.1
      %v1211 = vsel %vm1195, %v1187, %v1203
      %v1212 = vsel %vm1196, %v1188, %v1204
      %v1213 = vsel %vm1197, %v1189, %v1205
      %v1214 = vsel %vm1198, %v1190, %v1206
      %v1215 = vsel %vm1199, %v1191, %v1207
      %v1216 = vsel %vm1200, %v1192, %v1208
      %v1217 = vsel %vm1201, %v1193, %v1209
      %v1218 = vsel %vm1202, %v1194, %v1210
      %v1219 = vpack.c.bf16 %v1212, %v1211
      %v1220 = vpack.c.bf16 %v1214, %v1213
      %v1221 = vpack.c.bf16 %v1216, %v1215
      %v1222 = vpack.c.bf16 %v1218, %v1217
      %v1223 = vld [vmem:[%s7] sm:$0xf]
      %v1224 = vld [vmem:[%s7 + $0x4] sm:$0xf]
      %v1225 = vld [vmem:[%s7 + $0x8] sm:$0xf]
      %v1226 = vld [vmem:[%s7 + $0xc] sm:$0xf]
      %v1231 = vunpack.c.l.b16 %v1223
      %v1232 = vunpack.c.l.b16 %v1224
      %v1233 = vunpack.c.l.b16 %v1225
      %v1234 = vunpack.c.l.b16 %v1226
      %v1235 = vpack.c.b16 %v1232, %v1231
      %v1236 = vpack.c.b16 %v1234, %v1233
      %v1240 = vsel %vm981, %v1219, 0
      %v1243 = vsel %vm981, %v1220, 0
      %v1246 = vsel %vm981, %v1221, 0
      %v1249 = vsel %vm981, %v1222, 0
      %1251 = vmatprep.subr.bf16.mxu0 0
      %1252 = vmatpush1.bf16.msra.mxu0 %v1235
      %1253 = vmatprep.subr.bf16.mxu0 0
      %1254 = vmatpush1.bf16.msra.mxu0 %v1236
      %1255 = vmatprep.subr.bf16.mxu0 0
      %1256 = vmatpush1.bf16.msra.mxu0 0
      %1257 = vmatprep.subr.bf16.mxu0 0
      %1258 = vmatpush1.bf16.msra.mxu0 0
      %1259 = vmatprep.subr.bf16.mxu0 0
      %1260 = vmatpush1.bf16.msra.mxu0 0
      %1261 = vmatprep.subr.bf16.mxu0 0
      %1262 = vmatpush1.bf16.msra.mxu0 0
      %1263 = vmatprep.subr.bf16.mxu0 0
      %1264 = vmatpush1.bf16.msra.mxu0 0
      %1265 = vmatprep.subr.bf16.mxu0 0
      %1266 = vmatpush1.bf16.msra.mxu0 0
      %1267 = vmatprep.subr.bf16.mxu0 0
      %1268 = vmatpush1.bf16.msra.mxu0 0
      %1269 = vmatprep.subr.bf16.mxu0 0
      %1270 = vmatpush1.bf16.msra.mxu0 0
      %1271 = vmatprep.subr.bf16.mxu0 0
      %1272 = vmatpush1.bf16.msra.mxu0 0
      %1273 = vmatprep.subr.bf16.mxu0 0
      %1274 = vmatpush1.bf16.msra.mxu0 0
      %1275 = vmatprep.subr.bf16.mxu0 0
      %1276 = vmatpush1.bf16.msra.mxu0 0
      %1277 = vmatprep.subr.bf16.mxu0 0
      %1278 = vmatpush1.bf16.msra.mxu0 0
      %1279 = vmatprep.subr.bf16.mxu0 0
      %1280 = vmatpush1.bf16.msra.mxu0 0
      %1281 = vmatprep.subr.bf16.mxu0 0
      %1282 = vmatpush1.bf16.msra.mxu0 0
      %1283 = vmatprep.mubr.bf16.mxu0 0
      %1284 = vmatmul.mubr.bf16.gmra.mrb[0].mxu0 %v1240
      %v1285 = vpop.f32.mrb[0].mxu0
      %v1286 = vadd.f32 0.0, %v1285
      %v1287 = vpop.f32.mrb[0].mxu0
      %v1288 = vpop.f32.mrb[0].mxu0
      %v1289 = vadd.f32 0.0, %v1288
      %v1290 = vpop.f32.mrb[0].mxu0
      %1291 = vmatprep.mubr.bf16.mxu0 0
      %1292 = vmatmul.mubr.bf16.gmra.mrb[0].mxu0 %v1243
      %v1293 = vpop.f32.mrb[0].mxu0
      %v1294 = vadd.f32 0.0, %v1293
      %v1295 = vpop.f32.mrb[0].mxu0
      %v1296 = vpop.f32.mrb[0].mxu0
      %v1297 = vadd.f32 0.0, %v1296
      %v1298 = vpop.f32.mrb[0].mxu0
      %1299 = vmatprep.mubr.bf16.mxu0 0
      %1300 = vmatmul.mubr.bf16.gmra.mrb[0].mxu0 %v1246
      %v1301 = vpop.f32.mrb[0].mxu0
      %v1302 = vadd.f32 0.0, %v1301
      %v1303 = vpop.f32.mrb[0].mxu0
      %v1304 = vpop.f32.mrb[0].mxu0
      %v1305 = vadd.f32 0.0, %v1304
      %v1306 = vpop.f32.mrb[0].mxu0
      %1307 = vmatprep.mubr.bf16.mxu0 0
      %1308 = vmatmul.mubr.bf16.gmra.mrb[0].mxu0 %v1249
      %v1309 = vpop.f32.mrb[0].mxu0
      %v1310 = vadd.f32 0.0, %v1309
      %v1311 = vpop.f32.mrb[0].mxu0
      %v1312 = vpop.f32.mrb[0].mxu0
      %v1313 = vadd.f32 0.0, %v1312
      %v1314 = vpop.f32.mrb[0].mxu0
      %1315 = vdwg.mxu0
      %v1316 = vmul.f32 %v1286, %v1286
      %v1317 = vmul.f32 %v1289, %v1289
      %v1318 = vmul.f32 %v1294, %v1294
      %v1319 = vmul.f32 %v1297, %v1297
      %v1320 = vmul.f32 %v1302, %v1302
      %v1321 = vmul.f32 %v1305, %v1305
      %v1322 = vmul.f32 %v1310, %v1310
      %v1323 = vmul.f32 %v1313, %v1313
      %v1324 = vsel %vm981, %v1316, 0.0
      %1325 = vadd.xlane.f32.xlu0 %v1324
      %v1326 = vpop.xlane.xlu0 %1325
      %v1327 = vsel %vm981, %v1317, 0.0
      %1328 = vadd.xlane.f32.xlu0 %v1327
      %v1329 = vpop.xlane.xlu0 %1328
      %v1330 = vsel %vm981, %v1318, 0.0
      %1331 = vadd.xlane.f32.xlu0 %v1330
      %v1332 = vpop.xlane.xlu0 %1331
      %v1333 = vsel %vm981, %v1319, 0.0
      %1334 = vadd.xlane.f32.xlu0 %v1333
      %v1335 = vpop.xlane.xlu0 %1334
      %v1336 = vsel %vm981, %v1320, 0.0
      %1337 = vadd.xlane.f32.xlu0 %v1336
      %v1338 = vpop.xlane.xlu0 %1337
      %v1339 = vsel %vm981, %v1321, 0.0
      %1340 = vadd.xlane.f32.xlu0 %v1339
      %v1341 = vpop.xlane.xlu0 %1340
      %v1342 = vsel %vm981, %v1322, 0.0
      %1343 = vadd.xlane.f32.xlu0 %v1342
      %v1344 = vpop.xlane.xlu0 %1343
      %v1345 = vsel %vm981, %v1323, 0.0
      %1346 = vadd.xlane.f32.xlu0 %v1345
      %v1347 = vpop.xlane.xlu0 %1346
      %v1348 = vld [vmem:[%s8] sm:$0x1]
      %v1350 = vlaneseq
      %v1351 = vshrl.u32 %v1350, 7
      %v1352 = vsub.s32 0, %v1351
      %v1353 = vrot.slane %v1348, %v1352
      %v1355 = vadd.f32 %v1326, %v1353
      %v1356 = vadd.f32 %v1329, %v1353
      %v1357 = vadd.f32 %v1332, %v1353
      %v1358 = vadd.f32 %v1335, %v1353
      %v1359 = vadd.f32 %v1338, %v1353
      %v1360 = vadd.f32 %v1341, %v1353
      %v1361 = vadd.f32 %v1344, %v1353
      %v1362 = vadd.f32 %v1347, %v1353
      %v1363 = vmul.f32 %v1286, 2.0
      %v1364 = vmul.f32 %v1289, 2.0
      %v1365 = vmul.f32 %v1294, 2.0
      %v1366 = vmul.f32 %v1297, 2.0
      %v1367 = vmul.f32 %v1302, 2.0
      %v1368 = vmul.f32 %v1305, 2.0
      %v1369 = vmul.f32 %v1310, 2.0
      %v1370 = vmul.f32 %v1313, 2.0
      %1379 = vrot.lane.b32.xlu0 %v1363, 96
      %v1380 = vpop.permute.xlu0 %1379
      %1381 = vrot.lane.b32.xlu0 %v1364, 96
      %v1382 = vpop.permute.xlu0 %1381
      %1383 = vrot.lane.b32.xlu0 %v1365, 96
      %v1384 = vpop.permute.xlu0 %1383
      %1385 = vrot.lane.b32.xlu0 %v1366, 96
      %v1386 = vpop.permute.xlu0 %1385
      %1387 = vrot.lane.b32.xlu0 %v1367, 96
      %v1388 = vpop.permute.xlu0 %1387
      %1389 = vrot.lane.b32.xlu0 %v1368, 96
      %v1390 = vpop.permute.xlu0 %1389
      %1391 = vrot.lane.b32.xlu0 %v1369, 96
      %v1392 = vpop.permute.xlu0 %1391
      %1393 = vrot.lane.b32.xlu0 %v1370, 96
      %v1394 = vpop.permute.xlu0 %1393
      %v1403 = vsub.f32 %v1355, %v1380
      %v1404 = vsub.f32 %v1356, %v1382
      %v1405 = vsub.f32 %v1357, %v1384
      %v1406 = vsub.f32 %v1358, %v1386
      %v1407 = vsub.f32 %v1359, %v1388
      %v1408 = vsub.f32 %v1360, %v1390
      %v1409 = vsub.f32 %v1361, %v1392
      %v1410 = vsub.f32 %v1362, %v1394
      %vm1411 = vcmask 130048
      %v1412 = vsel %vm1411, %v1403, inf
      %1413 = vmin.xlane.f32.xlu0 %v1412
      %v1414 = vpop.xlane.xlu0 %1413
      %v1415 = vsel %vm1411, %v1404, inf
      %1416 = vmin.xlane.f32.xlu0 %v1415
      %v1417 = vpop.xlane.xlu0 %1416
      %v1418 = vsel %vm1411, %v1405, inf
      %1419 = vmin.xlane.f32.xlu0 %v1418
      %v1420 = vpop.xlane.xlu0 %1419
      %v1421 = vsel %vm1411, %v1406, inf
      %1422 = vmin.xlane.f32.xlu0 %v1421
      %v1423 = vpop.xlane.xlu0 %1422
      %v1424 = vsel %vm1411, %v1407, inf
      %1425 = vmin.xlane.f32.xlu0 %v1424
      %v1426 = vpop.xlane.xlu0 %1425
      %v1427 = vsel %vm1411, %v1408, inf
      %1428 = vmin.xlane.f32.xlu0 %v1427
      %v1429 = vpop.xlane.xlu0 %1428
      %v1430 = vsel %vm1411, %v1409, inf
      %1431 = vmin.xlane.f32.xlu0 %v1430
      %v1432 = vpop.xlane.xlu0 %1431
      %v1433 = vsel %vm1411, %v1410, inf
      %1434 = vmin.xlane.f32.xlu0 %v1433
      %v1435 = vpop.xlane.xlu0 %1434
      %v1436 = vlaneseq
      %v1437 = vand.u32 %v1436, 127
      %vm1438 = vcmp.eq.f32.partialorder %v1403, %v1414
      %vm1439 = vcmp.eq.f32.partialorder %v1404, %v1417
      %vm1440 = vcmp.eq.f32.partialorder %v1405, %v1420
      %vm1441 = vcmp.eq.f32.partialorder %v1406, %v1423
      %vm1442 = vcmp.eq.f32.partialorder %v1407, %v1426
      %vm1443 = vcmp.eq.f32.partialorder %v1408, %v1429
      %vm1444 = vcmp.eq.f32.partialorder %v1409, %v1432
      %vm1445 = vcmp.eq.f32.partialorder %v1410, %v1435
      %v1446 = vsel %vm1438, %v1437, 2147483647
      %v1447 = vsel %vm1439, %v1437, 2147483647
      %v1448 = vsel %vm1440, %v1437, 2147483647
      %v1449 = vsel %vm1441, %v1437, 2147483647
      %v1450 = vsel %vm1442, %v1437, 2147483647
      %v1451 = vsel %vm1443, %v1437, 2147483647
      %v1452 = vsel %vm1444, %v1437, 2147483647
      %v1453 = vsel %vm1445, %v1437, 2147483647
      %v1454 = vsel %vm1411, %v1446, 2147483647
      %v1455 = vand.u32 %v1454, 65535
      %v1456 = vshra.s32 %v1454, 16
      %v1457 = vcvt.s32.f32 %v1455
      %v1458 = vcvt.s32.f32 %v1456
      %1459 = vmin.xlane.f32.xlu0 %v1458
      %v1460 = vpop.xlane.xlu0 %1459
      %vm1461 = vcmp.eq.f32.partialorder %v1458, %v1460
      %v1462 = vsel %vm1461, %v1457, inf
      %1463 = vmin.xlane.f32.xlu0 %v1462
      %v1464 = vpop.xlane.xlu0 %1463
      %v1465 = vcvt.f32.s32 %v1464
      %v1466 = vcvt.f32.s32 %v1460
      %v1467 = vshll.u32 %v1466, 16
      %v1468 = vadd.s32 %v1467, %v1465
      %v1469 = vsel %vm1411, %v1447, 2147483647
      %v1470 = vand.u32 %v1469, 65535
      %v1471 = vshra.s32 %v1469, 16
      %v1472 = vcvt.s32.f32 %v1470
      %v1473 = vcvt.s32.f32 %v1471
      %1474 = vmin.xlane.f32.xlu0 %v1473
      %v1475 = vpop.xlane.xlu0 %1474
      %vm1476 = vcmp.eq.f32.partialorder %v1473, %v1475
      %v1477 = vsel %vm1476, %v1472, inf
      %1478 = vmin.xlane.f32.xlu0 %v1477
      %v1479 = vpop.xlane.xlu0 %1478
      %v1480 = vcvt.f32.s32 %v1479
      %v1481 = vcvt.f32.s32 %v1475
      %v1482 = vshll.u32 %v1481, 16
      %v1483 = vadd.s32 %v1482, %v1480
      %v1484 = vsel %vm1411, %v1448, 2147483647
      %v1485 = vand.u32 %v1484, 65535
      %v1486 = vshra.s32 %v1484, 16
      %v1487 = vcvt.s32.f32 %v1485
      %v1488 = vcvt.s32.f32 %v1486
      %1489 = vmin.xlane.f32.xlu0 %v1488
      %v1490 = vpop.xlane.xlu0 %1489
      %vm1491 = vcmp.eq.f32.partialorder %v1488, %v1490
      %v1492 = vsel %vm1491, %v1487, inf
      %1493 = vmin.xlane.f32.xlu0 %v1492
      %v1494 = vpop.xlane.xlu0 %1493
      %v1495 = vcvt.f32.s32 %v1494
      %v1496 = vcvt.f32.s32 %v1490
      %v1497 = vshll.u32 %v1496, 16
      %v1498 = vadd.s32 %v1497, %v1495
      %v1499 = vsel %vm1411, %v1449, 2147483647
      %v1500 = vand.u32 %v1499, 65535
      %v1501 = vshra.s32 %v1499, 16
      %v1502 = vcvt.s32.f32 %v1500
      %v1503 = vcvt.s32.f32 %v1501
      %1504 = vmin.xlane.f32.xlu0 %v1503
      %v1505 = vpop.xlane.xlu0 %1504
      %vm1506 = vcmp.eq.f32.partialorder %v1503, %v1505
      %v1507 = vsel %vm1506, %v1502, inf
      %1508 = vmin.xlane.f32.xlu0 %v1507
      %v1509 = vpop.xlane.xlu0 %1508
      %v1510 = vcvt.f32.s32 %v1509
      %v1511 = vcvt.f32.s32 %v1505
      %v1512 = vshll.u32 %v1511, 16
      %v1513 = vadd.s32 %v1512, %v1510
      %v1514 = vsel %vm1411, %v1450, 2147483647
      %v1515 = vand.u32 %v1514, 65535
      %v1516 = vshra.s32 %v1514, 16
      %v1517 = vcvt.s32.f32 %v1515
      %v1518 = vcvt.s32.f32 %v1516
      %1519 = vmin.xlane.f32.xlu0 %v1518
      %v1520 = vpop.xlane.xlu0 %1519
      %vm1521 = vcmp.eq.f32.partialorder %v1518, %v1520
      %v1522 = vsel %vm1521, %v1517, inf
      %1523 = vmin.xlane.f32.xlu0 %v1522
      %v1524 = vpop.xlane.xlu0 %1523
      %v1525 = vcvt.f32.s32 %v1524
      %v1526 = vcvt.f32.s32 %v1520
      %v1527 = vshll.u32 %v1526, 16
      %v1528 = vadd.s32 %v1527, %v1525
      %v1529 = vsel %vm1411, %v1451, 2147483647
      %v1530 = vand.u32 %v1529, 65535
      %v1531 = vshra.s32 %v1529, 16
      %v1532 = vcvt.s32.f32 %v1530
      %v1533 = vcvt.s32.f32 %v1531
      %1534 = vmin.xlane.f32.xlu0 %v1533
      %v1535 = vpop.xlane.xlu0 %1534
      %vm1536 = vcmp.eq.f32.partialorder %v1533, %v1535
      %v1537 = vsel %vm1536, %v1532, inf
      %1538 = vmin.xlane.f32.xlu0 %v1537
      %v1539 = vpop.xlane.xlu0 %1538
      %v1540 = vcvt.f32.s32 %v1539
      %v1541 = vcvt.f32.s32 %v1535
      %v1542 = vshll.u32 %v1541, 16
      %v1543 = vadd.s32 %v1542, %v1540
      %v1544 = vsel %vm1411, %v1452, 2147483647
      %v1545 = vand.u32 %v1544, 65535
      %v1546 = vshra.s32 %v1544, 16
      %v1547 = vcvt.s32.f32 %v1545
      %v1548 = vcvt.s32.f32 %v1546
      %1549 = vmin.xlane.f32.xlu0 %v1548
      %v1550 = vpop.xlane.xlu0 %1549
      %vm1551 = vcmp.eq.f32.partialorder %v1548, %v1550
      %v1552 = vsel %vm1551, %v1547, inf
      %1553 = vmin.xlane.f32.xlu0 %v1552
      %v1554 = vpop.xlane.xlu0 %1553
      %v1555 = vcvt.f32.s32 %v1554
      %v1556 = vcvt.f32.s32 %v1550
      %v1557 = vshll.u32 %v1556, 16
      %v1558 = vadd.s32 %v1557, %v1555
      %v1559 = vsel %vm1411, %v1453, 2147483647
      %v1560 = vand.u32 %v1559, 65535
      %v1561 = vshra.s32 %v1559, 16
      %v1562 = vcvt.s32.f32 %v1560
      %v1563 = vcvt.s32.f32 %v1561
      %1564 = vmin.xlane.f32.xlu0 %v1563
      %v1565 = vpop.xlane.xlu0 %1564
      %vm1566 = vcmp.eq.f32.partialorder %v1563, %v1565
      %v1567 = vsel %vm1566, %v1562, inf
      %1568 = vmin.xlane.f32.xlu0 %v1567
      %v1569 = vpop.xlane.xlu0 %1568
      %v1570 = vcvt.f32.s32 %v1569
      %v1571 = vcvt.f32.s32 %v1565
      %v1572 = vshll.u32 %v1571, 16
      %v1573 = vadd.s32 %v1572, %v1570
      %vm1574 = vcmp.eq.s32.totalorder %v1437, %v1468
      %vm1575 = vcmp.eq.s32.totalorder %v1437, %v1483
      %vm1576 = vcmp.eq.s32.totalorder %v1437, %v1498
      %vm1577 = vcmp.eq.s32.totalorder %v1437, %v1513
      %vm1578 = vcmp.eq.s32.totalorder %v1437, %v1528
      %vm1579 = vcmp.eq.s32.totalorder %v1437, %v1543
      %vm1580 = vcmp.eq.s32.totalorder %v1437, %v1558
      %vm1581 = vcmp.eq.s32.totalorder %v1437, %v1573
      %v1582 = vsel %vm1574, 1, 0
      %v1583 = vsel %vm1575, 1, 0
      %v1584 = vsel %vm1576, 1, 0
      %v1585 = vsel %vm1577, 1, 0
      %v1586 = vsel %vm1578, 1, 0
      %v1587 = vsel %vm1579, 1, 0
      %v1588 = vsel %vm1580, 1, 0
      %v1589 = vsel %vm1581, 1, 0
      %v1590 = vcvt.s32.f32 %v1582
      %v1591 = vcvt.s32.f32 %v1583
      %v1592 = vcvt.s32.f32 %v1584
      %v1593 = vcvt.s32.f32 %v1585
      %v1594 = vcvt.s32.f32 %v1586
      %v1595 = vcvt.s32.f32 %v1587
      %v1596 = vcvt.s32.f32 %v1588
      %v1597 = vcvt.s32.f32 %v1589
      %v1598 = vpack.c.bf16 %v1591, %v1590
      %v1599 = vpack.c.bf16 %v1593, %v1592
      %v1600 = vpack.c.bf16 %v1595, %v1594
      %v1601 = vpack.c.bf16 %v1597, %v1596
      %v1602 = vld [vmem:[%s9] sm:$0xf]
      %v1603 = vld [vmem:[%s9 + $0x4] sm:$0xf]
      %v1606 = vunpack.c.l.b16 %v1602
      %v1607 = vunpack.c.l.b16 %v1603
      %v1608 = vpack.c.b16 %v1607, %v1606
      %v1611 = vsel %vm1411, %v1598, 0
      %v1614 = vsel %vm1411, %v1599, 0
      %v1617 = vsel %vm1411, %v1600, 0
      %v1620 = vsel %vm1411, %v1601, 0
      %1622 = vmatprep.subr.bf16.mxu0 0
      %1623 = vmatpush1.bf16.msra.mxu0 %v1608
      %1624 = vmatprep.subr.bf16.mxu0 0
      %1625 = vmatpush1.bf16.msra.mxu0 0
      %1626 = vmatprep.subr.bf16.mxu0 0
      %1627 = vmatpush1.bf16.msra.mxu0 0
      %1628 = vmatprep.subr.bf16.mxu0 0
      %1629 = vmatpush1.bf16.msra.mxu0 0
      %1630 = vmatprep.subr.bf16.mxu0 0
      %1631 = vmatpush1.bf16.msra.mxu0 0
      %1632 = vmatprep.subr.bf16.mxu0 0
      %1633 = vmatpush1.bf16.msra.mxu0 0
      %1634 = vmatprep.subr.bf16.mxu0 0
      %1635 = vmatpush1.bf16.msra.mxu0 0
      %1636 = vmatprep.subr.bf16.mxu0 0
      %1637 = vmatpush1.bf16.msra.mxu0 0
      %1638 = vmatprep.subr.bf16.mxu0 0
      %1639 = vmatpush1.bf16.msra.mxu0 0
      %1640 = vmatprep.subr.bf16.mxu0 0
      %1641 = vmatpush1.bf16.msra.mxu0 0
      %1642 = vmatprep.subr.bf16.mxu0 0
      %1643 = vmatpush1.bf16.msra.mxu0 0
      %1644 = vmatprep.subr.bf16.mxu0 0
      %1645 = vmatpush1.bf16.msra.mxu0 0
      %1646 = vmatprep.subr.bf16.mxu0 0
      %1647 = vmatpush1.bf16.msra.mxu0 0
      %1648 = vmatprep.subr.bf16.mxu0 0
      %1649 = vmatpush1.bf16.msra.mxu0 0
      %1650 = vmatprep.subr.bf16.mxu0 0
      %1651 = vmatpush1.bf16.msra.mxu0 0
      %1652 = vmatprep.subr.bf16.mxu0 0
      %1653 = vmatpush1.bf16.msra.mxu0 0
      %1654 = vmatprep.mubr.bf16.mxu0 0
      %1655 = vmatmul.mubr.bf16.gmra.mrb[0].mxu0 %v1611
      %v1656 = vpop.f32.mrb[0].mxu0
      %v1657 = vadd.f32 0.0, %v1656
      %v1658 = vpop.f32.mrb[0].mxu0
      %v1659 = vpop.f32.mrb[0].mxu0
      %v1660 = vadd.f32 0.0, %v1659
      %v1661 = vpop.f32.mrb[0].mxu0
      %1662 = vmatprep.mubr.bf16.mxu0 0
      %1663 = vmatmul.mubr.bf16.gmra.mrb[0].mxu0 %v1614
      %v1664 = vpop.f32.mrb[0].mxu0
      %v1665 = vadd.f32 0.0, %v1664
      %v1666 = vpop.f32.mrb[0].mxu0
      %v1667 = vpop.f32.mrb[0].mxu0
      %v1668 = vadd.f32 0.0, %v1667
      %v1669 = vpop.f32.mrb[0].mxu0
      %1670 = vmatprep.mubr.bf16.mxu0 0
      %1671 = vmatmul.mubr.bf16.gmra.mrb[0].mxu0 %v1617
      %v1672 = vpop.f32.mrb[0].mxu0
      %v1673 = vadd.f32 0.0, %v1672
      %v1674 = vpop.f32.mrb[0].mxu0
      %v1675 = vpop.f32.mrb[0].mxu0
      %v1676 = vadd.f32 0.0, %v1675
      %v1677 = vpop.f32.mrb[0].mxu0
      %1678 = vmatprep.mubr.bf16.mxu0 0
      %1679 = vmatmul.mubr.bf16.gmra.mrb[0].mxu0 %v1620
      %v1680 = vpop.f32.mrb[0].mxu0
      %v1681 = vadd.f32 0.0, %v1680
      %v1682 = vpop.f32.mrb[0].mxu0
      %v1683 = vpop.f32.mrb[0].mxu0
      %v1684 = vadd.f32 0.0, %v1683
      %v1685 = vpop.f32.mrb[0].mxu0
      %1686 = vdwg.mxu0
      %v1687 = vsub.f32 %v1657, %v1286
      %v1688 = vsub.f32 %v1660, %v1289
      %v1689 = vsub.f32 %v1665, %v1294
      %v1690 = vsub.f32 %v1668, %v1297
      %v1691 = vsub.f32 %v1673, %v1302
      %v1692 = vsub.f32 %v1676, %v1305
      %v1693 = vsub.f32 %v1681, %v1310
      %v1694 = vsub.f32 %v1684, %v1313
      %v1695 = vmul.f32 %v1687, %v1687
      %v1696 = vmul.f32 %v1688, %v1688
      %v1697 = vmul.f32 %v1689, %v1689
      %v1698 = vmul.f32 %v1690, %v1690
      %v1699 = vmul.f32 %v1691, %v1691
      %v1700 = vmul.f32 %v1692, %v1692
      %v1701 = vmul.f32 %v1693, %v1693
      %v1702 = vmul.f32 %v1694, %v1694
      %v1703 = vsel %vm981, %v1695, 0.0
      %v1704 = vsel %vm981, %v1696, 0.0
      %v1705 = vadd.f32 %v1703, %v1704
      %v1706 = vsel %vm981, %v1697, 0.0
      %v1707 = vadd.f32 %v1705, %v1706
      %v1708 = vsel %vm981, %v1698, 0.0
      %v1709 = vadd.f32 %v1707, %v1708
      %v1710 = vsel %vm981, %v1699, 0.0
      %v1711 = vadd.f32 %v1709, %v1710
      %v1712 = vsel %vm981, %v1700, 0.0
      %v1713 = vadd.f32 %v1711, %v1712
      %v1714 = vsel %vm981, %v1701, 0.0
      %v1715 = vadd.f32 %v1713, %v1714
      %v1716 = vsel %vm981, %v1702, 0.0
      %v1717 = vadd.f32 %v1715, %v1716
      %1718 = vadd.xlane.f32.xlu0 %v1717
      %v1719 = vpop.xlane.xlu0 %1718
      %v1720 = vrot.slane %v1719, 4
      %v1721 = vadd.f32 %v1719, %v1720
      %v1722 = vrot.slane %v1721, 2
      %v1723 = vadd.f32 %v1721, %v1722
      %v1724 = vrot.slane %v1723, 1
      %v1725 = vadd.f32 %v1723, %v1724
      %s1726 = vtos %v1725
      %v1727 = vpack.c.bf16 %v1660, %v1657
      %v1728 = vpack.c.bf16 %v1668, %v1665
      %v1729 = vpack.c.bf16 %v1676, %v1673
      %v1730 = vpack.c.bf16 %v1684, %v1681
      %v1731 = vld [vmem:[%s11] sm:$0xff]
      %v1732 = vld [vmem:[%s11 + $0x8] sm:$0xff]
      %v1733 = vld [vmem:[%s11 + $0x10] sm:$0xff]
      %v1734 = vld [vmem:[%s11 + $0x18] sm:$0xff]
      %v1739 = vunpack.c.l.b16 %v1731
      %v1740 = vunpack.c.h.b16 %v1731
      %v1741 = vunpack.c.l.b16 %v1732
      %v1742 = vunpack.c.h.b16 %v1732
      %v1743 = vunpack.c.l.b16 %v1733
      %v1744 = vunpack.c.h.b16 %v1733
      %v1745 = vunpack.c.l.b16 %v1734
      %v1746 = vunpack.c.h.b16 %v1734
      %v1747 = vpack.c.b16 %v1741, %v1739
      %v1748 = vpack.c.b16 %v1742, %v1740
      %v1749 = vpack.c.b16 %v1745, %v1743
      %v1750 = vpack.c.b16 %v1746, %v1744
      %v1756 = vsel %vm981, %v1727, 0
      %v1759 = vsel %vm981, %v1728, 0
      %v1762 = vsel %vm981, %v1729, 0
      %v1765 = vsel %vm981, %v1730, 0
      %1767 = vmatprep.subr.bf16.mxu0 %v1748
      %1768 = vmatpush1.bf16.msra.mxu0 %v1747
      %1769 = vmatprep.subr.bf16.mxu0 %v1750
      %1770 = vmatpush1.bf16.msra.mxu0 %v1749
      %1771 = vmatprep.subr.bf16.mxu0 0
      %1772 = vmatpush1.bf16.msra.mxu0 0
      %1773 = vmatprep.subr.bf16.mxu0 0
      %1774 = vmatpush1.bf16.msra.mxu0 0
      %1775 = vmatprep.subr.bf16.mxu0 0
      %1776 = vmatpush1.bf16.msra.mxu0 0
      %1777 = vmatprep.subr.bf16.mxu0 0
      %1778 = vmatpush1.bf16.msra.mxu0 0
      %1779 = vmatprep.subr.bf16.mxu0 0
      %1780 = vmatpush1.bf16.msra.mxu0 0
      %1781 = vmatprep.subr.bf16.mxu0 0
      %1782 = vmatpush1.bf16.msra.mxu0 0
      %1783 = vmatprep.subr.bf16.mxu0 0
      %1784 = vmatpush1.bf16.msra.mxu0 0
      %1785 = vmatprep.subr.bf16.mxu0 0
      %1786 = vmatpush1.bf16.msra.mxu0 0
      %1787 = vmatprep.subr.bf16.mxu0 0
      %1788 = vmatpush1.bf16.msra.mxu0 0
      %1789 = vmatprep.subr.bf16.mxu0 0
      %1790 = vmatpush1.bf16.msra.mxu0 0
      %1791 = vmatprep.subr.bf16.mxu0 0
      %1792 = vmatpush1.bf16.msra.mxu0 0
      %1793 = vmatprep.subr.bf16.mxu0 0
      %1794 = vmatpush1.bf16.msra.mxu0 0
      %1795 = vmatprep.subr.bf16.mxu0 0
      %1796 = vmatpush1.bf16.msra.mxu0 0
      %1797 = vmatprep.subr.bf16.mxu0 0
      %1798 = vmatpush1.bf16.msra.mxu0 0
      %1799 = vmatprep.mubr.bf16.mxu0 0
      %1800 = vmatmul.mubr.bf16.gmra.mrb[0].mxu0 %v1756
      %v1801 = vpop.f32.mrb[0].mxu0
      %v1802 = vadd.f32 0.0, %v1801
      %v1803 = vpop.f32.mrb[0].mxu0
      %v1804 = vadd.f32 0.0, %v1803
      %v1805 = vpop.f32.mrb[0].mxu0
      %v1806 = vadd.f32 0.0, %v1805
      %v1807 = vpop.f32.mrb[0].mxu0
      %v1808 = vadd.f32 0.0, %v1807
      %1809 = vmatprep.mubr.bf16.mxu0 0
      %1810 = vmatmul.mubr.bf16.gmra.mrb[0].mxu0 %v1759
      %v1811 = vpop.f32.mrb[0].mxu0
      %v1812 = vadd.f32 0.0, %v1811
      %v1813 = vpop.f32.mrb[0].mxu0
      %v1814 = vadd.f32 0.0, %v1813
      %v1815 = vpop.f32.mrb[0].mxu0
      %v1816 = vadd.f32 0.0, %v1815
      %v1817 = vpop.f32.mrb[0].mxu0
      %v1818 = vadd.f32 0.0, %v1817
      %1819 = vmatprep.mubr.bf16.mxu0 0
      %1820 = vmatmul.mubr.bf16.gmra.mrb[0].mxu0 %v1762
      %v1821 = vpop.f32.mrb[0].mxu0
      %v1822 = vadd.f32 0.0, %v1821
      %v1823 = vpop.f32.mrb[0].mxu0
      %v1824 = vadd.f32 0.0, %v1823
      %v1825 = vpop.f32.mrb[0].mxu0
      %v1826 = vadd.f32 0.0, %v1825
      %v1827 = vpop.f32.mrb[0].mxu0
      %v1828 = vadd.f32 0.0, %v1827
      %1829 = vmatprep.mubr.bf16.mxu0 0
      %1830 = vmatmul.mubr.bf16.gmra.mrb[0].mxu0 %v1765
      %v1831 = vpop.f32.mrb[0].mxu0
      %v1832 = vadd.f32 0.0, %v1831
      %v1833 = vpop.f32.mrb[0].mxu0
      %v1834 = vadd.f32 0.0, %v1833
      %v1835 = vpop.f32.mrb[0].mxu0
      %v1836 = vadd.f32 0.0, %v1835
      %v1837 = vpop.f32.mrb[0].mxu0
      %v1838 = vadd.f32 0.0, %v1837
      %1839 = vdwg.mxu0
      %v1840 = vpack.c.bf16 %v1188, %v1187
      %v1841 = vpack.c.bf16 %v1190, %v1189
      %v1842 = vpack.c.bf16 %v1192, %v1191
      %v1843 = vpack.c.bf16 %v1194, %v1193
      %v1844 = vld [vmem:[%s10] sm:$0xf]
      %v1845 = vld [vmem:[%s10 + $0x4] sm:$0xf]
      %v1846 = vld [vmem:[%s10 + $0x8] sm:$0xf]
      %v1847 = vld [vmem:[%s10 + $0xc] sm:$0xf]
      %v1852 = vunpack.c.l.b16 %v1844
      %v1853 = vunpack.c.l.b16 %v1845
      %v1854 = vunpack.c.l.b16 %v1846
      %v1855 = vunpack.c.l.b16 %v1847
      %v1856 = vpack.c.b16 %v1853, %v1852
      %v1857 = vpack.c.b16 %v1855, %v1854
      %v1861 = vsel %vm981, %v1840, 0
      %v1864 = vsel %vm981, %v1841, 0
      %v1867 = vsel %vm981, %v1842, 0
      %v1870 = vsel %vm981, %v1843, 0
      %1872 = vmatprep.subr.bf16.mxu0 0
      %1873 = vmatpush1.bf16.msra.mxu0 %v1856
      %1874 = vmatprep.subr.bf16.mxu0 0
      %1875 = vmatpush1.bf16.msra.mxu0 %v1857
      %1876 = vmatprep.subr.bf16.mxu0 0
      %1877 = vmatpush1.bf16.msra.mxu0 0
      %1878 = vmatprep.subr.bf16.mxu0 0
      %1879 = vmatpush1.bf16.msra.mxu0 0
      %1880 = vmatprep.subr.bf16.mxu0 0
      %1881 = vmatpush1.bf16.msra.mxu0 0
      %1882 = vmatprep.subr.bf16.mxu0 0
      %1883 = vmatpush1.bf16.msra.mxu0 0
      %1884 = vmatprep.subr.bf16.mxu0 0
      %1885 = vmatpush1.bf16.msra.mxu0 0
      %1886 = vmatprep.subr.bf16.mxu0 0
      %1887 = vmatpush1.bf16.msra.mxu0 0
      %1888 = vmatprep.subr.bf16.mxu0 0
      %1889 = vmatpush1.bf16.msra.mxu0 0
      %1890 = vmatprep.subr.bf16.mxu0 0
      %1891 = vmatpush1.bf16.msra.mxu0 0
      %1892 = vmatprep.subr.bf16.mxu0 0
      %1893 = vmatpush1.bf16.msra.mxu0 0
      %1894 = vmatprep.subr.bf16.mxu0 0
      %1895 = vmatpush1.bf16.msra.mxu0 0
      %1896 = vmatprep.subr.bf16.mxu0 0
      %1897 = vmatpush1.bf16.msra.mxu0 0
      %1898 = vmatprep.subr.bf16.mxu0 0
      %1899 = vmatpush1.bf16.msra.mxu0 0
      %1900 = vmatprep.subr.bf16.mxu0 0
      %1901 = vmatpush1.bf16.msra.mxu0 0
      %1902 = vmatprep.subr.bf16.mxu0 0
      %1903 = vmatpush1.bf16.msra.mxu0 0
      %1904 = vmatprep.mubr.bf16.mxu0 0
      %1905 = vmatmul.mubr.bf16.gmra.mrb[0].mxu0 %v1861
      %v1906 = vpop.f32.mrb[0].mxu0
      %v1907 = vadd.f32 %v1804, %v1906
      %v1908 = vpop.f32.mrb[0].mxu0
      %v1909 = vpop.f32.mrb[0].mxu0
      %v1910 = vadd.f32 %v1808, %v1909
      %v1911 = vpop.f32.mrb[0].mxu0
      %1912 = vmatprep.mubr.bf16.mxu0 0
      %1913 = vmatmul.mubr.bf16.gmra.mrb[0].mxu0 %v1864
      %v1914 = vpop.f32.mrb[0].mxu0
      %v1915 = vadd.f32 %v1814, %v1914
      %v1916 = vpop.f32.mrb[0].mxu0
      %v1917 = vpop.f32.mrb[0].mxu0
      %v1918 = vadd.f32 %v1818, %v1917
      %v1919 = vpop.f32.mrb[0].mxu0
      %1920 = vmatprep.mubr.bf16.mxu0 0
      %1921 = vmatmul.mubr.bf16.gmra.mrb[0].mxu0 %v1867
      %v1922 = vpop.f32.mrb[0].mxu0
      %v1923 = vadd.f32 %v1824, %v1922
      %v1924 = vpop.f32.mrb[0].mxu0
      %v1925 = vpop.f32.mrb[0].mxu0
      %v1926 = vadd.f32 %v1828, %v1925
      %v1927 = vpop.f32.mrb[0].mxu0
      %1928 = vmatprep.mubr.bf16.mxu0 0
      %1929 = vmatmul.mubr.bf16.gmra.mrb[0].mxu0 %v1870
      %v1930 = vpop.f32.mrb[0].mxu0
      %v1931 = vadd.f32 %v1834, %v1930
      %v1932 = vpop.f32.mrb[0].mxu0
      %v1933 = vpop.f32.mrb[0].mxu0
      %v1934 = vadd.f32 %v1838, %v1933
      %v1935 = vpop.f32.mrb[0].mxu0
      %1936 = vdwg.mxu0
      %v1937 = vld [vmem:[%s12] sm:$0x1]
      %v1939 = vlaneseq
      %v1940 = vshrl.u32 %v1939, 7
      %v1941 = vsub.s32 0, %v1940
      %v1942 = vrot.slane %v1937, %v1941
      %v1944 = vadd.f32 %v1907, %v1942
      %v1945 = vadd.f32 %v1910, %v1942
      %v1946 = vadd.f32 %v1915, %v1942
      %v1947 = vadd.f32 %v1918, %v1942
      %v1948 = vadd.f32 %v1923, %v1942
      %v1949 = vadd.f32 %v1926, %v1942
      %v1950 = vadd.f32 %v1931, %v1942
      %v1951 = vadd.f32 %v1934, %v1942
      %vm1952 = vcmp.gt.f32.partialorder %v1944, 0.0
      %vm1953 = vcmp.gt.f32.partialorder %v1945, 0.0
      %vm1954 = vcmp.gt.f32.partialorder %v1946, 0.0
      %vm1955 = vcmp.gt.f32.partialorder %v1947, 0.0
      %vm1956 = vcmp.gt.f32.partialorder %v1948, 0.0
      %vm1957 = vcmp.gt.f32.partialorder %v1949, 0.0
      %vm1958 = vcmp.gt.f32.partialorder %v1950, 0.0
      %vm1959 = vcmp.gt.f32.partialorder %v1951, 0.0
      %v1960 = vmul.f32 %v1944, 0.1
      %v1961 = vmul.f32 %v1945, 0.1
      %v1962 = vmul.f32 %v1946, 0.1
      %v1963 = vmul.f32 %v1947, 0.1
      %v1964 = vmul.f32 %v1948, 0.1
      %v1965 = vmul.f32 %v1949, 0.1
      %v1966 = vmul.f32 %v1950, 0.1
      %v1967 = vmul.f32 %v1951, 0.1
      %v1968 = vsel %vm1952, %v1944, %v1960
      %v1969 = vsel %vm1953, %v1945, %v1961
      %v1970 = vsel %vm1954, %v1946, %v1962
      %v1971 = vsel %vm1955, %v1947, %v1963
      %v1972 = vsel %vm1956, %v1948, %v1964
      %v1973 = vsel %vm1957, %v1949, %v1965
      %v1974 = vsel %vm1958, %v1950, %v1966
      %v1975 = vsel %vm1959, %v1951, %v1967
      %v1976 = vpack.c.bf16 %v1969, %v1968
      %v1977 = vpack.c.bf16 %v1971, %v1970
      %v1978 = vpack.c.bf16 %v1973, %v1972
      %v1979 = vpack.c.bf16 %v1975, %v1974
      %v1980 = vld [vmem:[%s13] sm:$0xf]
      %v1981 = vld [vmem:[%s13 + $0x4] sm:$0xf]
      %v1982 = vld [vmem:[%s13 + $0x8] sm:$0xf]
      %v1983 = vld [vmem:[%s13 + $0xc] sm:$0xf]
      %v1988 = vunpack.c.l.b16 %v1980
      %v1989 = vunpack.c.l.b16 %v1981
      %v1990 = vunpack.c.l.b16 %v1982
      %v1991 = vunpack.c.l.b16 %v1983
      %v1992 = vpack.c.b16 %v1989, %v1988
      %v1993 = vpack.c.b16 %v1991, %v1990
      %v1997 = vsel %vm981, %v1976, 0
      %v2000 = vsel %vm981, %v1977, 0
      %v2003 = vsel %vm981, %v1978, 0
      %v2006 = vsel %vm981, %v1979, 0
      %2008 = vmatprep.subr.bf16.mxu0 0
      %2009 = vmatpush1.bf16.msra.mxu0 %v1992
      %2010 = vmatprep.subr.bf16.mxu0 0
      %2011 = vmatpush1.bf16.msra.mxu0 %v1993
      %2012 = vmatprep.subr.bf16.mxu0 0
      %2013 = vmatpush1.bf16.msra.mxu0 0
      %2014 = vmatprep.subr.bf16.mxu0 0
      %2015 = vmatpush1.bf16.msra.mxu0 0
      %2016 = vmatprep.subr.bf16.mxu0 0
      %2017 = vmatpush1.bf16.msra.mxu0 0
      %2018 = vmatprep.subr.bf16.mxu0 0
      %2019 = vmatpush1.bf16.msra.mxu0 0
      %2020 = vmatprep.subr.bf16.mxu0 0
      %2021 = vmatpush1.bf16.msra.mxu0 0
      %2022 = vmatprep.subr.bf16.mxu0 0
      %2023 = vmatpush1.bf16.msra.mxu0 0
      %2024 = vmatprep.subr.bf16.mxu0 0
      %2025 = vmatpush1.bf16.msra.mxu0 0
      %2026 = vmatprep.subr.bf16.mxu0 0
      %2027 = vmatpush1.bf16.msra.mxu0 0
      %2028 = vmatprep.subr.bf16.mxu0 0
      %2029 = vmatpush1.bf16.msra.mxu0 0
      %2030 = vmatprep.subr.bf16.mxu0 0
      %2031 = vmatpush1.bf16.msra.mxu0 0
      %2032 = vmatprep.subr.bf16.mxu0 0
      %2033 = vmatpush1.bf16.msra.mxu0 0
      %2034 = vmatprep.subr.bf16.mxu0 0
      %2035 = vmatpush1.bf16.msra.mxu0 0
      %2036 = vmatprep.subr.bf16.mxu0 0
      %2037 = vmatpush1.bf16.msra.mxu0 0
      %2038 = vmatprep.subr.bf16.mxu0 0
      %2039 = vmatpush1.bf16.msra.mxu0 0
      %2040 = vmatprep.mubr.bf16.mxu0 0
      %2041 = vmatmul.mubr.bf16.gmra.mrb[0].mxu0 %v1997
      %v2042 = vpop.f32.mrb[0].mxu0
      %v2043 = vadd.f32 0.0, %v2042
      %v2044 = vpop.f32.mrb[0].mxu0
      %v2045 = vpop.f32.mrb[0].mxu0
      %v2046 = vadd.f32 0.0, %v2045
      %v2047 = vpop.f32.mrb[0].mxu0
      %2048 = vmatprep.mubr.bf16.mxu0 0
      %2049 = vmatmul.mubr.bf16.gmra.mrb[0].mxu0 %v2000
      %v2050 = vpop.f32.mrb[0].mxu0
      %v2051 = vadd.f32 0.0, %v2050
      %v2052 = vpop.f32.mrb[0].mxu0
      %v2053 = vpop.f32.mrb[0].mxu0
      %v2054 = vadd.f32 0.0, %v2053
      %v2055 = vpop.f32.mrb[0].mxu0
      %2056 = vmatprep.mubr.bf16.mxu0 0
      %2057 = vmatmul.mubr.bf16.gmra.mrb[0].mxu0 %v2003
      %v2058 = vpop.f32.mrb[0].mxu0
      %v2059 = vadd.f32 0.0, %v2058
      %v2060 = vpop.f32.mrb[0].mxu0
      %v2061 = vpop.f32.mrb[0].mxu0
      %v2062 = vadd.f32 0.0, %v2061
      %v2063 = vpop.f32.mrb[0].mxu0
      %2064 = vmatprep.mubr.bf16.mxu0 0
      %2065 = vmatmul.mubr.bf16.gmra.mrb[0].mxu0 %v2006
      %v2066 = vpop.f32.mrb[0].mxu0
      %v2067 = vadd.f32 0.0, %v2066
      %v2068 = vpop.f32.mrb[0].mxu0
      %v2069 = vpop.f32.mrb[0].mxu0
      %v2070 = vadd.f32 0.0, %v2069
      %v2071 = vpop.f32.mrb[0].mxu0
      %2072 = vdwg.mxu0
      %v2073 = vmul.f32 %v2043, %v2043
      %v2074 = vmul.f32 %v2046, %v2046
      %v2075 = vmul.f32 %v2051, %v2051
      %v2076 = vmul.f32 %v2054, %v2054
      %v2077 = vmul.f32 %v2059, %v2059
      %v2078 = vmul.f32 %v2062, %v2062
      %v2079 = vmul.f32 %v2067, %v2067
      %v2080 = vmul.f32 %v2070, %v2070
      %v2081 = vsel %vm981, %v2073, 0.0
      %2082 = vadd.xlane.f32.xlu0 %v2081
      %v2083 = vpop.xlane.xlu0 %2082
      %v2084 = vsel %vm981, %v2074, 0.0
      %2085 = vadd.xlane.f32.xlu0 %v2084
      %v2086 = vpop.xlane.xlu0 %2085
      %v2087 = vsel %vm981, %v2075, 0.0
      %2088 = vadd.xlane.f32.xlu0 %v2087
      %v2089 = vpop.xlane.xlu0 %2088
      %v2090 = vsel %vm981, %v2076, 0.0
      %2091 = vadd.xlane.f32.xlu0 %v2090
      %v2092 = vpop.xlane.xlu0 %2091
      %v2093 = vsel %vm981, %v2077, 0.0
      %2094 = vadd.xlane.f32.xlu0 %v2093
      %v2095 = vpop.xlane.xlu0 %2094
      %v2096 = vsel %vm981, %v2078, 0.0
      %2097 = vadd.xlane.f32.xlu0 %v2096
      %v2098 = vpop.xlane.xlu0 %2097
      %v2099 = vsel %vm981, %v2079, 0.0
      %2100 = vadd.xlane.f32.xlu0 %v2099
      %v2101 = vpop.xlane.xlu0 %2100
      %v2102 = vsel %vm981, %v2080, 0.0
      %2103 = vadd.xlane.f32.xlu0 %v2102
      %v2104 = vpop.xlane.xlu0 %2103
      %v2105 = vld [vmem:[%s14] sm:$0x1]
      %v2107 = vlaneseq
      %v2108 = vshrl.u32 %v2107, 7
      %v2109 = vsub.s32 0, %v2108
      %v2110 = vrot.slane %v2105, %v2109
      %v2112 = vadd.f32 %v2083, %v2110
      %v2113 = vadd.f32 %v2086, %v2110
      %v2114 = vadd.f32 %v2089, %v2110
      %v2115 = vadd.f32 %v2092, %v2110
      %v2116 = vadd.f32 %v2095, %v2110
      %v2117 = vadd.f32 %v2098, %v2110
      %v2118 = vadd.f32 %v2101, %v2110
      %v2119 = vadd.f32 %v2104, %v2110
      %v2120 = vmul.f32 %v2043, 2.0
      %v2121 = vmul.f32 %v2046, 2.0
      %v2122 = vmul.f32 %v2051, 2.0
      %v2123 = vmul.f32 %v2054, 2.0
      %v2124 = vmul.f32 %v2059, 2.0
      %v2125 = vmul.f32 %v2062, 2.0
      %v2126 = vmul.f32 %v2067, 2.0
      %v2127 = vmul.f32 %v2070, 2.0
      %2136 = vrot.lane.b32.xlu0 %v2120, 96
      %v2137 = vpop.permute.xlu0 %2136
      %2138 = vrot.lane.b32.xlu0 %v2121, 96
      %v2139 = vpop.permute.xlu0 %2138
      %2140 = vrot.lane.b32.xlu0 %v2122, 96
      %v2141 = vpop.permute.xlu0 %2140
      %2142 = vrot.lane.b32.xlu0 %v2123, 96
      %v2143 = vpop.permute.xlu0 %2142
      %2144 = vrot.lane.b32.xlu0 %v2124, 96
      %v2145 = vpop.permute.xlu0 %2144
      %2146 = vrot.lane.b32.xlu0 %v2125, 96
      %v2147 = vpop.permute.xlu0 %2146
      %2148 = vrot.lane.b32.xlu0 %v2126, 96
      %v2149 = vpop.permute.xlu0 %2148
      %2150 = vrot.lane.b32.xlu0 %v2127, 96
      %v2151 = vpop.permute.xlu0 %2150
      %v2160 = vsub.f32 %v2112, %v2137
      %v2161 = vsub.f32 %v2113, %v2139
      %v2162 = vsub.f32 %v2114, %v2141
      %v2163 = vsub.f32 %v2115, %v2143
      %v2164 = vsub.f32 %v2116, %v2145
      %v2165 = vsub.f32 %v2117, %v2147
      %v2166 = vsub.f32 %v2118, %v2149
      %v2167 = vsub.f32 %v2119, %v2151
      %v2168 = vsel %vm1411, %v2160, inf
      %2169 = vmin.xlane.f32.xlu0 %v2168
      %v2170 = vpop.xlane.xlu0 %2169
      %v2171 = vsel %vm1411, %v2161, inf
      %2172 = vmin.xlane.f32.xlu0 %v2171
      %v2173 = vpop.xlane.xlu0 %2172
      %v2174 = vsel %vm1411, %v2162, inf
      %2175 = vmin.xlane.f32.xlu0 %v2174
      %v2176 = vpop.xlane.xlu0 %2175
      %v2177 = vsel %vm1411, %v2163, inf
      %2178 = vmin.xlane.f32.xlu0 %v2177
      %v2179 = vpop.xlane.xlu0 %2178
      %v2180 = vsel %vm1411, %v2164, inf
      %2181 = vmin.xlane.f32.xlu0 %v2180
      %v2182 = vpop.xlane.xlu0 %2181
      %v2183 = vsel %vm1411, %v2165, inf
      %2184 = vmin.xlane.f32.xlu0 %v2183
      %v2185 = vpop.xlane.xlu0 %2184
      %v2186 = vsel %vm1411, %v2166, inf
      %2187 = vmin.xlane.f32.xlu0 %v2186
      %v2188 = vpop.xlane.xlu0 %2187
      %v2189 = vsel %vm1411, %v2167, inf
      %2190 = vmin.xlane.f32.xlu0 %v2189
      %v2191 = vpop.xlane.xlu0 %2190
      %vm2192 = vcmp.eq.f32.partialorder %v2160, %v2170
      %vm2193 = vcmp.eq.f32.partialorder %v2161, %v2173
      %vm2194 = vcmp.eq.f32.partialorder %v2162, %v2176
      %vm2195 = vcmp.eq.f32.partialorder %v2163, %v2179
      %vm2196 = vcmp.eq.f32.partialorder %v2164, %v2182
      %vm2197 = vcmp.eq.f32.partialorder %v2165, %v2185
      %vm2198 = vcmp.eq.f32.partialorder %v2166, %v2188
      %vm2199 = vcmp.eq.f32.partialorder %v2167, %v2191
      %v2200 = vsel %vm2192, %v1437, 2147483647
      %v2201 = vsel %vm2193, %v1437, 2147483647
      %v2202 = vsel %vm2194, %v1437, 2147483647
      %v2203 = vsel %vm2195, %v1437, 2147483647
      %v2204 = vsel %vm2196, %v1437, 2147483647
      %v2205 = vsel %vm2197, %v1437, 2147483647
      %v2206 = vsel %vm2198, %v1437, 2147483647
      %v2207 = vsel %vm2199, %v1437, 2147483647
      %v2208 = vsel %vm1411, %v2200, 2147483647
      %v2209 = vand.u32 %v2208, 65535
      %v2210 = vshra.s32 %v2208, 16
      %v2211 = vcvt.s32.f32 %v2209
      %v2212 = vcvt.s32.f32 %v2210
      %2213 = vmin.xlane.f32.xlu0 %v2212
      %v2214 = vpop.xlane.xlu0 %2213
      %vm2215 = vcmp.eq.f32.partialorder %v2212, %v2214
      %v2216 = vsel %vm2215, %v2211, inf
      %2217 = vmin.xlane.f32.xlu0 %v2216
      %v2218 = vpop.xlane.xlu0 %2217
      %v2219 = vcvt.f32.s32 %v2218
      %v2220 = vcvt.f32.s32 %v2214
      %v2221 = vshll.u32 %v2220, 16
      %v2222 = vadd.s32 %v2221, %v2219
      %v2223 = vsel %vm1411, %v2201, 2147483647
      %v2224 = vand.u32 %v2223, 65535
      %v2225 = vshra.s32 %v2223, 16
      %v2226 = vcvt.s32.f32 %v2224
      %v2227 = vcvt.s32.f32 %v2225
      %2228 = vmin.xlane.f32.xlu0 %v2227
      %v2229 = vpop.xlane.xlu0 %2228
      %vm2230 = vcmp.eq.f32.partialorder %v2227, %v2229
      %v2231 = vsel %vm2230, %v2226, inf
      %2232 = vmin.xlane.f32.xlu0 %v2231
      %v2233 = vpop.xlane.xlu0 %2232
      %v2234 = vcvt.f32.s32 %v2233
      %v2235 = vcvt.f32.s32 %v2229
      %v2236 = vshll.u32 %v2235, 16
      %v2237 = vadd.s32 %v2236, %v2234
      %v2238 = vsel %vm1411, %v2202, 2147483647
      %v2239 = vand.u32 %v2238, 65535
      %v2240 = vshra.s32 %v2238, 16
      %v2241 = vcvt.s32.f32 %v2239
      %v2242 = vcvt.s32.f32 %v2240
      %2243 = vmin.xlane.f32.xlu0 %v2242
      %v2244 = vpop.xlane.xlu0 %2243
      %vm2245 = vcmp.eq.f32.partialorder %v2242, %v2244
      %v2246 = vsel %vm2245, %v2241, inf
      %2247 = vmin.xlane.f32.xlu0 %v2246
      %v2248 = vpop.xlane.xlu0 %2247
      %v2249 = vcvt.f32.s32 %v2248
      %v2250 = vcvt.f32.s32 %v2244
      %v2251 = vshll.u32 %v2250, 16
      %v2252 = vadd.s32 %v2251, %v2249
      %v2253 = vsel %vm1411, %v2203, 2147483647
      %v2254 = vand.u32 %v2253, 65535
      %v2255 = vshra.s32 %v2253, 16
      %v2256 = vcvt.s32.f32 %v2254
      %v2257 = vcvt.s32.f32 %v2255
      %2258 = vmin.xlane.f32.xlu0 %v2257
      %v2259 = vpop.xlane.xlu0 %2258
      %vm2260 = vcmp.eq.f32.partialorder %v2257, %v2259
      %v2261 = vsel %vm2260, %v2256, inf
      %2262 = vmin.xlane.f32.xlu0 %v2261
      %v2263 = vpop.xlane.xlu0 %2262
      %v2264 = vcvt.f32.s32 %v2263
      %v2265 = vcvt.f32.s32 %v2259
      %v2266 = vshll.u32 %v2265, 16
      %v2267 = vadd.s32 %v2266, %v2264
      %v2268 = vsel %vm1411, %v2204, 2147483647
      %v2269 = vand.u32 %v2268, 65535
      %v2270 = vshra.s32 %v2268, 16
      %v2271 = vcvt.s32.f32 %v2269
      %v2272 = vcvt.s32.f32 %v2270
      %2273 = vmin.xlane.f32.xlu0 %v2272
      %v2274 = vpop.xlane.xlu0 %2273
      %vm2275 = vcmp.eq.f32.partialorder %v2272, %v2274
      %v2276 = vsel %vm2275, %v2271, inf
      %2277 = vmin.xlane.f32.xlu0 %v2276
      %v2278 = vpop.xlane.xlu0 %2277
      %v2279 = vcvt.f32.s32 %v2278
      %v2280 = vcvt.f32.s32 %v2274
      %v2281 = vshll.u32 %v2280, 16
      %v2282 = vadd.s32 %v2281, %v2279
      %v2283 = vsel %vm1411, %v2205, 2147483647
      %v2284 = vand.u32 %v2283, 65535
      %v2285 = vshra.s32 %v2283, 16
      %v2286 = vcvt.s32.f32 %v2284
      %v2287 = vcvt.s32.f32 %v2285
      %2288 = vmin.xlane.f32.xlu0 %v2287
      %v2289 = vpop.xlane.xlu0 %2288
      %vm2290 = vcmp.eq.f32.partialorder %v2287, %v2289
      %v2291 = vsel %vm2290, %v2286, inf
      %2292 = vmin.xlane.f32.xlu0 %v2291
      %v2293 = vpop.xlane.xlu0 %2292
      %v2294 = vcvt.f32.s32 %v2293
      %v2295 = vcvt.f32.s32 %v2289
      %v2296 = vshll.u32 %v2295, 16
      %v2297 = vadd.s32 %v2296, %v2294
      %v2298 = vsel %vm1411, %v2206, 2147483647
      %v2299 = vand.u32 %v2298, 65535
      %v2300 = vshra.s32 %v2298, 16
      %v2301 = vcvt.s32.f32 %v2299
      %v2302 = vcvt.s32.f32 %v2300
      %2303 = vmin.xlane.f32.xlu0 %v2302
      %v2304 = vpop.xlane.xlu0 %2303
      %vm2305 = vcmp.eq.f32.partialorder %v2302, %v2304
      %v2306 = vsel %vm2305, %v2301, inf
      %2307 = vmin.xlane.f32.xlu0 %v2306
      %v2308 = vpop.xlane.xlu0 %2307
      %v2309 = vcvt.f32.s32 %v2308
      %v2310 = vcvt.f32.s32 %v2304
      %v2311 = vshll.u32 %v2310, 16
      %v2312 = vadd.s32 %v2311, %v2309
      %v2313 = vsel %vm1411, %v2207, 2147483647
      %v2314 = vand.u32 %v2313, 65535
      %v2315 = vshra.s32 %v2313, 16
      %v2316 = vcvt.s32.f32 %v2314
      %v2317 = vcvt.s32.f32 %v2315
      %2318 = vmin.xlane.f32.xlu0 %v2317
      %v2319 = vpop.xlane.xlu0 %2318
      %vm2320 = vcmp.eq.f32.partialorder %v2317, %v2319
      %v2321 = vsel %vm2320, %v2316, inf
      %2322 = vmin.xlane.f32.xlu0 %v2321
      %v2323 = vpop.xlane.xlu0 %2322
      %v2324 = vcvt.f32.s32 %v2323
      %v2325 = vcvt.f32.s32 %v2319
      %v2326 = vshll.u32 %v2325, 16
      %v2327 = vadd.s32 %v2326, %v2324
      %vm2328 = vcmp.eq.s32.totalorder %v1437, %v2222
      %vm2329 = vcmp.eq.s32.totalorder %v1437, %v2237
      %vm2330 = vcmp.eq.s32.totalorder %v1437, %v2252
      %vm2331 = vcmp.eq.s32.totalorder %v1437, %v2267
      %vm2332 = vcmp.eq.s32.totalorder %v1437, %v2282
      %vm2333 = vcmp.eq.s32.totalorder %v1437, %v2297
      %vm2334 = vcmp.eq.s32.totalorder %v1437, %v2312
      %vm2335 = vcmp.eq.s32.totalorder %v1437, %v2327
      %v2336 = vsel %vm2328, 1, 0
      %v2337 = vsel %vm2329, 1, 0
      %v2338 = vsel %vm2330, 1, 0
      %v2339 = vsel %vm2331, 1, 0
      %v2340 = vsel %vm2332, 1, 0
      %v2341 = vsel %vm2333, 1, 0
      %v2342 = vsel %vm2334, 1, 0
      %v2343 = vsel %vm2335, 1, 0
      %v2344 = vcvt.s32.f32 %v2336
      %v2345 = vcvt.s32.f32 %v2337
      %v2346 = vcvt.s32.f32 %v2338
      %v2347 = vcvt.s32.f32 %v2339
      %v2348 = vcvt.s32.f32 %v2340
      %v2349 = vcvt.s32.f32 %v2341
      %v2350 = vcvt.s32.f32 %v2342
      %v2351 = vcvt.s32.f32 %v2343
      %v2352 = vpack.c.bf16 %v2345, %v2344
      %v2353 = vpack.c.bf16 %v2347, %v2346
      %v2354 = vpack.c.bf16 %v2349, %v2348
      %v2355 = vpack.c.bf16 %v2351, %v2350
      %v2356 = vld [vmem:[%s15] sm:$0xf]
      %v2357 = vld [vmem:[%s15 + $0x4] sm:$0xf]
      %v2360 = vunpack.c.l.b16 %v2356
      %v2361 = vunpack.c.l.b16 %v2357
      %v2362 = vpack.c.b16 %v2361, %v2360
      %v2365 = vsel %vm1411, %v2352, 0
      %v2368 = vsel %vm1411, %v2353, 0
      %v2371 = vsel %vm1411, %v2354, 0
      %v2374 = vsel %vm1411, %v2355, 0
      %2376 = vmatprep.subr.bf16.mxu0 0
      %2377 = vmatpush1.bf16.msra.mxu0 %v2362
      %2378 = vmatprep.subr.bf16.mxu0 0
      %2379 = vmatpush1.bf16.msra.mxu0 0
      %2380 = vmatprep.subr.bf16.mxu0 0
      %2381 = vmatpush1.bf16.msra.mxu0 0
      %2382 = vmatprep.subr.bf16.mxu0 0
      %2383 = vmatpush1.bf16.msra.mxu0 0
      %2384 = vmatprep.subr.bf16.mxu0 0
      %2385 = vmatpush1.bf16.msra.mxu0 0
      %2386 = vmatprep.subr.bf16.mxu0 0
      %2387 = vmatpush1.bf16.msra.mxu0 0
      %2388 = vmatprep.subr.bf16.mxu0 0
      %2389 = vmatpush1.bf16.msra.mxu0 0
      %2390 = vmatprep.subr.bf16.mxu0 0
      %2391 = vmatpush1.bf16.msra.mxu0 0
      %2392 = vmatprep.subr.bf16.mxu0 0
      %2393 = vmatpush1.bf16.msra.mxu0 0
      %2394 = vmatprep.subr.bf16.mxu0 0
      %2395 = vmatpush1.bf16.msra.mxu0 0
      %2396 = vmatprep.subr.bf16.mxu0 0
      %2397 = vmatpush1.bf16.msra.mxu0 0
      %2398 = vmatprep.subr.bf16.mxu0 0
      %2399 = vmatpush1.bf16.msra.mxu0 0
      %2400 = vmatprep.subr.bf16.mxu0 0
      %2401 = vmatpush1.bf16.msra.mxu0 0
      %2402 = vmatprep.subr.bf16.mxu0 0
      %2403 = vmatpush1.bf16.msra.mxu0 0
      %2404 = vmatprep.subr.bf16.mxu0 0
      %2405 = vmatpush1.bf16.msra.mxu0 0
      %2406 = vmatprep.subr.bf16.mxu0 0
      %2407 = vmatpush1.bf16.msra.mxu0 0
      %2408 = vmatprep.mubr.bf16.mxu0 0
      %2409 = vmatmul.mubr.bf16.gmra.mrb[0].mxu0 %v2365
      %v2410 = vpop.f32.mrb[0].mxu0
      %v2411 = vadd.f32 0.0, %v2410
      %v2412 = vpop.f32.mrb[0].mxu0
      %v2413 = vpop.f32.mrb[0].mxu0
      %v2414 = vadd.f32 0.0, %v2413
      %v2415 = vpop.f32.mrb[0].mxu0
      %2416 = vmatprep.mubr.bf16.mxu0 0
      %2417 = vmatmul.mubr.bf16.gmra.mrb[0].mxu0 %v2368
      %v2418 = vpop.f32.mrb[0].mxu0
      %v2419 = vadd.f32 0.0, %v2418
      %v2420 = vpop.f32.mrb[0].mxu0
      %v2421 = vpop.f32.mrb[0].mxu0
      %v2422 = vadd.f32 0.0, %v2421
      %v2423 = vpop.f32.mrb[0].mxu0
      %2424 = vmatprep.mubr.bf16.mxu0 0
      %2425 = vmatmul.mubr.bf16.gmra.mrb[0].mxu0 %v2371
      %v2426 = vpop.f32.mrb[0].mxu0
      %v2427 = vadd.f32 0.0, %v2426
      %v2428 = vpop.f32.mrb[0].mxu0
      %v2429 = vpop.f32.mrb[0].mxu0
      %v2430 = vadd.f32 0.0, %v2429
      %v2431 = vpop.f32.mrb[0].mxu0
      %2432 = vmatprep.mubr.bf16.mxu0 0
      %2433 = vmatmul.mubr.bf16.gmra.mrb[0].mxu0 %v2374
      %v2434 = vpop.f32.mrb[0].mxu0
      %v2435 = vadd.f32 0.0, %v2434
      %v2436 = vpop.f32.mrb[0].mxu0
      %v2437 = vpop.f32.mrb[0].mxu0
      %v2438 = vadd.f32 0.0, %v2437
      %v2439 = vpop.f32.mrb[0].mxu0
      %2440 = vdwg.mxu0
      %v2441 = vsub.f32 %v2411, %v2043
      %v2442 = vsub.f32 %v2414, %v2046
      %v2443 = vsub.f32 %v2419, %v2051
      %v2444 = vsub.f32 %v2422, %v2054
      %v2445 = vsub.f32 %v2427, %v2059
      %v2446 = vsub.f32 %v2430, %v2062
      %v2447 = vsub.f32 %v2435, %v2067
      %v2448 = vsub.f32 %v2438, %v2070
      %v2449 = vmul.f32 %v2441, %v2441
      %v2450 = vmul.f32 %v2442, %v2442
      %v2451 = vmul.f32 %v2443, %v2443
      %v2452 = vmul.f32 %v2444, %v2444
      %v2453 = vmul.f32 %v2445, %v2445
      %v2454 = vmul.f32 %v2446, %v2446
      %v2455 = vmul.f32 %v2447, %v2447
      %v2456 = vmul.f32 %v2448, %v2448
      %v2457 = vsel %vm981, %v2449, 0.0
      %v2458 = vsel %vm981, %v2450, 0.0
      %v2459 = vadd.f32 %v2457, %v2458
      %v2460 = vsel %vm981, %v2451, 0.0
      %v2461 = vadd.f32 %v2459, %v2460
      %v2462 = vsel %vm981, %v2452, 0.0
      %v2463 = vadd.f32 %v2461, %v2462
      %v2464 = vsel %vm981, %v2453, 0.0
      %v2465 = vadd.f32 %v2463, %v2464
      %v2466 = vsel %vm981, %v2454, 0.0
      %v2467 = vadd.f32 %v2465, %v2466
      %v2468 = vsel %vm981, %v2455, 0.0
      %v2469 = vadd.f32 %v2467, %v2468
      %v2470 = vsel %vm981, %v2456, 0.0
      %v2471 = vadd.f32 %v2469, %v2470
      %2472 = vadd.xlane.f32.xlu0 %v2471
      %v2473 = vpop.xlane.xlu0 %2472
      %v2474 = vrot.slane %v2473, 4
      %v2475 = vadd.f32 %v2473, %v2474
      %v2476 = vrot.slane %v2475, 2
      %v2477 = vadd.f32 %v2475, %v2476
      %v2478 = vrot.slane %v2477, 1
      %v2479 = vadd.f32 %v2477, %v2478
      %s2480 = vtos %v2479
      %v2481 = vpack.c.bf16 %v2414, %v2411
      %v2482 = vpack.c.bf16 %v2422, %v2419
      %v2483 = vpack.c.bf16 %v2430, %v2427
      %v2484 = vpack.c.bf16 %v2438, %v2435
      %v2485 = vld [vmem:[%s16] sm:$0xf]
      %v2486 = vld [vmem:[%s16 + $0x4] sm:$0xf]
      %v2487 = vld [vmem:[%s16 + $0x8] sm:$0xf]
      %v2488 = vld [vmem:[%s16 + $0xc] sm:$0xf]
      %v2493 = vunpack.c.l.b16 %v2485
      %v2494 = vunpack.c.l.b16 %v2486
      %v2495 = vunpack.c.l.b16 %v2487
      %v2496 = vunpack.c.l.b16 %v2488
      %v2497 = vpack.c.b16 %v2494, %v2493
      %v2498 = vpack.c.b16 %v2496, %v2495
      %v2502 = vsel %vm981, %v2481, 0
      %v2505 = vsel %vm981, %v2482, 0
      %v2508 = vsel %vm981, %v2483, 0
      %v2511 = vsel %vm981, %v2484, 0
      %2513 = vmatprep.subr.bf16.mxu0 0
      %2514 = vmatpush1.bf16.msra.mxu0 %v2497
      %2515 = vmatprep.subr.bf16.mxu0 0
      %2516 = vmatpush1.bf16.msra.mxu0 %v2498
      %2517 = vmatprep.subr.bf16.mxu0 0
      %2518 = vmatpush1.bf16.msra.mxu0 0
      %2519 = vmatprep.subr.bf16.mxu0 0
      %2520 = vmatpush1.bf16.msra.mxu0 0
      %2521 = vmatprep.subr.bf16.mxu0 0
      %2522 = vmatpush1.bf16.msra.mxu0 0
      %2523 = vmatprep.subr.bf16.mxu0 0
      %2524 = vmatpush1.bf16.msra.mxu0 0
      %2525 = vmatprep.subr.bf16.mxu0 0
      %2526 = vmatpush1.bf16.msra.mxu0 0
      %2527 = vmatprep.subr.bf16.mxu0 0
      %2528 = vmatpush1.bf16.msra.mxu0 0
      %2529 = vmatprep.subr.bf16.mxu0 0
      %2530 = vmatpush1.bf16.msra.mxu0 0
      %2531 = vmatprep.subr.bf16.mxu0 0
      %2532 = vmatpush1.bf16.msra.mxu0 0
      %2533 = vmatprep.subr.bf16.mxu0 0
      %2534 = vmatpush1.bf16.msra.mxu0 0
      %2535 = vmatprep.subr.bf16.mxu0 0
      %2536 = vmatpush1.bf16.msra.mxu0 0
      %2537 = vmatprep.subr.bf16.mxu0 0
      %2538 = vmatpush1.bf16.msra.mxu0 0
      %2539 = vmatprep.subr.bf16.mxu0 0
      %2540 = vmatpush1.bf16.msra.mxu0 0
      %2541 = vmatprep.subr.bf16.mxu0 0
      %2542 = vmatpush1.bf16.msra.mxu0 0
      %2543 = vmatprep.subr.bf16.mxu0 0
      %2544 = vmatpush1.bf16.msra.mxu0 0
      %2545 = vmatprep.mubr.bf16.mxu0 0
      %2546 = vmatmul.mubr.bf16.gmra.mrb[0].mxu0 %v2502
      %v2547 = vpop.f32.mrb[0].mxu0
      %v2548 = vadd.f32 0.0, %v2547
      %v2549 = vpop.f32.mrb[0].mxu0
      %v2550 = vpop.f32.mrb[0].mxu0
      %v2551 = vadd.f32 0.0, %v2550
      %v2552 = vpop.f32.mrb[0].mxu0
      %2553 = vmatprep.mubr.bf16.mxu0 0
      %2554 = vmatmul.mubr.bf16.gmra.mrb[0].mxu0 %v2505
      %v2555 = vpop.f32.mrb[0].mxu0
      %v2556 = vadd.f32 0.0, %v2555
      %v2557 = vpop.f32.mrb[0].mxu0
      %v2558 = vpop.f32.mrb[0].mxu0
      %v2559 = vadd.f32 0.0, %v2558
      %v2560 = vpop.f32.mrb[0].mxu0
      %2561 = vmatprep.mubr.bf16.mxu0 0
      %2562 = vmatmul.mubr.bf16.gmra.mrb[0].mxu0 %v2508
      %v2563 = vpop.f32.mrb[0].mxu0
      %v2564 = vadd.f32 0.0, %v2563
      %v2565 = vpop.f32.mrb[0].mxu0
      %v2566 = vpop.f32.mrb[0].mxu0
      %v2567 = vadd.f32 0.0, %v2566
      %v2568 = vpop.f32.mrb[0].mxu0
      %2569 = vmatprep.mubr.bf16.mxu0 0
      %2570 = vmatmul.mubr.bf16.gmra.mrb[0].mxu0 %v2511
      %v2571 = vpop.f32.mrb[0].mxu0
      %v2572 = vadd.f32 0.0, %v2571
      %v2573 = vpop.f32.mrb[0].mxu0
      %v2574 = vpop.f32.mrb[0].mxu0
      %v2575 = vadd.f32 0.0, %v2574
      %v2576 = vpop.f32.mrb[0].mxu0
      %2577 = vdwg.mxu0
      %v2578 = vadd.f32 %v1802, %v2548
      %v2579 = vadd.f32 %v1806, %v2551
      %v2580 = vadd.f32 %v1812, %v2556
      %v2581 = vadd.f32 %v1816, %v2559
      %v2582 = vadd.f32 %v1822, %v2564
      %v2583 = vadd.f32 %v1826, %v2567
      %v2584 = vadd.f32 %v1832, %v2572
      %v2585 = vadd.f32 %v1836, %v2575
      %v2586 = vld [vmem:[%s17] sm:$0x1]
      %v2588 = vlaneseq
      %v2589 = vshrl.u32 %v2588, 7
      %v2590 = vsub.s32 0, %v2589
      %v2591 = vrot.slane %v2586, %v2590
      %v2593 = vadd.f32 %v2578, %v2591
      %v2594 = vadd.f32 %v2579, %v2591
      %v2595 = vadd.f32 %v2580, %v2591
      %v2596 = vadd.f32 %v2581, %v2591
      %v2597 = vadd.f32 %v2582, %v2591
      %v2598 = vadd.f32 %v2583, %v2591
      %v2599 = vadd.f32 %v2584, %v2591
      %v2600 = vadd.f32 %v2585, %v2591
      %v2601 = vpack.c.bf16 %v2594, %v2593
      %v2602 = vpack.c.bf16 %v2596, %v2595
      %v2603 = vpack.c.bf16 %v2598, %v2597
      %v2604 = vpack.c.bf16 %v2600, %v2599
      %v2605 = vld [vmem:[%s18] sm:$0xf]
      %v2606 = vld [vmem:[%s18 + $0x4] sm:$0xf]
      %v2607 = vld [vmem:[%s18 + $0x8] sm:$0xf]
      %v2608 = vld [vmem:[%s18 + $0xc] sm:$0xf]
      %v2609 = vld [vmem:[%s19] sm:$0x1]
      %v2611 = vlaneseq
      %v2612 = vshrl.u32 %v2611, 7
      %v2613 = vsub.s32 0, %v2612
      %v2614 = vrot.slane %v2609, %v2613
      %v2620 = vunpack.c.l.b16 %v2605
      %v2621 = vunpack.c.l.b16 %v2606
      %v2622 = vunpack.c.l.b16 %v2607
      %v2623 = vunpack.c.l.b16 %v2608
      %v2624 = vpack.c.b16 %v2621, %v2620
      %v2625 = vpack.c.b16 %v2623, %v2622
      %v2629 = vsel %vm981, %v2601, 0
      %v2632 = vsel %vm981, %v2602, 0
      %v2635 = vsel %vm981, %v2603, 0
      %v2638 = vsel %vm981, %v2604, 0
      %2640 = vmatprep.subr.bf16.mxu0 0
      %2641 = vmatpush1.bf16.msra.mxu0 %v2624
      %2642 = vmatprep.subr.bf16.mxu0 0
      %2643 = vmatpush1.bf16.msra.mxu0 %v2625
      %2644 = vmatprep.subr.bf16.mxu0 0
      %2645 = vmatpush1.bf16.msra.mxu0 0
      %2646 = vmatprep.subr.bf16.mxu0 0
      %2647 = vmatpush1.bf16.msra.mxu0 0
      %2648 = vmatprep.subr.bf16.mxu0 0
      %2649 = vmatpush1.bf16.msra.mxu0 0
      %2650 = vmatprep.subr.bf16.mxu0 0
      %2651 = vmatpush1.bf16.msra.mxu0 0
      %2652 = vmatprep.subr.bf16.mxu0 0
      %2653 = vmatpush1.bf16.msra.mxu0 0
      %2654 = vmatprep.subr.bf16.mxu0 0
      %2655 = vmatpush1.bf16.msra.mxu0 0
      %2656 = vmatprep.subr.bf16.mxu0 0
      %2657 = vmatpush1.bf16.msra.mxu0 0
      %2658 = vmatprep.subr.bf16.mxu0 0
      %2659 = vmatpush1.bf16.msra.mxu0 0
      %2660 = vmatprep.subr.bf16.mxu0 0
      %2661 = vmatpush1.bf16.msra.mxu0 0
      %2662 = vmatprep.subr.bf16.mxu0 0
      %2663 = vmatpush1.bf16.msra.mxu0 0
      %2664 = vmatprep.subr.bf16.mxu0 0
      %2665 = vmatpush1.bf16.msra.mxu0 0
      %2666 = vmatprep.subr.bf16.mxu0 0
      %2667 = vmatpush1.bf16.msra.mxu0 0
      %2668 = vmatprep.subr.bf16.mxu0 0
      %2669 = vmatpush1.bf16.msra.mxu0 0
      %2670 = vmatprep.subr.bf16.mxu0 0
      %2671 = vmatpush1.bf16.msra.mxu0 0
      %2672 = vmatprep.mubr.bf16.mxu0 0
      %2673 = vmatmul.mubr.bf16.gmra.mrb[0].mxu0 %v2629
      %v2674 = vpop.f32.mrb[0].mxu0
      %v2675 = vadd.f32 %v2614, %v2674
      %v2676 = vpop.f32.mrb[0].mxu0
      %v2677 = vpop.f32.mrb[0].mxu0
      %v2678 = vadd.f32 %v2614, %v2677
      %v2679 = vpop.f32.mrb[0].mxu0
      %2680 = vmatprep.mubr.bf16.mxu0 0
      %2681 = vmatmul.mubr.bf16.gmra.mrb[0].mxu0 %v2632
      %v2682 = vpop.f32.mrb[0].mxu0
      %v2683 = vadd.f32 %v2614, %v2682
      %v2684 = vpop.f32.mrb[0].mxu0
      %v2685 = vpop.f32.mrb[0].mxu0
      %v2686 = vadd.f32 %v2614, %v2685
      %v2687 = vpop.f32.mrb[0].mxu0
      %2688 = vmatprep.mubr.bf16.mxu0 0
      %2689 = vmatmul.mubr.bf16.gmra.mrb[0].mxu0 %v2635
      %v2690 = vpop.f32.mrb[0].mxu0
      %v2691 = vadd.f32 %v2614, %v2690
      %v2692 = vpop.f32.mrb[0].mxu0
      %v2693 = vpop.f32.mrb[0].mxu0
      %v2694 = vadd.f32 %v2614, %v2693
      %v2695 = vpop.f32.mrb[0].mxu0
      %2696 = vmatprep.mubr.bf16.mxu0 0
      %2697 = vmatmul.mubr.bf16.gmra.mrb[0].mxu0 %v2638
      %v2698 = vpop.f32.mrb[0].mxu0
      %v2699 = vadd.f32 %v2614, %v2698
      %v2700 = vpop.f32.mrb[0].mxu0
      %v2701 = vpop.f32.mrb[0].mxu0
      %v2702 = vadd.f32 %v2614, %v2701
      %v2703 = vpop.f32.mrb[0].mxu0
      %2704 = vdwg.mxu0
      %vm2705 = vcmp.gt.f32.partialorder %v2675, 0.0
      %vm2706 = vcmp.gt.f32.partialorder %v2678, 0.0
      %vm2707 = vcmp.gt.f32.partialorder %v2683, 0.0
      %vm2708 = vcmp.gt.f32.partialorder %v2686, 0.0
      %vm2709 = vcmp.gt.f32.partialorder %v2691, 0.0
      %vm2710 = vcmp.gt.f32.partialorder %v2694, 0.0
      %vm2711 = vcmp.gt.f32.partialorder %v2699, 0.0
      %vm2712 = vcmp.gt.f32.partialorder %v2702, 0.0
      %v2713 = vmul.f32 %v2675, 0.1
      %v2714 = vmul.f32 %v2678, 0.1
      %v2715 = vmul.f32 %v2683, 0.1
      %v2716 = vmul.f32 %v2686, 0.1
      %v2717 = vmul.f32 %v2691, 0.1
      %v2718 = vmul.f32 %v2694, 0.1
      %v2719 = vmul.f32 %v2699, 0.1
      %v2720 = vmul.f32 %v2702, 0.1
      %v2721 = vsel %vm2705, %v2675, %v2713
      %v2722 = vsel %vm2706, %v2678, %v2714
      %v2723 = vsel %vm2707, %v2683, %v2715
      %v2724 = vsel %vm2708, %v2686, %v2716
      %v2725 = vsel %vm2709, %v2691, %v2717
      %v2726 = vsel %vm2710, %v2694, %v2718
      %v2727 = vsel %vm2711, %v2699, %v2719
      %v2728 = vsel %vm2712, %v2702, %v2720
      %v2729 = vpack.c.bf16 %v2722, %v2721
      %v2730 = vpack.c.bf16 %v2724, %v2723
      %v2731 = vpack.c.bf16 %v2726, %v2725
      %v2732 = vpack.c.bf16 %v2728, %v2727
      %v2733 = vld [vmem:[%s20] sm:$0xf]
      %v2734 = vld [vmem:[%s20 + $0x4] sm:$0xf]
      %v2735 = vld [vmem:[%s20 + $0x8] sm:$0xf]
      %v2736 = vld [vmem:[%s20 + $0xc] sm:$0xf]
      %v2737 = vld [vmem:[%s21] sm:$0x1]
      %v2739 = vlaneseq
      %v2740 = vshrl.u32 %v2739, 7
      %v2741 = vsub.s32 0, %v2740
      %v2742 = vrot.slane %v2737, %v2741
      %v2748 = vunpack.c.l.b16 %v2733
      %v2749 = vunpack.c.l.b16 %v2734
      %v2750 = vunpack.c.l.b16 %v2735
      %v2751 = vunpack.c.l.b16 %v2736
      %v2752 = vpack.c.b16 %v2749, %v2748
      %v2753 = vpack.c.b16 %v2751, %v2750
      %v2757 = vsel %vm981, %v2729, 0
      %v2760 = vsel %vm981, %v2730, 0
      %v2763 = vsel %vm981, %v2731, 0
      %v2766 = vsel %vm981, %v2732, 0
      %2768 = vmatprep.subr.bf16.mxu0 0
      %2769 = vmatpush1.bf16.msra.mxu0 %v2752
      %2770 = vmatprep.subr.bf16.mxu0 0
      %2771 = vmatpush1.bf16.msra.mxu0 %v2753
      %2772 = vmatprep.subr.bf16.mxu0 0
      %2773 = vmatpush1.bf16.msra.mxu0 0
      %2774 = vmatprep.subr.bf16.mxu0 0
      %2775 = vmatpush1.bf16.msra.mxu0 0
      %2776 = vmatprep.subr.bf16.mxu0 0
      %2777 = vmatpush1.bf16.msra.mxu0 0
      %2778 = vmatprep.subr.bf16.mxu0 0
      %2779 = vmatpush1.bf16.msra.mxu0 0
      %2780 = vmatprep.subr.bf16.mxu0 0
      %2781 = vmatpush1.bf16.msra.mxu0 0
      %2782 = vmatprep.subr.bf16.mxu0 0
      %2783 = vmatpush1.bf16.msra.mxu0 0
      %2784 = vmatprep.subr.bf16.mxu0 0
      %2785 = vmatpush1.bf16.msra.mxu0 0
      %2786 = vmatprep.subr.bf16.mxu0 0
      %2787 = vmatpush1.bf16.msra.mxu0 0
      %2788 = vmatprep.subr.bf16.mxu0 0
      %2789 = vmatpush1.bf16.msra.mxu0 0
      %2790 = vmatprep.subr.bf16.mxu0 0
      %2791 = vmatpush1.bf16.msra.mxu0 0
      %2792 = vmatprep.subr.bf16.mxu0 0
      %2793 = vmatpush1.bf16.msra.mxu0 0
      %2794 = vmatprep.subr.bf16.mxu0 0
      %2795 = vmatpush1.bf16.msra.mxu0 0
      %2796 = vmatprep.subr.bf16.mxu0 0
      %2797 = vmatpush1.bf16.msra.mxu0 0
      %2798 = vmatprep.subr.bf16.mxu0 0
      %2799 = vmatpush1.bf16.msra.mxu0 0
      %2800 = vmatprep.mubr.bf16.mxu0 0
      %2801 = vmatmul.mubr.bf16.gmra.mrb[0].mxu0 %v2757
      %v2802 = vpop.f32.mrb[0].mxu0
      %v2803 = vadd.f32 %v2742, %v2802
      %v2804 = vpop.f32.mrb[0].mxu0
      %v2805 = vpop.f32.mrb[0].mxu0
      %v2806 = vadd.f32 %v2742, %v2805
      %v2807 = vpop.f32.mrb[0].mxu0
      %2808 = vmatprep.mubr.bf16.mxu0 0
      %2809 = vmatmul.mubr.bf16.gmra.mrb[0].mxu0 %v2760
      %v2810 = vpop.f32.mrb[0].mxu0
      %v2811 = vadd.f32 %v2742, %v2810
      %v2812 = vpop.f32.mrb[0].mxu0
      %v2813 = vpop.f32.mrb[0].mxu0
      %v2814 = vadd.f32 %v2742, %v2813
      %v2815 = vpop.f32.mrb[0].mxu0
      %2816 = vmatprep.mubr.bf16.mxu0 0
      %2817 = vmatmul.mubr.bf16.gmra.mrb[0].mxu0 %v2763
      %v2818 = vpop.f32.mrb[0].mxu0
      %v2819 = vadd.f32 %v2742, %v2818
      %v2820 = vpop.f32.mrb[0].mxu0
      %v2821 = vpop.f32.mrb[0].mxu0
      %v2822 = vadd.f32 %v2742, %v2821
      %v2823 = vpop.f32.mrb[0].mxu0
      %2824 = vmatprep.mubr.bf16.mxu0 0
      %2825 = vmatmul.mubr.bf16.gmra.mrb[0].mxu0 %v2766
      %v2826 = vpop.f32.mrb[0].mxu0
      %v2827 = vadd.f32 %v2742, %v2826
      %v2828 = vpop.f32.mrb[0].mxu0
      %v2829 = vpop.f32.mrb[0].mxu0
      %v2830 = vadd.f32 %v2742, %v2829
      %v2831 = vpop.f32.mrb[0].mxu0
      %2832 = vdwg.mxu0
      %v2833 = vadd.f32 %v2803, %v2593
      %v2834 = vadd.f32 %v2806, %v2594
      %v2835 = vadd.f32 %v2811, %v2595
      %v2836 = vadd.f32 %v2814, %v2596
      %v2837 = vadd.f32 %v2819, %v2597
      %v2838 = vadd.f32 %v2822, %v2598
      %v2839 = vadd.f32 %v2827, %v2599
      %v2840 = vadd.f32 %v2830, %v2600
      %v2841 = vsub.f32 %v2833, %v924
      %v2842 = vsub.f32 %v2834, %v927
      %v2843 = vsub.f32 %v2835, %v932
      %v2844 = vsub.f32 %v2836, %v935
      %v2845 = vsub.f32 %v2837, %v940
      %v2846 = vsub.f32 %v2838, %v943
      %v2847 = vsub.f32 %v2839, %v948
      %v2848 = vsub.f32 %v2840, %v951
      %v2849 = vmul.f32 %v2841, %v2841
      %v2850 = vmul.f32 %v2842, %v2842
      %v2851 = vmul.f32 %v2843, %v2843
      %v2852 = vmul.f32 %v2844, %v2844
      %v2853 = vmul.f32 %v2845, %v2845
      %v2854 = vmul.f32 %v2846, %v2846
      %v2855 = vmul.f32 %v2847, %v2847
      %v2856 = vmul.f32 %v2848, %v2848
      %v2857 = vsel %vm981, %v2849, 0.0
      %v2858 = vsel %vm981, %v2850, 0.0
      %v2859 = vadd.f32 %v2857, %v2858
      %v2860 = vsel %vm981, %v2851, 0.0
      %v2861 = vadd.f32 %v2859, %v2860
      %v2862 = vsel %vm981, %v2852, 0.0
      %v2863 = vadd.f32 %v2861, %v2862
      %v2864 = vsel %vm981, %v2853, 0.0
      %v2865 = vadd.f32 %v2863, %v2864
      %v2866 = vsel %vm981, %v2854, 0.0
      %v2867 = vadd.f32 %v2865, %v2866
      %v2868 = vsel %vm981, %v2855, 0.0
      %v2869 = vadd.f32 %v2867, %v2868
      %v2870 = vsel %vm981, %v2856, 0.0
      %v2871 = vadd.f32 %v2869, %v2870
      %2872 = vadd.xlane.f32.xlu0 %v2871
      %v2873 = vpop.xlane.xlu0 %2872
      %v2874 = vrot.slane %v2873, 4
      %v2875 = vadd.f32 %v2873, %v2874
      %v2876 = vrot.slane %v2875, 2
      %v2877 = vadd.f32 %v2875, %v2876
      %v2878 = vrot.slane %v2877, 1
      %v2879 = vadd.f32 %v2877, %v2878
      %s2880 = vtos %v2879
      %v2885 = vunpack.c.l.b16 %v2601
      %v2886 = vunpack.c.h.b16 %v2601
      %v2887 = vunpack.c.l.b16 %v2602
      %v2888 = vunpack.c.h.b16 %v2602
      %v2889 = vunpack.c.l.b16 %v2603
      %v2890 = vunpack.c.h.b16 %v2603
      %v2891 = vunpack.c.l.b16 %v2604
      %v2892 = vunpack.c.h.b16 %v2604
      %v2893 = vpack.c.b16 %v2885, %v2885
      %v2894 = vpack.c.b16 %v2886, %v2886
      %v2895 = vpack.c.b16 %v2887, %v2887
      %v2896 = vpack.c.b16 %v2888, %v2888
      %v2897 = vpack.c.b16 %v2889, %v2889
      %v2898 = vpack.c.b16 %v2890, %v2890
      %v2899 = vpack.c.b16 %v2891, %v2891
      %v2900 = vpack.c.b16 %v2892, %v2892
      %2909 = vst [vmem:[%s722] sm:$0xf] %v2893
      %2910 = vst [vmem:[%s722 + $0x4] sm:$0xf] %v2894
      %2911 = vst [vmem:[%s722 + $0x8] sm:$0xf] %v2895
      %2912 = vst [vmem:[%s722 + $0xc] sm:$0xf] %v2896
      %2913 = vst [vmem:[%s722 + $0x10] sm:$0xf] %v2897
      %2914 = vst [vmem:[%s722 + $0x14] sm:$0xf] %v2898
      %2915 = vst [vmem:[%s722 + $0x18] sm:$0xf] %v2899
      %2916 = vst [vmem:[%s722 + $0x1c] sm:$0xf] %v2900
      %v2917 = vlaneseq
      %v2918 = vshrl.u32 %v2917, 7
      %vm2919 = vcmp.eq.s32.totalorder %v2918, 0
      %v2920 = vstv %s2880
      %v2921 = vsel %vm2919, %v2920, 0.0
      %vm2922 = vcmp.eq.s32.totalorder %v2918, 1
      %v2923 = vstv %s1726
      %v2924 = vsel %vm2922, %v2923, %v2921
      %vm2925 = vcmp.eq.s32.totalorder %v2918, 2
      %v2926 = vstv %s2480
      %v2927 = vsel %vm2925, %v2926, %v2924
      %2928 = vst [vmem:[%s727] sm:$0xff] %v2927
      %s2929 = smul.u32 8, %s35
      %p2930 = scmp.lt.s32.totalorder %s2929, 15
      %s2931 = scalar_select %p2930, %s2929, 15
      %s2932 = smul.addr %s2931, 4
      %s2933 = scalar_lea.vmem %s22, %s2932
      %p2934 = scmp.lt.s32.totalorder %s35, 1
      %s2935 = scalar_select %p2934, %s35, 1
      %s2936 = smul.addr %s2935, 8
      %s2937 = scalar_lea.vmem %s23, %s2936
      // Predicated region
      $region109: #{dino_unseg_forward.1} parent=107 // pred_check
        %p2938 = pneg %p520
      $region110: #{dino_unseg_forward.1} parent=107 // pred_check_branch
        %2940 = sbr.rel (%p2938) target = $region112
      $region111: #{dino_unseg_forward.1} parent=107 // pred_region
        %s2941 = smul.u32 8, %s35
      $region112: #{dino_unseg_forward.1} parent=107 // pred_fallthru
        _
      // Predicated region
      $region113: #{dino_unseg_forward.1} parent=107 // pred_check
        %p2942 = pneg %p546
      $region114: #{dino_unseg_forward.1} parent=107 // pred_check_branch
        %2944 = sbr.rel (%p2942) target = $region116
      $region115: #{dino_unseg_forward.1} parent=107 // pred_region
        _
      $region116: #{dino_unseg_forward.1} parent=107 // pred_fallthru
        _
    $region108: #{dino_unseg_forward.1} parent=5 // pred_fallthru
      _
    %p2945 = scmp.le.s32.totalorder 2, %s30
    // Predicated region
    $region117: #{dino_unseg_forward.1} parent=5 // pred_check
      %p2946 = pneg %p2945
    $region118: #{dino_unseg_forward.1} parent=5 // pred_check_branch
      %2948 = sbr.rel (%p2946) target = $region120
    $region119: #{dino_unseg_forward.1} parent=5 // pred_region
      %s2949 = ssub.s32 %s30, 2
      // Predicated region
      $region121: #{dino_unseg_forward.1} parent=119 // pred_check
        %p2950 = pneg %p526
      $region122: #{dino_unseg_forward.1} parent=119 // pred_check_branch
        %2952 = sbr.rel (%p2950) target = $region124
      $region123: #{dino_unseg_forward.1} parent=119 // pred_region
        %s2953 = smul.u32 8, %s36
        %p2954 = scmp.lt.s32.totalorder %s2953, 15
        %s2955 = scalar_select %p2954, %s2953, 15
        %s2956 = smul.addr %s2955, 4
        %s2957 = scalar_lea.vmem %s22, %s2956
      $region124: #{dino_unseg_forward.1} parent=119 // pred_fallthru
        _
      // Predicated region
      $region125: #{dino_unseg_forward.1} parent=119 // pred_check
        %p2958 = pneg %p552
      $region126: #{dino_unseg_forward.1} parent=119 // pred_check_branch
        %2960 = sbr.rel (%p2958) target = $region128
      $region127: #{dino_unseg_forward.1} parent=119 // pred_region
        %p2961 = scmp.lt.s32.totalorder %s36, 1
        %s2962 = scalar_select %p2961, %s36, 1
        %s2963 = smul.addr %s2962, 8
        %s2964 = scalar_lea.vmem %s23, %s2963
      $region128: #{dino_unseg_forward.1} parent=119 // pred_fallthru
        _
    $region120: #{dino_unseg_forward.1} parent=5 // pred_fallthru
      _
  $region6: #{dino_unseg_forward.1} parent=0 // loop_footer
    %s34 = sadd.s32 1, %s30
  $region7: #{dino_unseg_forward.1} parent=0 // loop_footer_branch
    %29 = sbr.rel target = $region3
  $region8: #{dino_unseg_forward.1} parent=0 // loop_exit
    _

</llo_original>
